<compile_context>
chip_gen: v7x
topology: tpu7x:2x2x1
jax: 0.10.0
libtpu: 0.0.40
codegen_flags: <defaults>
</compile_context>

<pallas_src>
import functools

import jax
import jax.numpy as jnp
from jax import lax
from jax.experimental import pallas as pl
from jax.experimental.pallas import tpu as pltpu

LANE = 128
_NEG_LARGE = -1e30   # finite "minus infinity": sigmoid(_NEG_LARGE) == 0.0 exactly in f32


# ---------------------------------------------------------------------------
# helpers
# ---------------------------------------------------------------------------
def _round_up(x, m):
    return ((x + m - 1) // m) * m


def _pad2d(x, rows, cols):
    pr, pc = rows - x.shape[0], cols - x.shape[1]
    if pr == 0 and pc == 0:
        return x
    return jnp.pad(x, ((0, pr), (0, pc)))


def _sigmoid(x):
    # sigmoid(x) = 0.5 * tanh(x/2) + 0.5 : one EUP op per element instead of exp + divide.
    return 0.5 * jnp.tanh(0.5 * x) + 0.5


@functools.lru_cache(maxsize=1)
def _vmem_capacity_bytes():
    """Generation-aware VMEM capacity (128 MiB v5e/v6e, 64 MiB v7x); conservative fallback."""
    cap = 64 * 1024 * 1024
    try:
        queried = int(getattr(pltpu.get_tpu_info(), "vmem_capacity_bytes"))
        if queried > 0:
            cap = queried
    except Exception:
        pass
    return max(32 * 1024 * 1024, min(cap, 128 * 1024 * 1024))


def _vmem_limit_bytes():
    return (_vmem_capacity_bytes() * 3) // 4


def _tile_budget_bytes():
    return _vmem_capacity_bytes() // 2


_TILE_CANDS = (2048, 1024, 512, 256, 128, 64, 32, 16, 8)


def _choose_tiles(n_pad, vmem_fn, max_tm):
    """Pick (row_tile, k/col_tile): prefer the largest row tile (minimizes re-reads of the
    small N x F factors across the K axis), then the largest second tile that fits the
    double-buffered VMEM budget computed by vmem_fn(tm, tk)."""
    budget = _tile_budget_bytes()
    cands = [t for t in _TILE_CANDS if n_pad % t == 0]
    tm_cands = [t for t in cands if t <= max_tm] or [cands[-1]]
    for tm in tm_cands:
        for tk in cands:
            if vmem_fn(tm, tk) <= budget:
                return tm, tk
    return tm_cands[-1], cands[-1]


def _max_row_tile(n_pad):
    # Keep >= 4 row-grid steps (>= 2 per TensorCore under megacore sharding) when possible.
    return max(LANE, n_pad // 4)


def _compiler_params():
    return pltpu.CompilerParams(
        dimension_semantics=("parallel", "arbitrary"),
        vmem_limit_bytes=_vmem_limit_bytes(),
    )


# ---------------------------------------------------------------------------
# Pallas kernels
# ---------------------------------------------------------------------------
def _graphconv_kernel(a_ref, hw_ref, b_ref, o_ref, acc_ref):
    """o_rowtile = sigmoid(sum_k A[i,k] @ HW[k] + b), bf16 out, f32 accumulation."""
    k = pl.program_id(1)

    @pl.when(k == 0)
    def _():
        acc_ref[...] = jnp.zeros(acc_ref.shape, acc_ref.dtype)

    acc_ref[...] += jnp.dot(a_ref[...], hw_ref[...], preferred_element_type=jnp.float32)

    @pl.when(k == pl.num_programs(1) - 1)
    def _():
        # Padded feature lanes of the bias hold _NEG_LARGE -> sigmoid == 0 there, so the
        # output's pad lanes are exactly zero (required by the struct-decoder contraction).
        o_ref[...] = _sigmoid(acc_ref[...] + b_ref[...]).astype(o_ref.dtype)


def _decoder_kernel(a_ref, h_ref, ht_ref, hwd_ref, b_ref, s_ref, x_ref, acc_ref):
    """Fused struct + attr decoder for one (row-tile, node-column-tile) grid step.

    struct[i, j] = sigmoid(h'_rowtile @ h'^T_coltile)          (canonical [M,K]@[K,N] MXU op)
    x_hat[i]     = sigmoid(sum_j A[i, j] @ (h'@W_dec)[j] + b)   (accumulated over j)
    """
    j = pl.program_id(1)

    s = jnp.dot(h_ref[...], ht_ref[...], preferred_element_type=jnp.float32)
    s_ref[...] = _sigmoid(s).astype(s_ref.dtype)

    @pl.when(j == 0)
    def _():
        acc_ref[...] = jnp.zeros(acc_ref.shape, acc_ref.dtype)

    acc_ref[...] += jnp.dot(a_ref[...], hwd_ref[...], preferred_element_type=jnp.float32)

    @pl.when(j == pl.num_programs(1) - 1)
    def _():
        x_ref[...] = _sigmoid(acc_ref[...] + b_ref[...]).astype(x_ref.dtype)


# ---------------------------------------------------------------------------
# VMEM budgets (double-buffered streamed/output tiles + single-buffered scratch)
# ---------------------------------------------------------------------------
def _graphconv_vmem(f_pad, tm, tk):
    return (2 * tm * tk * 2          # A tile, bf16
            + 2 * tk * f_pad * 2     # H@W K-tile, bf16
            + 2 * tm * f_pad * 2     # output tile, bf16
            + tm * f_pad * 4         # f32 accumulator scratch
            + 2 * f_pad * 4)         # bias


def _decoder_vmem(fo_pad, fi_pad, tm, tn):
    return (2 * tm * tn * 2          # A tile, bf16
            + 2 * tm * fo_pad * 2    # h' row tile, bf16 (re-fetched only when i changes)
            + 2 * fo_pad * tn * 2    # h'^T column tile, bf16
            + 2 * tn * fi_pad * 2    # (h'@W_dec) K-tile, bf16
            + 2 * fi_pad * 4         # bias
            + 2 * tm * tn * 2        # struct output tile, bf16
            + 2 * tm * fi_pad * 2    # x_hat output tile, bf16
            + tm * fi_pad * 4)       # f32 accumulator scratch


# ---------------------------------------------------------------------------
# wrappers
# ---------------------------------------------------------------------------
def graphconv(a_bf16, h, w, b):
    """sigmoid(A_norm @ (H @ W) + b) -> (n_pad, f_pad) bf16, padded feature lanes forced to 0.

    a_bf16: (n_pad, n_pad) bf16.  h: (n_pad, F) f32 or a previous graphconv output
    (lane-padded bf16 with zeroed pad lanes).
    """
    n_pad = a_bf16.shape[0]
    f_out = w.shape[1]
    f_pad = _round_up(f_out, LANE)

    # H @ W is O(N*F*F) (tiny) -> one XLA matmul; zero-pad W so any padded lanes of H are inert.
    w_pad = _pad2d(w.astype(jnp.float32), h.shape[1], f_pad)
    hw = jnp.dot(h, w_pad, preferred_element_type=jnp.float32).astype(jnp.bfloat16)
    b_pad = jnp.full((1, f_pad), _NEG_LARGE, jnp.float32).at[0, :f_out].set(
        b.astype(jnp.float32))

    tm, tk = _choose_tiles(n_pad, functools.partial(_graphconv_vmem, f_pad),
                           max_tm=_max_row_tile(n_pad))
    grid = (n_pad // tm, n_pad // tk)

    cost = pl.CostEstimate(
        flops=2 * n_pad * n_pad * f_pad,
        transcendentals=n_pad * f_pad,
        bytes_accessed=a_bf16.size * 2 + grid[0] * hw.size * 2 + n_pad * f_pad * 2,
    )
    return pl.pallas_call(
        _graphconv_kernel,
        out_shape=jax.ShapeDtypeStruct((n_pad, f_pad), jnp.bfloat16),
        grid=grid,
        in_specs=[
            pl.BlockSpec((tm, tk), lambda i, k: (i, k)),      # A tile (streamed)
            pl.BlockSpec((tk, f_pad), lambda i, k: (k, 0)),   # H@W K-tile (streamed)
            pl.BlockSpec((1, f_pad), lambda i, k: (0, 0)),    # bias
        ],
        out_specs=pl.BlockSpec((tm, f_pad), lambda i, k: (i, 0)),
        scratch_shapes=[pltpu.VMEM((tm, f_pad), jnp.float32)],
        compiler_params=_compiler_params(),
        cost_estimate=cost,
    )(a_bf16, hw, b_pad)


def fused_decoders(a_bf16, h_enc, w_dec, b_dec):
    """One pallas_call producing (struct, x_hat) in bf16.

    h_enc: (n_pad, fo_pad) bf16 straight from graphconv (pad lanes already zero).
    struct = sigmoid(h' h'^T) tiled over (rows, node-columns); x_hat = sigmoid(A (h' W_dec) + b)
    accumulated over the node-column (K) axis.
    """
    n_pad = a_bf16.shape[0]
    fo_pad = h_enc.shape[1]
    f_in = w_dec.shape[1]
    fi_pad = _round_up(f_in, LANE)

    h_bf = h_enc.astype(jnp.bfloat16)
    ht_bf = h_bf.T                                               # one tiny XLA transpose
    w_pad = _pad2d(w_dec.astype(jnp.float32), fo_pad, fi_pad)    # zero pad rows/cols
    hw_dec = jnp.dot(h_bf, w_pad, preferred_element_type=jnp.float32).astype(jnp.bfloat16)
    b_pad = jnp.full((1, fi_pad), _NEG_LARGE, jnp.float32).at[0, :f_in].set(
        b_dec.astype(jnp.float32))

    tm, tn = _choose_tiles(n_pad, functools.partial(_decoder_vmem, fo_pad, fi_pad),
                           max_tm=_max_row_tile(n_pad))
    grid = (n_pad // tm, n_pad // tn)

    cost = pl.CostEstimate(
        flops=2 * n_pad * n_pad * (fo_pad + fi_pad),
        transcendentals=n_pad * n_pad + n_pad * fi_pad,
        bytes_accessed=(a_bf16.size * 2 + n_pad * n_pad * 2 + h_bf.size * 2
                        + grid[0] * (ht_bf.size + hw_dec.size) * 2 + n_pad * fi_pad * 2),
    )
    struct_p, xhat_p = pl.pallas_call(
        _decoder_kernel,
        out_shape=(jax.ShapeDtypeStruct((n_pad, n_pad), jnp.bfloat16),
                   jax.ShapeDtypeStruct((n_pad, fi_pad), jnp.bfloat16)),
        grid=grid,
        in_specs=[
            pl.BlockSpec((tm, tn), lambda i, j: (i, j)),        # A tile (streamed)
            pl.BlockSpec((tm, fo_pad), lambda i, j: (i, 0)),    # h' row tile
            pl.BlockSpec((fo_pad, tn), lambda i, j: (0, j)),    # h'^T column tile
            pl.BlockSpec((tn, fi_pad), lambda i, j: (j, 0)),    # (h'@W_dec) K-tile
            pl.BlockSpec((1, fi_pad), lambda i, j: (0, 0)),     # bias
        ],
        out_specs=(
            pl.BlockSpec((tm, tn), lambda i, j: (i, j)),        # struct tile (bf16)
            pl.BlockSpec((tm, fi_pad), lambda i, j: (i, 0)),    # x_hat tile (acc over j)
        ),
        scratch_shapes=[pltpu.VMEM((tm, fi_pad), jnp.float32)],
        compiler_params=_compiler_params(),
        cost_estimate=cost,
    )(a_bf16, h_bf, ht_bf, hw_dec, b_pad)
    return struct_p, xhat_p


# ---------------------------------------------------------------------------
# GRL forward (XLA glue + Pallas compute)
# ---------------------------------------------------------------------------
def grl_forward(a_norm, h, enc_params, dec_params):
    n = h.shape[0]
    n_pad = _round_up(n, LANE)
    a_bf16 = _pad2d(a_norm, n_pad, n_pad).astype(jnp.bfloat16)

    # shared_encoder: GraphConv layers with sigmoid activation (.view(N, -1) is a no-op here).
    # The bf16, lane-padded output (pad lanes zeroed in-kernel) feeds the next stage directly.
    x = _pad2d(h.astype(jnp.float32), n_pad, h.shape[1])
    for w, b in enc_params:
        x = graphconv(a_bf16, x, w, b)

    # struct_decoder (Reconstruct + Sigmoid) and attr_decoder fused into one pass over h'.
    w_dec, b_dec = dec_params
    struct_p, xhat_p = fused_decoders(a_bf16, x, w_dec, b_dec)
    return struct_p[:n, :n], xhat_p[:n, : w_dec.shape[1]]


# ---------------------------------------------------------------------------
# demo / correctness harness
# ---------------------------------------------------------------------------
def build_normalized_adjacency(key, n):
    """Random symmetric adjacency with self-loops, normalized D^-1/2 A D^-1/2."""
    a = (jax.random.uniform(key, (n, n)) > 0.9).astype(jnp.float32)
    a = jnp.maximum(a, a.T)                                # symmetric
    a = jnp.maximum(a, jnp.eye(n, dtype=jnp.float32))      # self loops -> no zero degree
    deg = jnp.maximum(a.sum(axis=1), 1.0)
    d_inv_sqrt = lax.rsqrt(deg)
    return d_inv_sqrt[:, None] * a * d_inv_sqrt[None, :]


def _reference(a_norm, h, enc_params, dec_params):
    x = h
    for w, b in enc_params:
        x = jax.nn.sigmoid(a_norm @ (x @ w) + b)
    struct = jax.nn.sigmoid(x @ x.T)
    w_dec, b_dec = dec_params
    x_hat = jax.nn.sigmoid(a_norm @ (x @ w_dec) + b_dec)
    return struct, x_hat


if __name__ == "__main__":
    # Small shapes consistent with the module (hidden_num=1 -> hidden_dim unused in the stack).
    N, IN_DIM, HIDDEN_DIM, OUT_DIM = 512, 64, 32, 32

    key = jax.random.PRNGKey(0)
    k_adj, k_h, k_we, k_wd = jax.random.split(key, 4)

    a_norm = build_normalized_adjacency(k_adj, N)
    h = jax.random.normal(k_h, (N, IN_DIM), dtype=jnp.float32)

    enc_params = [
        (0.1 * jax.random.normal(k_we, (IN_DIM, OUT_DIM), dtype=jnp.float32),
         jnp.zeros((OUT_DIM,), dtype=jnp.float32)),
    ]
    dec_params = (0.1 * jax.random.normal(k_wd, (OUT_DIM, IN_DIM), dtype=jnp.float32),
                  jnp.zeros((IN_DIM,), dtype=jnp.float32))

    struct_rec, x_hat = jax.jit(grl_forward)(a_norm, h, enc_params, dec_params)
    jax.block_until_ready((struct_rec, x_hat))

    assert struct_rec.shape == (N, N)
    assert x_hat.shape == (N, IN_DIM)

    # f32 reference (bf16 streaming/outputs + f32 accumulation -> small, sigmoid-compressed error)
    struct_ref, xhat_ref = _reference(a_norm, h, enc_params, dec_params)
    assert float(jnp.max(jnp.abs(struct_rec.astype(jnp.float32) - struct_ref))) < 5e-2
    assert float(jnp.max(jnp.abs(x_hat.astype(jnp.float32) - xhat_ref))) < 5e-2

    print("KERNEL_OK")
</pallas_src>

<mosaic_0001>
module attributes {stable_mosaic.version = 11 : i64} {
  func.func @_graphconv_kernel(%arg0: i32, %arg1: i32, %arg2: memref<128x512xbf16, #tpu.memory_space<vmem>>, %arg3: memref<512x128xbf16, #tpu.memory_space<vmem>>, %arg4: memref<1x128xf32, #tpu.memory_space<vmem>>, %arg5: memref<128x128xbf16, #tpu.memory_space<vmem>>, %arg6: memref<128x128xf32, #tpu.memory_space<vmem>>) attributes {dimension_semantics = [#tpu.dimension_semantics<parallel>, #tpu.dimension_semantics<arbitrary>], iteration_bounds = array<i64: 4, 1>, scalar_prefetch = 0 : i64, scratch_operands = 1 : i64, tpu.core_type = #tpu.core_type<tc>, window_params = [{transform_indices = @transform_0, window_bounds = array<i64: 128, 512>}, {transform_indices = @transform_1, window_bounds = array<i64: 512, 128>}, {pipeline_mode = #tpu.pipeline_mode<synchronous>, transform_indices = @transform_2, window_bounds = array<i64: 1, 128>}, {transform_indices = @transform_3, window_bounds = array<i64: 128, 128>}]} {
    %c0_i32 = arith.constant 0 : i32
    %0 = arith.cmpi eq, %arg1, %c0_i32 : i32
    %1 = arith.extui %0 : i1 to i32
    %c0_i32_0 = arith.constant 0 : i32
    %2 = arith.cmpi ne, %1, %c0_i32_0 : i32
    scf.if %2 {
      %cst_10 = arith.constant 0.000000e+00 : f32
      %12 = vector.broadcast %cst_10 : f32 to vector<128x128xf32>
      %c0_11 = arith.constant 0 : index
      %c0_12 = arith.constant 0 : index
      %13 = vector.load %arg6[%c0_11, %c0_12] : memref<128x128xf32, #tpu.memory_space<vmem>>, vector<128x128xf32>
      tpu.vector_store %arg6[%c0_11, %c0_12], %12 {strides = array<i32>} : memref<128x128xf32, #tpu.memory_space<vmem>>, vector<128x128xf32>,
    } else {
    }
    %c0 = arith.constant 0 : index
    %c0_1 = arith.constant 0 : index
    %3 = vector.load %arg6[%c0, %c0_1] : memref<128x128xf32, #tpu.memory_space<vmem>>, vector<128x128xf32>
    %c0_2 = arith.constant 0 : index
    %c0_3 = arith.constant 0 : index
    %4 = vector.load %arg2[%c0_2, %c0_3] : memref<128x512xbf16, #tpu.memory_space<vmem>>, vector<128x512xbf16>
    %c0_4 = arith.constant 0 : index
    %c0_5 = arith.constant 0 : index
    %5 = vector.load %arg3[%c0_4, %c0_5] : memref<512x128xbf16, #tpu.memory_space<vmem>>, vector<512x128xbf16>
    %cst = arith.constant dense<0.000000e+00> : vector<128x128xf32>
    %6 = tpu.matmul %4, %5, %cst {dimension_numbers = #tpu.dot_dimension_numbers<[1], [0], [0], [1], [0, 0, 1, 1], [], []>} : vector<128x512xbf16>, vector<512x128xbf16>, vector<128x128xf32> -> vector<128x128xf32>
    %7 = arith.addf %3, %6 : vector<128x128xf32>
    %c0_6 = arith.constant 0 : index
    %c0_7 = arith.constant 0 : index
    %8 = vector.load %arg6[%c0_6, %c0_7] : memref<128x128xf32, #tpu.memory_space<vmem>>, vector<128x128xf32>
    tpu.vector_store %arg6[%c0_6, %c0_7], %7 {strides = array<i32>} : memref<128x128xf32, #tpu.memory_space<vmem>>, vector<128x128xf32>,
    %c0_i32_8 = arith.constant 0 : i32
    %9 = arith.cmpi eq, %arg1, %c0_i32_8 : i32
    %10 = arith.extui %9 : i1 to i32
    %c0_i32_9 = arith.constant 0 : i32
    %11 = arith.cmpi ne, %10, %c0_i32_9 : i32
    scf.if %11 {
      %c0_10 = arith.constant 0 : index
      %c0_11 = arith.constant 0 : index
      %12 = vector.load %arg6[%c0_10, %c0_11] : memref<128x128xf32, #tpu.memory_space<vmem>>, vector<128x128xf32>
      %c0_12 = arith.constant 0 : index
      %c0_13 = arith.constant 0 : index
      %13 = vector.load %arg4[%c0_12, %c0_13] : memref<1x128xf32, #tpu.memory_space<vmem>>, vector<1x128xf32>
      %14 = vector.broadcast %13 : vector<1x128xf32> to vector<128x128xf32>
      %15 = arith.addf %12, %14 : vector<128x128xf32>
      %cst_14 = arith.constant 5.000000e-01 : f32
      %16 = vector.broadcast %cst_14 : f32 to vector<128x128xf32>
      %17 = arith.mulf %16, %15 : vector<128x128xf32>
      %18 = math.tanh %17 : vector<128x128xf32>
      %cst_15 = arith.constant 5.000000e-01 : f32
      %19 = vector.broadcast %cst_15 : f32 to vector<128x128xf32>
      %20 = arith.mulf %19, %18 : vector<128x128xf32>
      %cst_16 = arith.constant 5.000000e-01 : f32
      %21 = vector.broadcast %cst_16 : f32 to vector<128x128xf32>
      %22 = arith.addf %20, %21 : vector<128x128xf32>
      %23 = arith.truncf %22 : vector<128x128xf32> to vector<128x128xbf16>
      %c0_17 = arith.constant 0 : index
      %c0_18 = arith.constant 0 : index
      %24 = vector.load %arg5[%c0_17, %c0_18] : memref<128x128xbf16, #tpu.memory_space<vmem>>, vector<128x128xbf16>
      tpu.vector_store %arg5[%c0_17, %c0_18], %23 {strides = array<i32>} : memref<128x128xbf16, #tpu.memory_space<vmem>>, vector<128x128xbf16>,
    } else {
    }
    return
  }
  func.func @transform_0(%arg0: i32, %arg1: i32) -> (i32, i32) {
    %c0_i32 = arith.constant 0 : i32
    return %arg0, %arg1 : i32, i32
  }
  func.func @transform_1(%arg0: i32, %arg1: i32) -> (i32, i32) {
    %c0_i32 = arith.constant 0 : i32
    %c0_i32_0 = arith.constant 0 : i32
    return %arg1, %c0_i32 : i32, i32
  }
  func.func @transform_2(%arg0: i32, %arg1: i32) -> (i32, i32) {
    %c0_i32 = arith.constant 0 : i32
    %c0_i32_0 = arith.constant 0 : i32
    %c0_i32_1 = arith.constant 0 : i32
    return %c0_i32, %c0_i32_0 : i32, i32
  }
  func.func @transform_3(%arg0: i32, %arg1: i32) -> (i32, i32) {
    %c0_i32 = arith.constant 0 : i32
    %c0_i32_0 = arith.constant 0 : i32
    return %arg0, %c0_i32 : i32, i32
  }
}

module attributes {stable_mosaic.version = 11 : i64} {
  func.func @_decoder_kernel(%arg0: i32, %arg1: i32, %arg2: memref<128x512xbf16, #tpu.memory_space<vmem>>, %arg3: memref<128x128xbf16, #tpu.memory_space<vmem>>, %arg4: memref<128x512xbf16, #tpu.memory_space<vmem>>, %arg5: memref<512x128xbf16, #tpu.memory_space<vmem>>, %arg6: memref<1x128xf32, #tpu.memory_space<vmem>>, %arg7: memref<128x512xbf16, #tpu.memory_space<vmem>>, %arg8: memref<128x128xbf16, #tpu.memory_space<vmem>>, %arg9: memref<128x128xf32, #tpu.memory_space<vmem>>) attributes {dimension_semantics = [#tpu.dimension_semantics<parallel>, #tpu.dimension_semantics<arbitrary>], iteration_bounds = array<i64: 4, 1>, scalar_prefetch = 0 : i64, scratch_operands = 1 : i64, tpu.core_type = #tpu.core_type<tc>, window_params = [{transform_indices = @transform_0, window_bounds = array<i64: 128, 512>}, {transform_indices = @transform_1, window_bounds = array<i64: 128, 128>}, {transform_indices = @transform_2, window_bounds = array<i64: 128, 512>}, {transform_indices = @transform_3, window_bounds = array<i64: 512, 128>}, {pipeline_mode = #tpu.pipeline_mode<synchronous>, transform_indices = @transform_4, window_bounds = array<i64: 1, 128>}, {transform_indices = @transform_5, window_bounds = array<i64: 128, 512>}, {transform_indices = @transform_6, window_bounds = array<i64: 128, 128>}]} {
    %c0 = arith.constant 0 : index
    %c0_0 = arith.constant 0 : index
    %0 = vector.load %arg3[%c0, %c0_0] : memref<128x128xbf16, #tpu.memory_space<vmem>>, vector<128x128xbf16>
    %c0_1 = arith.constant 0 : index
    %c0_2 = arith.constant 0 : index
    %1 = vector.load %arg4[%c0_1, %c0_2] : memref<128x512xbf16, #tpu.memory_space<vmem>>, vector<128x512xbf16>
    %cst = arith.constant dense<0.000000e+00> : vector<128x512xf32>
    %2 = tpu.matmul %0, %1, %cst {dimension_numbers = #tpu.dot_dimension_numbers<[1], [0], [0], [1], [0, 0, 1, 1], [], []>} : vector<128x128xbf16>, vector<128x512xbf16>, vector<128x512xf32> -> vector<128x512xf32>
    %cst_3 = arith.constant 5.000000e-01 : f32
    %3 = vector.broadcast %cst_3 : f32 to vector<128x512xf32>
    %4 = arith.mulf %3, %2 : vector<128x512xf32>
    %5 = math.tanh %4 : vector<128x512xf32>
    %cst_4 = arith.constant 5.000000e-01 : f32
    %6 = vector.broadcast %cst_4 : f32 to vector<128x512xf32>
    %7 = arith.mulf %6, %5 : vector<128x512xf32>
    %cst_5 = arith.constant 5.000000e-01 : f32
    %8 = vector.broadcast %cst_5 : f32 to vector<128x512xf32>
    %9 = arith.addf %7, %8 : vector<128x512xf32>
    %10 = arith.truncf %9 : vector<128x512xf32> to vector<128x512xbf16>
    %c0_6 = arith.constant 0 : index
    %c0_7 = arith.constant 0 : index
    %11 = vector.load %arg7[%c0_6, %c0_7] : memref<128x512xbf16, #tpu.memory_space<vmem>>, vector<128x512xbf16>
    tpu.vector_store %arg7[%c0_6, %c0_7], %10 {strides = array<i32>} : memref<128x512xbf16, #tpu.memory_space<vmem>>, vector<128x512xbf16>,
    %c0_i32 = arith.constant 0 : i32
    %12 = arith.cmpi eq, %arg1, %c0_i32 : i32
    %13 = arith.extui %12 : i1 to i32
    %c0_i32_8 = arith.constant 0 : i32
    %14 = arith.cmpi ne, %13, %c0_i32_8 : i32
    scf.if %14 {
      %cst_20 = arith.constant 0.000000e+00 : f32
      %24 = vector.broadcast %cst_20 : f32 to vector<128x128xf32>
      %c0_21 = arith.constant 0 : index
      %c0_22 = arith.constant 0 : index
      %25 = vector.load %arg9[%c0_21, %c0_22] : memref<128x128xf32, #tpu.memory_space<vmem>>, vector<128x128xf32>
      tpu.vector_store %arg9[%c0_21, %c0_22], %24 {strides = array<i32>} : memref<128x128xf32, #tpu.memory_space<vmem>>, vector<128x128xf32>,
    } else {
    }
    %c0_9 = arith.constant 0 : index
    %c0_10 = arith.constant 0 : index
    %15 = vector.load %arg9[%c0_9, %c0_10] : memref<128x128xf32, #tpu.memory_space<vmem>>, vector<128x128xf32>
    %c0_11 = arith.constant 0 : index
    %c0_12 = arith.constant 0 : index
    %16 = vector.load %arg2[%c0_11, %c0_12] : memref<128x512xbf16, #tpu.memory_space<vmem>>, vector<128x512xbf16>
    %c0_13 = arith.constant 0 : index
    %c0_14 = arith.constant 0 : index
    %17 = vector.load %arg5[%c0_13, %c0_14] : memref<512x128xbf16, #tpu.memory_space<vmem>>, vector<512x128xbf16>
    %cst_15 = arith.constant dense<0.000000e+00> : vector<128x128xf32>
    %18 = tpu.matmul %16, %17, %cst_15 {dimension_numbers = #tpu.dot_dimension_numbers<[1], [0], [0], [1], [0, 0, 1, 1], [], []>} : vector<128x512xbf16>, vector<512x128xbf16>, vector<128x128xf32> -> vector<128x128xf32>
    %19 = arith.addf %15, %18 : vector<128x128xf32>
    %c0_16 = arith.constant 0 : index
    %c0_17 = arith.constant 0 : index
    %20 = vector.load %arg9[%c0_16, %c0_17] : memref<128x128xf32, #tpu.memory_space<vmem>>, vector<128x128xf32>
    tpu.vector_store %arg9[%c0_16, %c0_17], %19 {strides = array<i32>} : memref<128x128xf32, #tpu.memory_space<vmem>>, vector<128x128xf32>,
    %c0_i32_18 = arith.constant 0 : i32
    %21 = arith.cmpi eq, %arg1, %c0_i32_18 : i32
    %22 = arith.extui %21 : i1 to i32
    %c0_i32_19 = arith.constant 0 : i32
    %23 = arith.cmpi ne, %22, %c0_i32_19 : i32
    scf.if %23 {
      %c0_20 = arith.constant 0 : index
      %c0_21 = arith.constant 0 : index
      %24 = vector.load %arg9[%c0_20, %c0_21] : memref<128x128xf32, #tpu.memory_space<vmem>>, vector<128x128xf32>
      %c0_22 = arith.constant 0 : index
      %c0_23 = arith.constant 0 : index
      %25 = vector.load %arg6[%c0_22, %c0_23] : memref<1x128xf32, #tpu.memory_space<vmem>>, vector<1x128xf32>
      %26 = vector.broadcast %25 : vector<1x128xf32> to vector<128x128xf32>
      %27 = arith.addf %24, %26 : vector<128x128xf32>
      %cst_24 = arith.constant 5.000000e-01 : f32
      %28 = vector.broadcast %cst_24 : f32 to vector<128x128xf32>
      %29 = arith.mulf %28, %27 : vector<128x128xf32>
      %30 = math.tanh %29 : vector<128x128xf32>
      %cst_25 = arith.constant 5.000000e-01 : f32
      %31 = vector.broadcast %cst_25 : f32 to vector<128x128xf32>
      %32 = arith.mulf %31, %30 : vector<128x128xf32>
      %cst_26 = arith.constant 5.000000e-01 : f32
      %33 = vector.broadcast %cst_26 : f32 to vector<128x128xf32>
      %34 = arith.addf %32, %33 : vector<128x128xf32>
      %35 = arith.truncf %34 : vector<128x128xf32> to vector<128x128xbf16>
      %c0_27 = arith.constant 0 : index
      %c0_28 = arith.constant 0 : index
      %36 = vector.load %arg8[%c0_27, %c0_28] : memref<128x128xbf16, #tpu.memory_space<vmem>>, vector<128x128xbf16>
      tpu.vector_store %arg8[%c0_27, %c0_28], %35 {strides = array<i32>} : memref<128x128xbf16, #tpu.memory_space<vmem>>, vector<128x128xbf16>,
    } else {
    }
    return
  }
  func.func @transform_0(%arg0: i32, %arg1: i32) -> (i32, i32) {
    %c0_i32 = arith.constant 0 : i32
    return %arg0, %arg1 : i32, i32
  }
  func.func @transform_1(%arg0: i32, %arg1: i32) -> (i32, i32) {
    %c0_i32 = arith.constant 0 : i32
    %c0_i32_0 = arith.constant 0 : i32
    return %arg0, %c0_i32 : i32, i32
  }
  func.func @transform_2(%arg0: i32, %arg1: i32) -> (i32, i32) {
    %c0_i32 = arith.constant 0 : i32
    %c0_i32_0 = arith.constant 0 : i32
    return %c0_i32, %arg1 : i32, i32
  }
  func.func @transform_3(%arg0: i32, %arg1: i32) -> (i32, i32) {
    %c0_i32 = arith.constant 0 : i32
    %c0_i32_0 = arith.constant 0 : i32
    return %arg1, %c0_i32 : i32, i32
  }
  func.func @transform_4(%arg0: i32, %arg1: i32) -> (i32, i32) {
    %c0_i32 = arith.constant 0 : i32
    %c0_i32_0 = arith.constant 0 : i32
    %c0_i32_1 = arith.constant 0 : i32
    return %c0_i32, %c0_i32_0 : i32, i32
  }
  func.func @transform_5(%arg0: i32, %arg1: i32) -> (i32, i32) {
    %c0_i32 = arith.constant 0 : i32
    return %arg0, %arg1 : i32, i32
  }
  func.func @transform_6(%arg0: i32, %arg1: i32) -> (i32, i32) {
    %c0_i32 = arith.constant 0 : i32
    %c0_i32_0 = arith.constant 0 : i32
    return %arg0, %c0_i32 : i32, i32
  }
}

</mosaic_0001>

<llo_original>
// kernel: grl_forward.2
$region0: #{grl_forward.2}
  #allocation0 [shape = 'u32[]', space=smem, size = 0x4, offset = 0x4, fixed_abs, tag = 'smem constant byte address 0x4 - core index']
  #allocation1 [shape = 'u32[144,128]{1,0:T(1,128)}', space=vmem, size = 0x12000, scoped, tag = 'internal scratch']
  #allocation2 [shape = 'f32[128,128]{1,0:T(8,128)}', space=vmem, size = 0x10000, scoped, tag = 'scratch operand']
  %s0 = inlined_call_operand.vmem [shape: bf16[512,512], index: 0, kind: input, shape index: {}]
  %s1 = inlined_call_operand.vmem [shape: bf16[512,128], index: 1, kind: input, shape index: {}]
  %s2 = inlined_call_operand.vmem [shape: f32[1,128], index: 2, kind: input, shape index: {}]
  %s3 = inlined_call_operand.vmem [shape: bf16[512,128], index: 3, kind: output, shape index: {}]
  %s4 = sld [smem:[#allocation0]]
  $region53: #{grl_forward.2} parent=0
    _
  %s6 = ssub.s32 1, %s4
  %s7 = scalar_select 0, %s6, %s4
  loop: start=0, step=1, limit=6
  $region2: #{grl_forward.2} parent=0 // loop_pre_header
    _
  $region3: #{grl_forward.2} parent=0 // loop_header
    %s9 = sphi 0, %s13
    %p10 = scmp.ge.s32.totalorder %s9, 6
    %s16 = sphi 0, %s28
    %s17 = sphi 0, %s24
    %s18 = sphi 0, %s16
    %s19 = sphi 0, %s17
    %s20 = sphi 0, %s18
    %s21 = sphi 0, %s19
    %s33 = sphi 0, %s35
    %s36 = sphi 0, %s33
    %s37 = sphi 0, %s36
    %s53 = sphi 0, %s37
    %s59 = sphi 0, %s61
    %s62 = sphi 0, %s59
    %s63 = sphi 0, %s62
    %s79 = sphi 0, %s63
    %s83 = sphi 0, %s83
    %s85 = sphi 0, %s83
    %s86 = sphi 0, %s85
    %s100 = sphi 0, %s86
    %s106 = sphi 0, %s108
    %s109 = sphi 0, %s106
    %s110 = sphi 0, %s109
    %s126 = sphi 0, %s110
  $region4: #{grl_forward.2} parent=0 // loop_header_branch
    %12 = sbr.rel (%p10) target = $region8
  $region5: #{grl_forward.2} parent=0 // loop_body
    %s14 = ssub.s32 %s9, 1
    %s15 = ssub.s32 %s9, 2
    %s22 = sadd.s32 1, %s17
    %p23 = scmp.ge.s32.totalorder %s22, 1
    %s24 = scalar_select %p23, 0, %s22
    %s25 = sadd.s32 1, %s16
    %s26 = scalar_select %p23, %s25, %s16
    %p27 = scmp.ge.s32.totalorder %s26, 4
    %s28 = scalar_select %p27, 0, %s26
    %s29 = ssub.s32 %s16, %s28
    %s30 = ssub.s32 %s17, %s24
    %s31 = sor.u32 %s29, %s30
    %p32 = scmp.eq.s32.totalorder %s31, 0
    %s34 = sadd.s32 %s33, 1
    %s35 = scalar_select %p32, %s33, %s34
    %p38 = pneg %p32
    %p39 = scmp.eq.s32.totalorder %s9, 3
    %p40 = por %p38, %p39
    %p41 = scmp.ne.s32.totalorder %s33, %s36
    %p42 = scmp.eq.s32.totalorder %s9, 0
    %p43 = por %p41, %p42
    %p44 = scmp.ne.s32.totalorder %s33, %s36
    %p45 = scmp.eq.s32.totalorder %s14, 3
    %p46 = por %p44, %p45
    %p47 = scmp.ne.s32.totalorder %s36, %s37
    %p48 = scmp.eq.s32.totalorder %s14, 0
    %p49 = por %p47, %p48
    %p50 = scmp.ne.s32.totalorder %s36, %s37
    %p51 = scmp.eq.s32.totalorder %s15, 3
    %p52 = por %p50, %p51
    %p54 = scmp.ne.s32.totalorder %s37, %s53
    %p55 = scmp.eq.s32.totalorder %s15, 0
    %p56 = por %p54, %p55
    %s57 = ssub.s32 %s17, %s24
    %p58 = scmp.eq.s32.totalorder %s57, 0
    %s60 = sadd.s32 %s59, 1
    %s61 = scalar_select %p58, %s59, %s60
    %p64 = pneg %p58
    %p65 = scmp.eq.s32.totalorder %s9, 3
    %p66 = por %p64, %p65
    %p67 = scmp.ne.s32.totalorder %s59, %s62
    %p68 = scmp.eq.s32.totalorder %s9, 0
    %p69 = por %p67, %p68
    %p70 = scmp.ne.s32.totalorder %s59, %s62
    %p71 = scmp.eq.s32.totalorder %s14, 3
    %p72 = por %p70, %p71
    %p73 = scmp.ne.s32.totalorder %s62, %s63
    %p74 = scmp.eq.s32.totalorder %s14, 0
    %p75 = por %p73, %p74
    %p76 = scmp.ne.s32.totalorder %s62, %s63
    %p77 = scmp.eq.s32.totalorder %s15, 3
    %p78 = por %p76, %p77
    %p80 = scmp.ne.s32.totalorder %s63, %s79
    %p81 = scmp.eq.s32.totalorder %s15, 0
    %p82 = por %p80, %p81
    %s84 = sadd.s32 %s83, 1
    %p87 = scmp.eq.s32.totalorder %s9, 3
    %p88 = scmp.ne.s32.totalorder %s83, %s85
    %p89 = scmp.eq.s32.totalorder %s9, 0
    %p90 = por %p88, %p89
    %p91 = scmp.ne.s32.totalorder %s83, %s85
    %p92 = scmp.eq.s32.totalorder %s14, 3
    %p93 = por %p91, %p92
    %p94 = scmp.ne.s32.totalorder %s85, %s86
    %p95 = scmp.eq.s32.totalorder %s14, 0
    %p96 = por %p94, %p95
    %p97 = scmp.ne.s32.totalorder %s85, %s86
    %p98 = scmp.eq.s32.totalorder %s15, 3
    %p99 = por %p97, %p98
    %p101 = scmp.ne.s32.totalorder %s86, %s100
    %p102 = scmp.eq.s32.totalorder %s15, 0
    %p103 = por %p101, %p102
    %s104 = ssub.s32 %s16, %s28
    %p105 = scmp.eq.s32.totalorder %s104, 0
    %s107 = sadd.s32 %s106, 1
    %s108 = scalar_select %p105, %s106, %s107
    %p111 = pneg %p105
    %p112 = scmp.eq.s32.totalorder %s9, 3
    %p113 = por %p111, %p112
    %p114 = scmp.ne.s32.totalorder %s106, %s109
    %p115 = scmp.eq.s32.totalorder %s9, 0
    %p116 = por %p114, %p115
    %p117 = scmp.ne.s32.totalorder %s106, %s109
    %p118 = scmp.eq.s32.totalorder %s14, 3
    %p119 = por %p117, %p118
    %p120 = scmp.ne.s32.totalorder %s109, %s110
    %p121 = scmp.eq.s32.totalorder %s14, 0
    %p122 = por %p120, %p121
    %p123 = scmp.ne.s32.totalorder %s109, %s110
    %p124 = scmp.eq.s32.totalorder %s15, 3
    %p125 = por %p123, %p124
    %p127 = scmp.ne.s32.totalorder %s110, %s126
    %p128 = scmp.eq.s32.totalorder %s15, 0
    %p129 = por %p127, %p128
    %p130 = scmp.le.s32.totalorder 1, %s9
    %p131 = scmp.lt.s32.totalorder %s9, 5
    %p132 = pnand %p130, %p131
    %p133 = pneg %p132
    // Predicated region
    $region9: #{grl_forward.2} parent=5 // pred_check
      _
    $region10: #{grl_forward.2} parent=5 // pred_check_branch
      %135 = sbr.rel (%p132) target = $region12
    $region11: #{grl_forward.2} parent=5 // pred_region
      %s136 = ssub.s32 %s9, 1
      // Predicated region
      $region13: #{grl_forward.2} parent=11 // pred_check
        %p137 = pneg %p75
      $region14: #{grl_forward.2} parent=11 // pred_check_branch
        %139 = sbr.rel (%p137) target = $region16
      $region15: #{grl_forward.2} parent=11 // pred_region
        %s140 = smul.u32 64, %s19
        %p141 = scmp.lt.s32.totalorder %s140, 63
        %s142 = scalar_select %p141, %s140, 63
        %s143 = smul.addr %s142, 4
        %s144 = scalar_lea.vmem %s1, %s143
        %s145 = smul.u32 64, %s19
      $region16: #{grl_forward.2} parent=11 // pred_fallthru
        _
      // Predicated region
      $region17: #{grl_forward.2} parent=11 // pred_check
        %p146 = pneg %p96
      $region18: #{grl_forward.2} parent=11 // pred_check_branch
        %148 = sbr.rel (%p146) target = $region20
      $region19: #{grl_forward.2} parent=11 // pred_region
        _
      $region20: #{grl_forward.2} parent=11 // pred_fallthru
        _
    $region12: #{grl_forward.2} parent=5 // pred_fallthru
      _
    %p149 = scmp.lt.s32.totalorder %s9, 4
    // Predicated region
    $region21: #{grl_forward.2} parent=5 // pred_check
      %p150 = pneg %p149
    $region22: #{grl_forward.2} parent=5 // pred_check_branch
      %152 = sbr.rel (%p150) target = $region24
    $region23: #{grl_forward.2} parent=5 // pred_region
      // Predicated region
      $region25: #{grl_forward.2} parent=23 // pred_check
        %p153 = pneg %p43
      $region26: #{grl_forward.2} parent=23 // pred_check_branch
        %155 = sbr.rel (%p153) target = $region28
      $region27: #{grl_forward.2} parent=23 // pred_region
        %s156 = smul.u32 16, %s16
        %s157 = smul.u32 4, %s17
        %p158 = scmp.lt.s32.totalorder %s156, 63
        %s159 = scalar_select %p158, %s156, 63
        %p160 = scmp.lt.s32.totalorder %s157, 3
        %s161 = scalar_select %p160, %s157, 3
        %s162 = smul.addr %s159, 4
        %s163 = sadd.s32 %s161, %s162
        %s164 = smul.addr %s163, 4
        %s165 = scalar_lea.vmem %s0, %s164
        %s166 = smul.u32 16, %s16
        %s167 = smul.u32 4, %s17
      $region28: #{grl_forward.2} parent=23 // pred_fallthru
        _
    $region24: #{grl_forward.2} parent=5 // pred_fallthru
      _
    %p168 = scmp.le.s32.totalorder 1, %s9
    %p169 = scmp.lt.s32.totalorder %s9, 5
    %p170 = pnand %p168, %p169
    %p171 = pneg %p170
    // Predicated region
    $region29: #{grl_forward.2} parent=5 // pred_check
      _
    $region30: #{grl_forward.2} parent=5 // pred_check_branch
      %173 = sbr.rel (%p170) target = $region32
    $region31: #{grl_forward.2} parent=5 // pred_region
      %s174 = ssub.s32 %s9, 1
      %s175 = smul.u32 16, %s18
      %s176 = smul.u32 4, %s19
      %p177 = scmp.lt.s32.totalorder %s175, 63
      %s178 = scalar_select %p177, %s175, 63
      %p179 = scmp.lt.s32.totalorder %s176, 3
      %s180 = scalar_select %p179, %s176, 3
      %s181 = smul.addr %s178, 4
      %s182 = sadd.s32 %s180, %s181
      %s183 = smul.addr %s182, 4
      %s184 = scalar_lea.vmem %s0, %s183
      %p185 = pneg %p49
      %p186 = pneg %p46
      %s187 = smul.u32 64, %s19
      %p188 = scmp.lt.s32.totalorder %s187, 63
      %s189 = scalar_select %p188, %s187, 63
      %s190 = smul.addr %s189, 4
      %s191 = scalar_lea.vmem %s1, %s190
      %p192 = pneg %p75
      %p193 = pneg %p72
      %p194 = pneg %p96
      %p195 = pneg %p93
      %p196 = pneg %p122
      %p197 = pneg %p119
      %s198 = smul.u32 16, %s18
      %p199 = scmp.lt.s32.totalorder %s198, 63
      %s200 = scalar_select %p199, %s198, 63
      %s201 = smul.addr %s200, 4
      %s202 = scalar_lea.vmem %s3, %s201
      %s203 = smul.u32 16, %s18
      %s204 = smul.u32 4, %s19
      %p205 = scmp.lt.s32.totalorder %s203, 63
      %s206 = scalar_select %p205, %s203, 63
      %p207 = scmp.lt.s32.totalorder %s204, 3
      %s208 = scalar_select %p207, %s204, 3
      %s209 = smul.addr %s206, 4
      %s210 = sadd.s32 %s208, %s209
      %s211 = smul.addr %s210, 4
      %s212 = scalar_lea.vmem %s0, %s211
      %s213 = smul.u32 16, %s18
      %s214 = smul.u32 4, %s19
      %s215 = smul.u32 64, %s19
      %p216 = scmp.lt.s32.totalorder %s215, 63
      %s217 = scalar_select %p216, %s215, 63
      %s218 = smul.addr %s217, 4
      %s219 = scalar_lea.vmem %s1, %s218
      %s220 = smul.u32 64, %s19
      %s221 = smul.u32 16, %s18
      %p222 = scmp.lt.s32.totalorder %s221, 63
      %s223 = scalar_select %p222, %s221, 63
      %s224 = smul.addr %s223, 4
      %s225 = scalar_lea.vmem %s3, %s224
      %s226 = smul.u32 16, %s18
      %p228 = scmp.eq.s32.totalorder %s19, 0
      // Predicated region
      $region33: #{grl_forward.2} parent=31 // pred_check
        %p229 = pneg %p228
      $region34: #{grl_forward.2} parent=31 // pred_check_branch
        %231 = sbr.rel (%p229) target = $region36
      $region35: #{grl_forward.2} parent=31 // pred_region
        %232 = vst [vmem:[#allocation2] sm:$0xff] 0.0
        %233 = vst [vmem:[#allocation2 + $0x8] sm:$0xff] 0.0
        %234 = vst [vmem:[#allocation2 + $0x10] sm:$0xff] 0.0
        %235 = vst [vmem:[#allocation2 + $0x18] sm:$0xff] 0.0
        %236 = vst [vmem:[#allocation2 + $0x20] sm:$0xff] 0.0
        %237 = vst [vmem:[#allocation2 + $0x28] sm:$0xff] 0.0
        %238 = vst [vmem:[#allocation2 + $0x30] sm:$0xff] 0.0
        %239 = vst [vmem:[#allocation2 + $0x38] sm:$0xff] 0.0
        %240 = vst [vmem:[#allocation2 + $0x40] sm:$0xff] 0.0
        %241 = vst [vmem:[#allocation2 + $0x48] sm:$0xff] 0.0
        %242 = vst [vmem:[#allocation2 + $0x50] sm:$0xff] 0.0
        %243 = vst [vmem:[#allocation2 + $0x58] sm:$0xff] 0.0
        %244 = vst [vmem:[#allocation2 + $0x60] sm:$0xff] 0.0
        %245 = vst [vmem:[#allocation2 + $0x68] sm:$0xff] 0.0
        %246 = vst [vmem:[#allocation2 + $0x70] sm:$0xff] 0.0
        %247 = vst [vmem:[#allocation2 + $0x78] sm:$0xff] 0.0
      $region36: #{grl_forward.2} parent=31 // pred_fallthru
        _
      %v248 = vld [vmem:[#allocation2] sm:$0xff]
      %v249 = vld [vmem:[#allocation2 + $0x8] sm:$0xff]
      %v250 = vld [vmem:[#allocation2 + $0x10] sm:$0xff]
      %v251 = vld [vmem:[#allocation2 + $0x18] sm:$0xff]
      %v252 = vld [vmem:[#allocation2 + $0x20] sm:$0xff]
      %v253 = vld [vmem:[#allocation2 + $0x28] sm:$0xff]
      %v254 = vld [vmem:[#allocation2 + $0x30] sm:$0xff]
      %v255 = vld [vmem:[#allocation2 + $0x38] sm:$0xff]
      %v256 = vld [vmem:[#allocation2 + $0x40] sm:$0xff]
      %v257 = vld [vmem:[#allocation2 + $0x48] sm:$0xff]
      %v258 = vld [vmem:[#allocation2 + $0x50] sm:$0xff]
      %v259 = vld [vmem:[#allocation2 + $0x58] sm:$0xff]
      %v260 = vld [vmem:[#allocation2 + $0x60] sm:$0xff]
      %v261 = vld [vmem:[#allocation2 + $0x68] sm:$0xff]
      %v262 = vld [vmem:[#allocation2 + $0x70] sm:$0xff]
      %v263 = vld [vmem:[#allocation2 + $0x78] sm:$0xff]
      %v264 = vld [vmem:[%s212] sm:$0xff]
      %v265 = vld [vmem:[%s212 + $0x8] sm:$0xff]
      %v266 = vld [vmem:[%s212 + $0x10] sm:$0xff]
      %v267 = vld [vmem:[%s212 + $0x18] sm:$0xff]
      %v268 = vld [vmem:[%s212 + $0x20] sm:$0xff]
      %v269 = vld [vmem:[%s212 + $0x28] sm:$0xff]
      %v270 = vld [vmem:[%s212 + $0x30] sm:$0xff]
      %v271 = vld [vmem:[%s212 + $0x38] sm:$0xff]
      %v272 = vld [vmem:[%s212 + $0x40] sm:$0xff]
      %v273 = vld [vmem:[%s212 + $0x48] sm:$0xff]
      %v274 = vld [vmem:[%s212 + $0x50] sm:$0xff]
      %v275 = vld [vmem:[%s212 + $0x58] sm:$0xff]
      %v276 = vld [vmem:[%s212 + $0x60] sm:$0xff]
      %v277 = vld [vmem:[%s212 + $0x68] sm:$0xff]
      %v278 = vld [vmem:[%s212 + $0x70] sm:$0xff]
      %v279 = vld [vmem:[%s212 + $0x78] sm:$0xff]
      %v280 = vld [vmem:[%s212 + $0x80] sm:$0xff]
      %v281 = vld [vmem:[%s212 + $0x88] sm:$0xff]
      %v282 = vld [vmem:[%s212 + $0x90] sm:$0xff]
      %v283 = vld [vmem:[%s212 + $0x98] sm:$0xff]
      %v284 = vld [vmem:[%s212 + $0xa0] sm:$0xff]
      %v285 = vld [vmem:[%s212 + $0xa8] sm:$0xff]
      %v286 = vld [vmem:[%s212 + $0xb0] sm:$0xff]
      %v287 = vld [vmem:[%s212 + $0xb8] sm:$0xff]
      %v288 = vld [vmem:[%s212 + $0xc0] sm:$0xff]
      %v289 = vld [vmem:[%s212 + $0xc8] sm:$0xff]
      %v290 = vld [vmem:[%s212 + $0xd0] sm:$0xff]
      %v291 = vld [vmem:[%s212 + $0xd8] sm:$0xff]
      %v292 = vld [vmem:[%s212 + $0xe0] sm:$0xff]
      %v293 = vld [vmem:[%s212 + $0xe8] sm:$0xff]
      %v294 = vld [vmem:[%s212 + $0xf0] sm:$0xff]
      %v295 = vld [vmem:[%s212 + $0xf8] sm:$0xff]
      %v296 = vld [vmem:[%s219] sm:$0xf]
      %v297 = vld [vmem:[%s219 + $0x4] sm:$0xf]
      %v298 = vld [vmem:[%s219 + $0x8] sm:$0xf]
      %v299 = vld [vmem:[%s219 + $0xc] sm:$0xf]
      %v300 = vld [vmem:[%s219 + $0x10] sm:$0xf]
      %v301 = vld [vmem:[%s219 + $0x14] sm:$0xf]
      %v302 = vld [vmem:[%s219 + $0x18] sm:$0xf]
      %v303 = vld [vmem:[%s219 + $0x1c] sm:$0xf]
      %v304 = vld [vmem:[%s219 + $0x20] sm:$0xf]
      %v305 = vld [vmem:[%s219 + $0x24] sm:$0xf]
      %v306 = vld [vmem:[%s219 + $0x28] sm:$0xf]
      %v307 = vld [vmem:[%s219 + $0x2c] sm:$0xf]
      %v308 = vld [vmem:[%s219 + $0x30] sm:$0xf]
      %v309 = vld [vmem:[%s219 + $0x34] sm:$0xf]
      %v310 = vld [vmem:[%s219 + $0x38] sm:$0xf]
      %v311 = vld [vmem:[%s219 + $0x3c] sm:$0xf]
      %v312 = vld [vmem:[%s219 + $0x40] sm:$0xf]
      %v313 = vld [vmem:[%s219 + $0x44] sm:$0xf]
      %v314 = vld [vmem:[%s219 + $0x48] sm:$0xf]
      %v315 = vld [vmem:[%s219 + $0x4c] sm:$0xf]
      %v316 = vld [vmem:[%s219 + $0x50] sm:$0xf]
      %v317 = vld [vmem:[%s219 + $0x54] sm:$0xf]
      %v318 = vld [vmem:[%s219 + $0x58] sm:$0xf]
      %v319 = vld [vmem:[%s219 + $0x5c] sm:$0xf]
      %v320 = vld [vmem:[%s219 + $0x60] sm:$0xf]
      %v321 = vld [vmem:[%s219 + $0x64] sm:$0xf]
      %v322 = vld [vmem:[%s219 + $0x68] sm:$0xf]
      %v323 = vld [vmem:[%s219 + $0x6c] sm:$0xf]
      %v324 = vld [vmem:[%s219 + $0x70] sm:$0xf]
      %v325 = vld [vmem:[%s219 + $0x74] sm:$0xf]
      %v326 = vld [vmem:[%s219 + $0x78] sm:$0xf]
      %v327 = vld [vmem:[%s219 + $0x7c] sm:$0xf]
      %v328 = vld [vmem:[%s219 + $0x80] sm:$0xf]
      %v329 = vld [vmem:[%s219 + $0x84] sm:$0xf]
      %v330 = vld [vmem:[%s219 + $0x88] sm:$0xf]
      %v331 = vld [vmem:[%s219 + $0x8c] sm:$0xf]
      %v332 = vld [vmem:[%s219 + $0x90] sm:$0xf]
      %v333 = vld [vmem:[%s219 + $0x94] sm:$0xf]
      %v334 = vld [vmem:[%s219 + $0x98] sm:$0xf]
      %v335 = vld [vmem:[%s219 + $0x9c] sm:$0xf]
      %v336 = vld [vmem:[%s219 + $0xa0] sm:$0xf]
      %v337 = vld [vmem:[%s219 + $0xa4] sm:$0xf]
      %v338 = vld [vmem:[%s219 + $0xa8] sm:$0xf]
      %v339 = vld [vmem:[%s219 + $0xac] sm:$0xf]
      %v340 = vld [vmem:[%s219 + $0xb0] sm:$0xf]
      %v341 = vld [vmem:[%s219 + $0xb4] sm:$0xf]
      %v342 = vld [vmem:[%s219 + $0xb8] sm:$0xf]
      %v343 = vld [vmem:[%s219 + $0xbc] sm:$0xf]
      %v344 = vld [vmem:[%s219 + $0xc0] sm:$0xf]
      %v345 = vld [vmem:[%s219 + $0xc4] sm:$0xf]
      %v346 = vld [vmem:[%s219 + $0xc8] sm:$0xf]
      %v347 = vld [vmem:[%s219 + $0xcc] sm:$0xf]
      %v348 = vld [vmem:[%s219 + $0xd0] sm:$0xf]
      %v349 = vld [vmem:[%s219 + $0xd4] sm:$0xf]
      %v350 = vld [vmem:[%s219 + $0xd8] sm:$0xf]
      %v351 = vld [vmem:[%s219 + $0xdc] sm:$0xf]
      %v352 = vld [vmem:[%s219 + $0xe0] sm:$0xf]
      %v353 = vld [vmem:[%s219 + $0xe4] sm:$0xf]
      %v354 = vld [vmem:[%s219 + $0xe8] sm:$0xf]
      %v355 = vld [vmem:[%s219 + $0xec] sm:$0xf]
      %v356 = vld [vmem:[%s219 + $0xf0] sm:$0xf]
      %v357 = vld [vmem:[%s219 + $0xf4] sm:$0xf]
      %v358 = vld [vmem:[%s219 + $0xf8] sm:$0xf]
      %v359 = vld [vmem:[%s219 + $0xfc] sm:$0xf]
      %v392 = vunpack.c.l.b16 %v264
      %v393 = vunpack.c.h.b16 %v264
      %v394 = vunpack.c.l.b16 %v265
      %v395 = vunpack.c.h.b16 %v265
      %v396 = vunpack.c.l.b16 %v266
      %v397 = vunpack.c.h.b16 %v266
      %v398 = vunpack.c.l.b16 %v267
      %v399 = vunpack.c.h.b16 %v267
      %v400 = vunpack.c.l.b16 %v268
      %v401 = vunpack.c.h.b16 %v268
      %v402 = vunpack.c.l.b16 %v269
      %v403 = vunpack.c.h.b16 %v269
      %v404 = vunpack.c.l.b16 %v270
      %v405 = vunpack.c.h.b16 %v270
      %v406 = vunpack.c.l.b16 %v271
      %v407 = vunpack.c.h.b16 %v271
      %v408 = vunpack.c.l.b16 %v272
      %v409 = vunpack.c.h.b16 %v272
      %v410 = vunpack.c.l.b16 %v273
      %v411 = vunpack.c.h.b16 %v273
      %v412 = vunpack.c.l.b16 %v274
      %v413 = vunpack.c.h.b16 %v274
      %v414 = vunpack.c.l.b16 %v275
      %v415 = vunpack.c.h.b16 %v275
      %v416 = vunpack.c.l.b16 %v276
      %v417 = vunpack.c.h.b16 %v276
      %v418 = vunpack.c.l.b16 %v277
      %v419 = vunpack.c.h.b16 %v277
      %v420 = vunpack.c.l.b16 %v278
      %v421 = vunpack.c.h.b16 %v278
      %v422 = vunpack.c.l.b16 %v279
      %v423 = vunpack.c.h.b16 %v279
      %v424 = vunpack.c.l.b16 %v280
      %v425 = vunpack.c.h.b16 %v280
      %v426 = vunpack.c.l.b16 %v281
      %v427 = vunpack.c.h.b16 %v281
      %v428 = vunpack.c.l.b16 %v282
      %v429 = vunpack.c.h.b16 %v282
      %v430 = vunpack.c.l.b16 %v283
      %v431 = vunpack.c.h.b16 %v283
      %v432 = vunpack.c.l.b16 %v284
      %v433 = vunpack.c.h.b16 %v284
      %v434 = vunpack.c.l.b16 %v285
      %v435 = vunpack.c.h.b16 %v285
      %v436 = vunpack.c.l.b16 %v286
      %v437 = vunpack.c.h.b16 %v286
      %v438 = vunpack.c.l.b16 %v287
      %v439 = vunpack.c.h.b16 %v287
      %v440 = vunpack.c.l.b16 %v288
      %v441 = vunpack.c.h.b16 %v288
      %v442 = vunpack.c.l.b16 %v289
      %v443 = vunpack.c.h.b16 %v289
      %v444 = vunpack.c.l.b16 %v290
      %v445 = vunpack.c.h.b16 %v290
      %v446 = vunpack.c.l.b16 %v291
      %v447 = vunpack.c.h.b16 %v291
      %v448 = vunpack.c.l.b16 %v292
      %v449 = vunpack.c.h.b16 %v292
      %v450 = vunpack.c.l.b16 %v293
      %v451 = vunpack.c.h.b16 %v293
      %v452 = vunpack.c.l.b16 %v294
      %v453 = vunpack.c.h.b16 %v294
      %v454 = vunpack.c.l.b16 %v295
      %v455 = vunpack.c.h.b16 %v295
      %v456 = vpack.c.b16 %v396, %v392
      %v457 = vpack.c.b16 %v397, %v393
      %v458 = vpack.c.b16 %v398, %v394
      %v459 = vpack.c.b16 %v399, %v395
      %v460 = vpack.c.b16 %v404, %v400
      %v461 = vpack.c.b16 %v405, %v401
      %v462 = vpack.c.b16 %v406, %v402
      %v463 = vpack.c.b16 %v407, %v403
      %v464 = vpack.c.b16 %v412, %v408
      %v465 = vpack.c.b16 %v413, %v409
      %v466 = vpack.c.b16 %v414, %v410
      %v467 = vpack.c.b16 %v415, %v411
      %v468 = vpack.c.b16 %v420, %v416
      %v469 = vpack.c.b16 %v421, %v417
      %v470 = vpack.c.b16 %v422, %v418
      %v471 = vpack.c.b16 %v423, %v419
      %v472 = vpack.c.b16 %v428, %v424
      %v473 = vpack.c.b16 %v429, %v425
      %v474 = vpack.c.b16 %v430, %v426
      %v475 = vpack.c.b16 %v431, %v427
      %v476 = vpack.c.b16 %v436, %v432
      %v477 = vpack.c.b16 %v437, %v433
      %v478 = vpack.c.b16 %v438, %v434
      %v479 = vpack.c.b16 %v439, %v435
      %v480 = vpack.c.b16 %v444, %v440
      %v481 = vpack.c.b16 %v445, %v441
      %v482 = vpack.c.b16 %v446, %v442
      %v483 = vpack.c.b16 %v447, %v443
      %v484 = vpack.c.b16 %v452, %v448
      %v485 = vpack.c.b16 %v453, %v449
      %v486 = vpack.c.b16 %v454, %v450
      %v487 = vpack.c.b16 %v455, %v451
      %v584 = vunpack.c.l.b16 %v296
      %v585 = vunpack.c.l.b16 %v297
      %v586 = vunpack.c.l.b16 %v298
      %v587 = vunpack.c.l.b16 %v299
      %v588 = vunpack.c.l.b16 %v300
      %v589 = vunpack.c.l.b16 %v301
      %v590 = vunpack.c.l.b16 %v302
      %v591 = vunpack.c.l.b16 %v303
      %v592 = vunpack.c.l.b16 %v304
      %v593 = vunpack.c.l.b16 %v305
      %v594 = vunpack.c.l.b16 %v306
      %v595 = vunpack.c.l.b16 %v307
      %v596 = vunpack.c.l.b16 %v308
      %v597 = vunpack.c.l.b16 %v309
      %v598 = vunpack.c.l.b16 %v310
      %v599 = vunpack.c.l.b16 %v311
      %v600 = vunpack.c.l.b16 %v312
      %v601 = vunpack.c.l.b16 %v313
      %v602 = vunpack.c.l.b16 %v314
      %v603 = vunpack.c.l.b16 %v315
      %v604 = vunpack.c.l.b16 %v316
      %v605 = vunpack.c.l.b16 %v317
      %v606 = vunpack.c.l.b16 %v318
      %v607 = vunpack.c.l.b16 %v319
      %v608 = vunpack.c.l.b16 %v320
      %v609 = vunpack.c.l.b16 %v321
      %v610 = vunpack.c.l.b16 %v322
      %v611 = vunpack.c.l.b16 %v323
      %v612 = vunpack.c.l.b16 %v324
      %v613 = vunpack.c.l.b16 %v325
      %v614 = vunpack.c.l.b16 %v326
      %v615 = vunpack.c.l.b16 %v327
      %v616 = vunpack.c.l.b16 %v328
      %v617 = vunpack.c.l.b16 %v329
      %v618 = vunpack.c.l.b16 %v330
      %v619 = vunpack.c.l.b16 %v331
      %v620 = vunpack.c.l.b16 %v332
      %v621 = vunpack.c.l.b16 %v333
      %v622 = vunpack.c.l.b16 %v334
      %v623 = vunpack.c.l.b16 %v335
      %v624 = vunpack.c.l.b16 %v336
      %v625 = vunpack.c.l.b16 %v337
      %v626 = vunpack.c.l.b16 %v338
      %v627 = vunpack.c.l.b16 %v339
      %v628 = vunpack.c.l.b16 %v340
      %v629 = vunpack.c.l.b16 %v341
      %v630 = vunpack.c.l.b16 %v342
      %v631 = vunpack.c.l.b16 %v343
      %v632 = vunpack.c.l.b16 %v344
      %v633 = vunpack.c.l.b16 %v345
      %v634 = vunpack.c.l.b16 %v346
      %v635 = vunpack.c.l.b16 %v347
      %v636 = vunpack.c.l.b16 %v348
      %v637 = vunpack.c.l.b16 %v349
      %v638 = vunpack.c.l.b16 %v350
      %v639 = vunpack.c.l.b16 %v351
      %v640 = vunpack.c.l.b16 %v352
      %v641 = vunpack.c.l.b16 %v353
      %v642 = vunpack.c.l.b16 %v354
      %v643 = vunpack.c.l.b16 %v355
      %v644 = vunpack.c.l.b16 %v356
      %v645 = vunpack.c.l.b16 %v357
      %v646 = vunpack.c.l.b16 %v358
      %v647 = vunpack.c.l.b16 %v359
      %v648 = vpack.c.b16 %v585, %v584
      %v649 = vpack.c.b16 %v587, %v586
      %v650 = vpack.c.b16 %v589, %v588
      %v651 = vpack.c.b16 %v591, %v590
      %v652 = vpack.c.b16 %v593, %v592
      %v653 = vpack.c.b16 %v595, %v594
      %v654 = vpack.c.b16 %v597, %v596
      %v655 = vpack.c.b16 %v599, %v598
      %v656 = vpack.c.b16 %v601, %v600
      %v657 = vpack.c.b16 %v603, %v602
      %v658 = vpack.c.b16 %v605, %v604
      %v659 = vpack.c.b16 %v607, %v606
      %v660 = vpack.c.b16 %v609, %v608
      %v661 = vpack.c.b16 %v611, %v610
      %v662 = vpack.c.b16 %v613, %v612
      %v663 = vpack.c.b16 %v615, %v614
      %v664 = vpack.c.b16 %v617, %v616
      %v665 = vpack.c.b16 %v619, %v618
      %v666 = vpack.c.b16 %v621, %v620
      %v667 = vpack.c.b16 %v623, %v622
      %v668 = vpack.c.b16 %v625, %v624
      %v669 = vpack.c.b16 %v627, %v626
      %v670 = vpack.c.b16 %v629, %v628
      %v671 = vpack.c.b16 %v631, %v630
      %v672 = vpack.c.b16 %v633, %v632
      %v673 = vpack.c.b16 %v635, %v634
      %v674 = vpack.c.b16 %v637, %v636
      %v675 = vpack.c.b16 %v639, %v638
      %v676 = vpack.c.b16 %v641, %v640
      %v677 = vpack.c.b16 %v643, %v642
      %v678 = vpack.c.b16 %v645, %v644
      %v679 = vpack.c.b16 %v647, %v646
      %712 = vmatprep.subr.bf16.mxu0 0
      %713 = vmatpush1.bf16.msra.mxu0 %v648
      %714 = vmatprep.subr.bf16.mxu0 0
      %715 = vmatpush1.bf16.msra.mxu0 %v649
      %716 = vmatprep.subr.bf16.mxu0 0
      %717 = vmatpush1.bf16.msra.mxu0 %v650
      %718 = vmatprep.subr.bf16.mxu0 0
      %719 = vmatpush1.bf16.msra.mxu0 %v651
      %720 = vmatprep.subr.bf16.mxu0 0
      %721 = vmatpush1.bf16.msra.mxu0 %v652
      %722 = vmatprep.subr.bf16.mxu0 0
      %723 = vmatpush1.bf16.msra.mxu0 %v653
      %724 = vmatprep.subr.bf16.mxu0 0
      %725 = vmatpush1.bf16.msra.mxu0 %v654
      %726 = vmatprep.subr.bf16.mxu0 0
      %727 = vmatpush1.bf16.msra.mxu0 %v655
      %728 = vmatprep.subr.bf16.mxu0 0
      %729 = vmatpush1.bf16.msra.mxu0 %v656
      %730 = vmatprep.subr.bf16.mxu0 0
      %731 = vmatpush1.bf16.msra.mxu0 %v657
      %732 = vmatprep.subr.bf16.mxu0 0
      %733 = vmatpush1.bf16.msra.mxu0 %v658
      %734 = vmatprep.subr.bf16.mxu0 0
      %735 = vmatpush1.bf16.msra.mxu0 %v659
      %736 = vmatprep.subr.bf16.mxu0 0
      %737 = vmatpush1.bf16.msra.mxu0 %v660
      %738 = vmatprep.subr.bf16.mxu0 0
      %739 = vmatpush1.bf16.msra.mxu0 %v661
      %740 = vmatprep.subr.bf16.mxu0 0
      %741 = vmatpush1.bf16.msra.mxu0 %v662
      %742 = vmatprep.subr.bf16.mxu0 0
      %743 = vmatpush1.bf16.msra.mxu0 %v663
      %744 = vmatprep.mubr.bf16.mxu0 %v457
      %745 = vmatmul.mubr.bf16.gmra.mrb[0].mxu0 %v456
      %v746 = vpop.f32.mrb[0].mxu0
      %v747 = vadd.f32 0.0, %v746
      %v748 = vpop.f32.mrb[0].mxu0
      %v749 = vpop.f32.mrb[0].mxu0
      %v750 = vadd.f32 0.0, %v749
      %v751 = vpop.f32.mrb[0].mxu0
      %752 = vmatprep.mubr.bf16.mxu0 %v461
      %753 = vmatmul.mubr.bf16.gmra.mrb[0].mxu0 %v460
      %v754 = vpop.f32.mrb[0].mxu0
      %v755 = vadd.f32 0.0, %v754
      %v756 = vpop.f32.mrb[0].mxu0
      %v757 = vpop.f32.mrb[0].mxu0
      %v758 = vadd.f32 0.0, %v757
      %v759 = vpop.f32.mrb[0].mxu0
      %760 = vmatprep.mubr.bf16.mxu0 %v465
      %761 = vmatmul.mubr.bf16.gmra.mrb[0].mxu0 %v464
      %v762 = vpop.f32.mrb[0].mxu0
      %v763 = vadd.f32 0.0, %v762
      %v764 = vpop.f32.mrb[0].mxu0
      %v765 = vpop.f32.mrb[0].mxu0
      %v766 = vadd.f32 0.0, %v765
      %v767 = vpop.f32.mrb[0].mxu0
      %768 = vmatprep.mubr.bf16.mxu0 %v469
      %769 = vmatmul.mubr.bf16.gmra.mrb[0].mxu0 %v468
      %v770 = vpop.f32.mrb[0].mxu0
      %v771 = vadd.f32 0.0, %v770
      %v772 = vpop.f32.mrb[0].mxu0
      %v773 = vpop.f32.mrb[0].mxu0
      %v774 = vadd.f32 0.0, %v773
      %v775 = vpop.f32.mrb[0].mxu0
      %776 = vmatprep.mubr.bf16.mxu0 %v473
      %777 = vmatmul.mubr.bf16.gmra.mrb[0].mxu0 %v472
      %v778 = vpop.f32.mrb[0].mxu0
      %v779 = vadd.f32 0.0, %v778
      %v780 = vpop.f32.mrb[0].mxu0
      %v781 = vpop.f32.mrb[0].mxu0
      %v782 = vadd.f32 0.0, %v781
      %v783 = vpop.f32.mrb[0].mxu0
      %784 = vmatprep.mubr.bf16.mxu0 %v477
      %785 = vmatmul.mubr.bf16.gmra.mrb[0].mxu0 %v476
      %v786 = vpop.f32.mrb[0].mxu0
      %v787 = vadd.f32 0.0, %v786
      %v788 = vpop.f32.mrb[0].mxu0
      %v789 = vpop.f32.mrb[0].mxu0
      %v790 = vadd.f32 0.0, %v789
      %v791 = vpop.f32.mrb[0].mxu0
      %792 = vmatprep.mubr.bf16.mxu0 %v481
      %793 = vmatmul.mubr.bf16.gmra.mrb[0].mxu0 %v480
      %v794 = vpop.f32.mrb[0].mxu0
      %v795 = vadd.f32 0.0, %v794
      %v796 = vpop.f32.mrb[0].mxu0
      %v797 = vpop.f32.mrb[0].mxu0
      %v798 = vadd.f32 0.0, %v797
      %v799 = vpop.f32.mrb[0].mxu0
      %800 = vmatprep.mubr.bf16.mxu0 %v485
      %801 = vmatmul.mubr.bf16.gmra.mrb[0].mxu0 %v484
      %v802 = vpop.f32.mrb[0].mxu0
      %v803 = vadd.f32 0.0, %v802
      %v804 = vpop.f32.mrb[0].mxu0
      %v805 = vpop.f32.mrb[0].mxu0
      %v806 = vadd.f32 0.0, %v805
      %v807 = vpop.f32.mrb[0].mxu0
      %808 = vdwg.mxu0
      %809 = vmatprep.subr.bf16.mxu0 0
      %810 = vmatpush1.bf16.msra.mxu0 %v664
      %811 = vmatprep.subr.bf16.mxu0 0
      %812 = vmatpush1.bf16.msra.mxu0 %v665
      %813 = vmatprep.subr.bf16.mxu0 0
      %814 = vmatpush1.bf16.msra.mxu0 %v666
      %815 = vmatprep.subr.bf16.mxu0 0
      %816 = vmatpush1.bf16.msra.mxu0 %v667
      %817 = vmatprep.subr.bf16.mxu0 0
      %818 = vmatpush1.bf16.msra.mxu0 %v668
      %819 = vmatprep.subr.bf16.mxu0 0
      %820 = vmatpush1.bf16.msra.mxu0 %v669
      %821 = vmatprep.subr.bf16.mxu0 0
      %822 = vmatpush1.bf16.msra.mxu0 %v670
      %823 = vmatprep.subr.bf16.mxu0 0
      %824 = vmatpush1.bf16.msra.mxu0 %v671
      %825 = vmatprep.subr.bf16.mxu0 0
      %826 = vmatpush1.bf16.msra.mxu0 %v672
      %827 = vmatprep.subr.bf16.mxu0 0
      %828 = vmatpush1.bf16.msra.mxu0 %v673
      %829 = vmatprep.subr.bf16.mxu0 0
      %830 = vmatpush1.bf16.msra.mxu0 %v674
      %831 = vmatprep.subr.bf16.mxu0 0
      %832 = vmatpush1.bf16.msra.mxu0 %v675
      %833 = vmatprep.subr.bf16.mxu0 0
      %834 = vmatpush1.bf16.msra.mxu0 %v676
      %835 = vmatprep.subr.bf16.mxu0 0
      %836 = vmatpush1.bf16.msra.mxu0 %v677
      %837 = vmatprep.subr.bf16.mxu0 0
      %838 = vmatpush1.bf16.msra.mxu0 %v678
      %839 = vmatprep.subr.bf16.mxu0 0
      %840 = vmatpush1.bf16.msra.mxu0 %v679
      %841 = vmatprep.mubr.bf16.mxu0 %v459
      %842 = vmatmul.mubr.bf16.gmra.mrb[0].mxu0 %v458
      %v843 = vpop.f32.mrb[0].mxu0
      %v844 = vadd.f32 %v747, %v843
      %v845 = vpop.f32.mrb[0].mxu0
      %v846 = vpop.f32.mrb[0].mxu0
      %v847 = vadd.f32 %v750, %v846
      %v848 = vpop.f32.mrb[0].mxu0
      %849 = vmatprep.mubr.bf16.mxu0 %v463
      %850 = vmatmul.mubr.bf16.gmra.mrb[0].mxu0 %v462
      %v851 = vpop.f32.mrb[0].mxu0
      %v852 = vadd.f32 %v755, %v851
      %v853 = vpop.f32.mrb[0].mxu0
      %v854 = vpop.f32.mrb[0].mxu0
      %v855 = vadd.f32 %v758, %v854
      %v856 = vpop.f32.mrb[0].mxu0
      %857 = vmatprep.mubr.bf16.mxu0 %v467
      %858 = vmatmul.mubr.bf16.gmra.mrb[0].mxu0 %v466
      %v859 = vpop.f32.mrb[0].mxu0
      %v860 = vadd.f32 %v763, %v859
      %v861 = vpop.f32.mrb[0].mxu0
      %v862 = vpop.f32.mrb[0].mxu0
      %v863 = vadd.f32 %v766, %v862
      %v864 = vpop.f32.mrb[0].mxu0
      %865 = vmatprep.mubr.bf16.mxu0 %v471
      %866 = vmatmul.mubr.bf16.gmra.mrb[0].mxu0 %v470
      %v867 = vpop.f32.mrb[0].mxu0
      %v868 = vadd.f32 %v771, %v867
      %v869 = vpop.f32.mrb[0].mxu0
      %v870 = vpop.f32.mrb[0].mxu0
      %v871 = vadd.f32 %v774, %v870
      %v872 = vpop.f32.mrb[0].mxu0
      %873 = vmatprep.mubr.bf16.mxu0 %v475
      %874 = vmatmul.mubr.bf16.gmra.mrb[0].mxu0 %v474
      %v875 = vpop.f32.mrb[0].mxu0
      %v876 = vadd.f32 %v779, %v875
      %v877 = vpop.f32.mrb[0].mxu0
      %v878 = vpop.f32.mrb[0].mxu0
      %v879 = vadd.f32 %v782, %v878
      %v880 = vpop.f32.mrb[0].mxu0
      %881 = vmatprep.mubr.bf16.mxu0 %v479
      %882 = vmatmul.mubr.bf16.gmra.mrb[0].mxu0 %v478
      %v883 = vpop.f32.mrb[0].mxu0
      %v884 = vadd.f32 %v787, %v883
      %v885 = vpop.f32.mrb[0].mxu0
      %v886 = vpop.f32.mrb[0].mxu0
      %v887 = vadd.f32 %v790, %v886
      %v888 = vpop.f32.mrb[0].mxu0
      %889 = vmatprep.mubr.bf16.mxu0 %v483
      %890 = vmatmul.mubr.bf16.gmra.mrb[0].mxu0 %v482
      %v891 = vpop.f32.mrb[0].mxu0
      %v892 = vadd.f32 %v795, %v891
      %v893 = vpop.f32.mrb[0].mxu0
      %v894 = vpop.f32.mrb[0].mxu0
      %v895 = vadd.f32 %v798, %v894
      %v896 = vpop.f32.mrb[0].mxu0
      %897 = vmatprep.mubr.bf16.mxu0 %v487
      %898 = vmatmul.mubr.bf16.gmra.mrb[0].mxu0 %v486
      %v899 = vpop.f32.mrb[0].mxu0
      %v900 = vadd.f32 %v803, %v899
      %v901 = vpop.f32.mrb[0].mxu0
      %v902 = vpop.f32.mrb[0].mxu0
      %v903 = vadd.f32 %v806, %v902
      %v904 = vpop.f32.mrb[0].mxu0
      %905 = vdwg.mxu0
      %v906 = vadd.f32 %v248, %v844
      %v907 = vadd.f32 %v249, %v847
      %v908 = vadd.f32 %v250, %v852
      %v909 = vadd.f32 %v251, %v855
      %v910 = vadd.f32 %v252, %v860
      %v911 = vadd.f32 %v253, %v863
      %v912 = vadd.f32 %v254, %v868
      %v913 = vadd.f32 %v255, %v871
      %v914 = vadd.f32 %v256, %v876
      %v915 = vadd.f32 %v257, %v879
      %v916 = vadd.f32 %v258, %v884
      %v917 = vadd.f32 %v259, %v887
      %v918 = vadd.f32 %v260, %v892
      %v919 = vadd.f32 %v261, %v895
      %v920 = vadd.f32 %v262, %v900
      %v921 = vadd.f32 %v263, %v903
      %922 = vst [vmem:[#allocation2] sm:$0xff] %v906
      %923 = vst [vmem:[#allocation2 + $0x8] sm:$0xff] %v907
      %924 = vst [vmem:[#allocation2 + $0x10] sm:$0xff] %v908
      %925 = vst [vmem:[#allocation2 + $0x18] sm:$0xff] %v909
      %926 = vst [vmem:[#allocation2 + $0x20] sm:$0xff] %v910
      %927 = vst [vmem:[#allocation2 + $0x28] sm:$0xff] %v911
      %928 = vst [vmem:[#allocation2 + $0x30] sm:$0xff] %v912
      %929 = vst [vmem:[#allocation2 + $0x38] sm:$0xff] %v913
      %930 = vst [vmem:[#allocation2 + $0x40] sm:$0xff] %v914
      %931 = vst [vmem:[#allocation2 + $0x48] sm:$0xff] %v915
      %932 = vst [vmem:[#allocation2 + $0x50] sm:$0xff] %v916
      %933 = vst [vmem:[#allocation2 + $0x58] sm:$0xff] %v917
      %934 = vst [vmem:[#allocation2 + $0x60] sm:$0xff] %v918
      %935 = vst [vmem:[#allocation2 + $0x68] sm:$0xff] %v919
      %936 = vst [vmem:[#allocation2 + $0x70] sm:$0xff] %v920
      %937 = vst [vmem:[#allocation2 + $0x78] sm:$0xff] %v921
      // Predicated region
      $region37: #{grl_forward.2} parent=31 // pred_check
        %p938 = pneg %p228
      $region38: #{grl_forward.2} parent=31 // pred_check_branch
        %940 = sbr.rel (%p938) target = $region40
      $region39: #{grl_forward.2} parent=31 // pred_region
        %v941 = vld [vmem:[#allocation2] sm:$0xff]
        %v942 = vld [vmem:[#allocation2 + $0x8] sm:$0xff]
        %v943 = vld [vmem:[#allocation2 + $0x10] sm:$0xff]
        %v944 = vld [vmem:[#allocation2 + $0x18] sm:$0xff]
        %v945 = vld [vmem:[#allocation2 + $0x20] sm:$0xff]
        %v946 = vld [vmem:[#allocation2 + $0x28] sm:$0xff]
        %v947 = vld [vmem:[#allocation2 + $0x30] sm:$0xff]
        %v948 = vld [vmem:[#allocation2 + $0x38] sm:$0xff]
        %v949 = vld [vmem:[#allocation2 + $0x40] sm:$0xff]
        %v950 = vld [vmem:[#allocation2 + $0x48] sm:$0xff]
        %v951 = vld [vmem:[#allocation2 + $0x50] sm:$0xff]
        %v952 = vld [vmem:[#allocation2 + $0x58] sm:$0xff]
        %v953 = vld [vmem:[#allocation2 + $0x60] sm:$0xff]
        %v954 = vld [vmem:[#allocation2 + $0x68] sm:$0xff]
        %v955 = vld [vmem:[#allocation2 + $0x70] sm:$0xff]
        %v956 = vld [vmem:[#allocation2 + $0x78] sm:$0xff]
        %v957 = vld [vmem:[%s2] sm:$0x1]
        %v959 = vlaneseq
        %v960 = vshrl.u32 %v959, 7
        %v961 = vsub.s32 0, %v960
        %v962 = vrot.slane %v957, %v961
        %v964 = vadd.f32 %v941, %v962
        %v965 = vadd.f32 %v942, %v962
        %v966 = vadd.f32 %v943, %v962
        %v967 = vadd.f32 %v944, %v962
        %v968 = vadd.f32 %v945, %v962
        %v969 = vadd.f32 %v946, %v962
        %v970 = vadd.f32 %v947, %v962
        %v971 = vadd.f32 %v948, %v962
        %v972 = vadd.f32 %v949, %v962
        %v973 = vadd.f32 %v950, %v962
        %v974 = vadd.f32 %v951, %v962
        %v975 = vadd.f32 %v952, %v962
        %v976 = vadd.f32 %v953, %v962
        %v977 = vadd.f32 %v954, %v962
        %v978 = vadd.f32 %v955, %v962
        %v979 = vadd.f32 %v956, %v962
        %v980 = vmul.f32 %v964, 0.5
        %v981 = vmul.f32 %v965, 0.5
        %v982 = vmul.f32 %v966, 0.5
        %v983 = vmul.f32 %v967, 0.5
        %v984 = vmul.f32 %v968, 0.5
        %v985 = vmul.f32 %v969, 0.5
        %v986 = vmul.f32 %v970, 0.5
        %v987 = vmul.f32 %v971, 0.5
        %v988 = vmul.f32 %v972, 0.5
        %v989 = vmul.f32 %v973, 0.5
        %v990 = vmul.f32 %v974, 0.5
        %v991 = vmul.f32 %v975, 0.5
        %v992 = vmul.f32 %v976, 0.5
        %v993 = vmul.f32 %v977, 0.5
        %v994 = vmul.f32 %v978, 0.5
        %v995 = vmul.f32 %v979, 0.5
        %v996 = vtanh.pop %v980
        %v997 = vtanh.pop %v981
        %v998 = vtanh.pop %v982
        %v999 = vtanh.pop %v983
        %v1000 = vtanh.pop %v984
        %v1001 = vtanh.pop %v985
        %v1002 = vtanh.pop %v986
        %v1003 = vtanh.pop %v987
        %v1004 = vtanh.pop %v988
        %v1005 = vtanh.pop %v989
        %v1006 = vtanh.pop %v990
        %v1007 = vtanh.pop %v991
        %v1008 = vtanh.pop %v992
        %v1009 = vtanh.pop %v993
        %v1010 = vtanh.pop %v994
        %v1011 = vtanh.pop %v995
        %v1012 = vmul.f32 %v996, 0.5
        %v1013 = vmul.f32 %v997, 0.5
        %v1014 = vmul.f32 %v998, 0.5
        %v1015 = vmul.f32 %v999, 0.5
        %v1016 = vmul.f32 %v1000, 0.5
        %v1017 = vmul.f32 %v1001, 0.5
        %v1018 = vmul.f32 %v1002, 0.5
        %v1019 = vmul.f32 %v1003, 0.5
        %v1020 = vmul.f32 %v1004, 0.5
        %v1021 = vmul.f32 %v1005, 0.5
        %v1022 = vmul.f32 %v1006, 0.5
        %v1023 = vmul.f32 %v1007, 0.5
        %v1024 = vmul.f32 %v1008, 0.5
        %v1025 = vmul.f32 %v1009, 0.5
        %v1026 = vmul.f32 %v1010, 0.5
        %v1027 = vmul.f32 %v1011, 0.5
        %v1028 = vadd.f32 %v1012, 0.5
        %v1029 = vadd.f32 %v1013, 0.5
        %v1030 = vadd.f32 %v1014, 0.5
        %v1031 = vadd.f32 %v1015, 0.5
        %v1032 = vadd.f32 %v1016, 0.5
        %v1033 = vadd.f32 %v1017, 0.5
        %v1034 = vadd.f32 %v1018, 0.5
        %v1035 = vadd.f32 %v1019, 0.5
        %v1036 = vadd.f32 %v1020, 0.5
        %v1037 = vadd.f32 %v1021, 0.5
        %v1038 = vadd.f32 %v1022, 0.5
        %v1039 = vadd.f32 %v1023, 0.5
        %v1040 = vadd.f32 %v1024, 0.5
        %v1041 = vadd.f32 %v1025, 0.5
        %v1042 = vadd.f32 %v1026, 0.5
        %v1043 = vadd.f32 %v1027, 0.5
        %v1044 = vpack.c.bf16 %v1029, %v1028
        %v1045 = vpack.c.bf16 %v1031, %v1030
        %v1046 = vpack.c.bf16 %v1033, %v1032
        %v1047 = vpack.c.bf16 %v1035, %v1034
        %v1048 = vpack.c.bf16 %v1037, %v1036
        %v1049 = vpack.c.bf16 %v1039, %v1038
        %v1050 = vpack.c.bf16 %v1041, %v1040
        %v1051 = vpack.c.bf16 %v1043, %v1042
        %v1060 = vunpack.c.l.b16 %v1044
        %v1061 = vunpack.c.h.b16 %v1044
        %v1062 = vunpack.c.l.b16 %v1045
        %v1063 = vunpack.c.h.b16 %v1045
        %v1064 = vunpack.c.l.b16 %v1046
        %v1065 = vunpack.c.h.b16 %v1046
        %v1066 = vunpack.c.l.b16 %v1047
        %v1067 = vunpack.c.h.b16 %v1047
        %v1068 = vunpack.c.l.b16 %v1048
        %v1069 = vunpack.c.h.b16 %v1048
        %v1070 = vunpack.c.l.b16 %v1049
        %v1071 = vunpack.c.h.b16 %v1049
        %v1072 = vunpack.c.l.b16 %v1050
        %v1073 = vunpack.c.h.b16 %v1050
        %v1074 = vunpack.c.l.b16 %v1051
        %v1075 = vunpack.c.h.b16 %v1051
        %v1076 = vpack.c.b16 %v1060, %v1060
        %v1077 = vpack.c.b16 %v1061, %v1061
        %v1078 = vpack.c.b16 %v1062, %v1062
        %v1079 = vpack.c.b16 %v1063, %v1063
        %v1080 = vpack.c.b16 %v1064, %v1064
        %v1081 = vpack.c.b16 %v1065, %v1065
        %v1082 = vpack.c.b16 %v1066, %v1066
        %v1083 = vpack.c.b16 %v1067, %v1067
        %v1084 = vpack.c.b16 %v1068, %v1068
        %v1085 = vpack.c.b16 %v1069, %v1069
        %v1086 = vpack.c.b16 %v1070, %v1070
        %v1087 = vpack.c.b16 %v1071, %v1071
        %v1088 = vpack.c.b16 %v1072, %v1072
        %v1089 = vpack.c.b16 %v1073, %v1073
        %v1090 = vpack.c.b16 %v1074, %v1074
        %v1091 = vpack.c.b16 %v1075, %v1075
        %1108 = vst [vmem:[%s225] sm:$0xf] %v1076
        %1109 = vst [vmem:[%s225 + $0x4] sm:$0xf] %v1077
        %1110 = vst [vmem:[%s225 + $0x8] sm:$0xf] %v1078
        %1111 = vst [vmem:[%s225 + $0xc] sm:$0xf] %v1079
        %1112 = vst [vmem:[%s225 + $0x10] sm:$0xf] %v1080
        %1113 = vst [vmem:[%s225 + $0x14] sm:$0xf] %v1081
        %1114 = vst [vmem:[%s225 + $0x18] sm:$0xf] %v1082
        %1115 = vst [vmem:[%s225 + $0x1c] sm:$0xf] %v1083
        %1116 = vst [vmem:[%s225 + $0x20] sm:$0xf] %v1084
        %1117 = vst [vmem:[%s225 + $0x24] sm:$0xf] %v1085
        %1118 = vst [vmem:[%s225 + $0x28] sm:$0xf] %v1086
        %1119 = vst [vmem:[%s225 + $0x2c] sm:$0xf] %v1087
        %1120 = vst [vmem:[%s225 + $0x30] sm:$0xf] %v1088
        %1121 = vst [vmem:[%s225 + $0x34] sm:$0xf] %v1089
        %1122 = vst [vmem:[%s225 + $0x38] sm:$0xf] %v1090
        %1123 = vst [vmem:[%s225 + $0x3c] sm:$0xf] %v1091
      $region40: #{grl_forward.2} parent=31 // pred_fallthru
        _
      %s1124 = smul.u32 16, %s18
      %p1125 = scmp.lt.s32.totalorder %s1124, 63
      %s1126 = scalar_select %p1125, %s1124, 63
      %s1127 = smul.addr %s1126, 4
      %s1128 = scalar_lea.vmem %s3, %s1127
      // Predicated region
      $region41: #{grl_forward.2} parent=31 // pred_check
        %p1129 = pneg %p119
      $region42: #{grl_forward.2} parent=31 // pred_check_branch
        %1131 = sbr.rel (%p1129) target = $region44
      $region43: #{grl_forward.2} parent=31 // pred_region
        %s1132 = smul.u32 16, %s18
      $region44: #{grl_forward.2} parent=31 // pred_fallthru
        _
    $region32: #{grl_forward.2} parent=5 // pred_fallthru
      _
    %p1133 = scmp.le.s32.totalorder 2, %s9
    // Predicated region
    $region45: #{grl_forward.2} parent=5 // pred_check
      %p1134 = pneg %p1133
    $region46: #{grl_forward.2} parent=5 // pred_check_branch
      %1136 = sbr.rel (%p1134) target = $region48
    $region47: #{grl_forward.2} parent=5 // pred_region
      %s1137 = ssub.s32 %s9, 2
      // Predicated region
      $region49: #{grl_forward.2} parent=47 // pred_check
        %p1138 = pneg %p125
      $region50: #{grl_forward.2} parent=47 // pred_check_branch
        %1140 = sbr.rel (%p1138) target = $region52
      $region51: #{grl_forward.2} parent=47 // pred_region
        %s1141 = smul.u32 16, %s20
        %p1142 = scmp.lt.s32.totalorder %s1141, 63
        %s1143 = scalar_select %p1142, %s1141, 63
        %s1144 = smul.addr %s1143, 4
        %s1145 = scalar_lea.vmem %s3, %s1144
      $region52: #{grl_forward.2} parent=47 // pred_fallthru
        _
    $region48: #{grl_forward.2} parent=5 // pred_fallthru
      _
  $region6: #{grl_forward.2} parent=0 // loop_footer
    %s13 = sadd.s32 1, %s9
  $region7: #{grl_forward.2} parent=0 // loop_footer_branch
    %8 = sbr.rel target = $region3
  $region8: #{grl_forward.2} parent=0 // loop_exit
    _

// kernel: grl_forward.3
$region0: #{grl_forward.3}
  #allocation0 [shape = 'u32[]', space=smem, size = 0x4, offset = 0x4, fixed_abs, tag = 'smem constant byte address 0x4 - core index']
  #allocation1 [shape = 'u32[144,128]{1,0:T(1,128)}', space=vmem, size = 0x12000, scoped, tag = 'internal scratch']
  #allocation2 [shape = 'f32[128,128]{1,0:T(8,128)}', space=vmem, size = 0x10000, scoped, tag = 'scratch operand']
  %s0 = inlined_call_operand.vmem [shape: bf16[512,512], index: 0, kind: input, shape index: {}]
  %s1 = inlined_call_operand.vmem [shape: bf16[512,128], index: 1, kind: input, shape index: {}]
  %s2 = inlined_call_operand.vmem [shape: bf16[128,512], index: 2, kind: input, shape index: {}]
  %s3 = inlined_call_operand.vmem [shape: bf16[512,128], index: 3, kind: input, shape index: {}]
  %s4 = inlined_call_operand.vmem [shape: f32[1,128], index: 4, kind: input, shape index: {}]
  %s5 = inlined_call_operand.hbm [shape: bf16[512,512], index: 5, kind: output, shape index: {0}]
  %s6 = inlined_call_operand.vmem [shape: bf16[512,128], index: 6, kind: output, shape index: {1}]
  %7 = xla_tuple %s5, %s6
  %s8 = sld [smem:[#allocation0]]
  $region69: #{grl_forward.3} parent=0
    _
  %s10 = ssub.s32 1, %s8
  %s11 = scalar_select 0, %s10, %s8
  $region1: #{grl_forward.3} parent=0
    #allocation3 [shape = 'u8[262144]{0}', space=vmem, size = 0x40000, scoped, tag = 'output window, operand 0']
    #allocation4 [shape = 's32[2]{0}', space=sflag, size = 0x8, scoped, tag = 'scoped memory for grl_forward.3']
    %12 = vsyncpa [#allocation4], 0
    %s13 = scalar_lea.sflag [#allocation4], 1
    %14 = vsyncpa %s13, 0
    loop: start=0, step=1, limit=6
    $region2: #{grl_forward.3} parent=1 // loop_pre_header
      _
    $region3: #{grl_forward.3} parent=1 // loop_header
      %s16 = sphi 0, %s20
      %p17 = scmp.ge.s32.totalorder %s16, 6
      %s23 = sphi 0, %s35
      %s24 = sphi 0, %s31
      %s25 = sphi 0, %s23
      %s26 = sphi 0, %s24
      %s27 = sphi 0, %s25
      %s28 = sphi 0, %s26
      %s40 = sphi 0, %s42
      %s43 = sphi 0, %s40
      %s44 = sphi 0, %s43
      %s60 = sphi 0, %s44
      %s66 = sphi 0, %s68
      %s69 = sphi 0, %s66
      %s70 = sphi 0, %s69
      %s86 = sphi 0, %s70
      %s92 = sphi 0, %s94
      %s95 = sphi 0, %s92
      %s96 = sphi 0, %s95
      %s112 = sphi 0, %s96
      %s118 = sphi 0, %s120
      %s121 = sphi 0, %s118
      %s122 = sphi 0, %s121
      %s138 = sphi 0, %s122
      %s142 = sphi 0, %s142
      %s144 = sphi 0, %s142
      %s145 = sphi 0, %s144
      %s159 = sphi 0, %s145
      %s167 = sphi 0, %s169
      %s170 = sphi 0, %s167
      %s171 = sphi 0, %s170
      %s187 = sphi 0, %s171
      %s193 = sphi 0, %s195
      %s196 = sphi 0, %s193
      %s197 = sphi 0, %s196
      %s213 = sphi 0, %s197
    $region4: #{grl_forward.3} parent=1 // loop_header_branch
      %19 = sbr.rel (%p17) target = $region8
    $region5: #{grl_forward.3} parent=1 // loop_body
      %s21 = ssub.s32 %s16, 1
      %s22 = ssub.s32 %s16, 2
      %s29 = sadd.s32 1, %s24
      %p30 = scmp.ge.s32.totalorder %s29, 1
      %s31 = scalar_select %p30, 0, %s29
      %s32 = sadd.s32 1, %s23
      %s33 = scalar_select %p30, %s32, %s23
      %p34 = scmp.ge.s32.totalorder %s33, 4
      %s35 = scalar_select %p34, 0, %s33
      %s36 = ssub.s32 %s23, %s35
      %s37 = ssub.s32 %s24, %s31
      %s38 = sor.u32 %s36, %s37
      %p39 = scmp.eq.s32.totalorder %s38, 0
      %s41 = sadd.s32 %s40, 1
      %s42 = scalar_select %p39, %s40, %s41
      %p45 = pneg %p39
      %p46 = scmp.eq.s32.totalorder %s16, 3
      %p47 = por %p45, %p46
      %p48 = scmp.ne.s32.totalorder %s40, %s43
      %p49 = scmp.eq.s32.totalorder %s16, 0
      %p50 = por %p48, %p49
      %p51 = scmp.ne.s32.totalorder %s40, %s43
      %p52 = scmp.eq.s32.totalorder %s21, 3
      %p53 = por %p51, %p52
      %p54 = scmp.ne.s32.totalorder %s43, %s44
      %p55 = scmp.eq.s32.totalorder %s21, 0
      %p56 = por %p54, %p55
      %p57 = scmp.ne.s32.totalorder %s43, %s44
      %p58 = scmp.eq.s32.totalorder %s22, 3
      %p59 = por %p57, %p58
      %p61 = scmp.ne.s32.totalorder %s44, %s60
      %p62 = scmp.eq.s32.totalorder %s22, 0
      %p63 = por %p61, %p62
      %s64 = ssub.s32 %s23, %s35
      %p65 = scmp.eq.s32.totalorder %s64, 0
      %s67 = sadd.s32 %s66, 1
      %s68 = scalar_select %p65, %s66, %s67
      %p71 = pneg %p65
      %p72 = scmp.eq.s32.totalorder %s16, 3
      %p73 = por %p71, %p72
      %p74 = scmp.ne.s32.totalorder %s66, %s69
      %p75 = scmp.eq.s32.totalorder %s16, 0
      %p76 = por %p74, %p75
      %p77 = scmp.ne.s32.totalorder %s66, %s69
      %p78 = scmp.eq.s32.totalorder %s21, 3
      %p79 = por %p77, %p78
      %p80 = scmp.ne.s32.totalorder %s69, %s70
      %p81 = scmp.eq.s32.totalorder %s21, 0
      %p82 = por %p80, %p81
      %p83 = scmp.ne.s32.totalorder %s69, %s70
      %p84 = scmp.eq.s32.totalorder %s22, 3
      %p85 = por %p83, %p84
      %p87 = scmp.ne.s32.totalorder %s70, %s86
      %p88 = scmp.eq.s32.totalorder %s22, 0
      %p89 = por %p87, %p88
      %s90 = ssub.s32 %s24, %s31
      %p91 = scmp.eq.s32.totalorder %s90, 0
      %s93 = sadd.s32 %s92, 1
      %s94 = scalar_select %p91, %s92, %s93
      %p97 = pneg %p91
      %p98 = scmp.eq.s32.totalorder %s16, 3
      %p99 = por %p97, %p98
      %p100 = scmp.ne.s32.totalorder %s92, %s95
      %p101 = scmp.eq.s32.totalorder %s16, 0
      %p102 = por %p100, %p101
      %p103 = scmp.ne.s32.totalorder %s92, %s95
      %p104 = scmp.eq.s32.totalorder %s21, 3
      %p105 = por %p103, %p104
      %p106 = scmp.ne.s32.totalorder %s95, %s96
      %p107 = scmp.eq.s32.totalorder %s21, 0
      %p108 = por %p106, %p107
      %p109 = scmp.ne.s32.totalorder %s95, %s96
      %p110 = scmp.eq.s32.totalorder %s22, 3
      %p111 = por %p109, %p110
      %p113 = scmp.ne.s32.totalorder %s96, %s112
      %p114 = scmp.eq.s32.totalorder %s22, 0
      %p115 = por %p113, %p114
      %s116 = ssub.s32 %s24, %s31
      %p117 = scmp.eq.s32.totalorder %s116, 0
      %s119 = sadd.s32 %s118, 1
      %s120 = scalar_select %p117, %s118, %s119
      %p123 = pneg %p117
      %p124 = scmp.eq.s32.totalorder %s16, 3
      %p125 = por %p123, %p124
      %p126 = scmp.ne.s32.totalorder %s118, %s121
      %p127 = scmp.eq.s32.totalorder %s16, 0
      %p128 = por %p126, %p127
      %p129 = scmp.ne.s32.totalorder %s118, %s121
      %p130 = scmp.eq.s32.totalorder %s21, 3
      %p131 = por %p129, %p130
      %p132 = scmp.ne.s32.totalorder %s121, %s122
      %p133 = scmp.eq.s32.totalorder %s21, 0
      %p134 = por %p132, %p133
      %p135 = scmp.ne.s32.totalorder %s121, %s122
      %p136 = scmp.eq.s32.totalorder %s22, 3
      %p137 = por %p135, %p136
      %p139 = scmp.ne.s32.totalorder %s122, %s138
      %p140 = scmp.eq.s32.totalorder %s22, 0
      %p141 = por %p139, %p140
      %s143 = sadd.s32 %s142, 1
      %p146 = scmp.eq.s32.totalorder %s16, 3
      %p147 = scmp.ne.s32.totalorder %s142, %s144
      %p148 = scmp.eq.s32.totalorder %s16, 0
      %p149 = por %p147, %p148
      %p150 = scmp.ne.s32.totalorder %s142, %s144
      %p151 = scmp.eq.s32.totalorder %s21, 3
      %p152 = por %p150, %p151
      %p153 = scmp.ne.s32.totalorder %s144, %s145
      %p154 = scmp.eq.s32.totalorder %s21, 0
      %p155 = por %p153, %p154
      %p156 = scmp.ne.s32.totalorder %s144, %s145
      %p157 = scmp.eq.s32.totalorder %s22, 3
      %p158 = por %p156, %p157
      %p160 = scmp.ne.s32.totalorder %s145, %s159
      %p161 = scmp.eq.s32.totalorder %s22, 0
      %p162 = por %p160, %p161
      %s163 = ssub.s32 %s23, %s35
      %s164 = ssub.s32 %s24, %s31
      %s165 = sor.u32 %s163, %s164
      %p166 = scmp.eq.s32.totalorder %s165, 0
      %s168 = sadd.s32 %s167, 1
      %s169 = scalar_select %p166, %s167, %s168
      %p172 = pneg %p166
      %p173 = scmp.eq.s32.totalorder %s16, 3
      %p174 = por %p172, %p173
      %p175 = scmp.ne.s32.totalorder %s167, %s170
      %p176 = scmp.eq.s32.totalorder %s16, 0
      %p177 = por %p175, %p176
      %p178 = scmp.ne.s32.totalorder %s167, %s170
      %p179 = scmp.eq.s32.totalorder %s21, 3
      %p180 = por %p178, %p179
      %p181 = scmp.ne.s32.totalorder %s170, %s171
      %p182 = scmp.eq.s32.totalorder %s21, 0
      %p183 = por %p181, %p182
      %p184 = scmp.ne.s32.totalorder %s170, %s171
      %p185 = scmp.eq.s32.totalorder %s22, 3
      %p186 = por %p184, %p185
      %p188 = scmp.ne.s32.totalorder %s171, %s187
      %p189 = scmp.eq.s32.totalorder %s22, 0
      %p190 = por %p188, %p189
      %s191 = ssub.s32 %s23, %s35
      %p192 = scmp.eq.s32.totalorder %s191, 0
      %s194 = sadd.s32 %s193, 1
      %s195 = scalar_select %p192, %s193, %s194
      %p198 = pneg %p192
      %p199 = scmp.eq.s32.totalorder %s16, 3
      %p200 = por %p198, %p199
      %p201 = scmp.ne.s32.totalorder %s193, %s196
      %p202 = scmp.eq.s32.totalorder %s16, 0
      %p203 = por %p201, %p202
      %p204 = scmp.ne.s32.totalorder %s193, %s196
      %p205 = scmp.eq.s32.totalorder %s21, 3
      %p206 = por %p204, %p205
      %p207 = scmp.ne.s32.totalorder %s196, %s197
      %p208 = scmp.eq.s32.totalorder %s21, 0
      %p209 = por %p207, %p208
      %p210 = scmp.ne.s32.totalorder %s196, %s197
      %p211 = scmp.eq.s32.totalorder %s22, 3
      %p212 = por %p210, %p211
      %p214 = scmp.ne.s32.totalorder %s197, %s213
      %p215 = scmp.eq.s32.totalorder %s22, 0
      %p216 = por %p214, %p215
      %p217 = scmp.le.s32.totalorder 1, %s16
      %p218 = scmp.lt.s32.totalorder %s16, 5
      %p219 = pnand %p217, %p218
      %p220 = pneg %p219
      // Predicated region
      $region9: #{grl_forward.3} parent=5 // pred_check
        _
      $region10: #{grl_forward.3} parent=5 // pred_check_branch
        %222 = sbr.rel (%p219) target = $region12
      $region11: #{grl_forward.3} parent=5 // pred_region
        %s223 = ssub.s32 %s16, 1
        // Predicated region
        $region13: #{grl_forward.3} parent=11 // pred_check
          %p224 = pneg %p108
        $region14: #{grl_forward.3} parent=11 // pred_check_branch
          %226 = sbr.rel (%p224) target = $region16
        $region15: #{grl_forward.3} parent=11 // pred_region
          %s227 = smul.u32 4, %s26
          %p228 = scmp.lt.s32.totalorder %s227, 3
          %s229 = scalar_select %p228, %s227, 3
          %s230 = smul.addr %s229, 4
          %s231 = scalar_lea.vmem %s2, %s230
          %s232 = smul.u32 4, %s26
        $region16: #{grl_forward.3} parent=11 // pred_fallthru
          _
        // Predicated region
        $region17: #{grl_forward.3} parent=11 // pred_check
          %p233 = pneg %p134
        $region18: #{grl_forward.3} parent=11 // pred_check_branch
          %235 = sbr.rel (%p233) target = $region20
        $region19: #{grl_forward.3} parent=11 // pred_region
          %s236 = smul.u32 64, %s26
          %p237 = scmp.lt.s32.totalorder %s236, 63
          %s238 = scalar_select %p237, %s236, 63
          %s239 = smul.addr %s238, 4
          %s240 = scalar_lea.vmem %s3, %s239
          %s241 = smul.u32 64, %s26
        $region20: #{grl_forward.3} parent=11 // pred_fallthru
          _
        // Predicated region
        $region21: #{grl_forward.3} parent=11 // pred_check
          %p242 = pneg %p155
        $region22: #{grl_forward.3} parent=11 // pred_check_branch
          %244 = sbr.rel (%p242) target = $region24
        $region23: #{grl_forward.3} parent=11 // pred_region
          _
        $region24: #{grl_forward.3} parent=11 // pred_fallthru
          _
      $region12: #{grl_forward.3} parent=5 // pred_fallthru
        _
      %p245 = scmp.lt.s32.totalorder %s16, 4
      // Predicated region
      $region25: #{grl_forward.3} parent=5 // pred_check
        %p246 = pneg %p245
      $region26: #{grl_forward.3} parent=5 // pred_check_branch
        %248 = sbr.rel (%p246) target = $region28
      $region27: #{grl_forward.3} parent=5 // pred_region
        // Predicated region
        $region29: #{grl_forward.3} parent=27 // pred_check
          %p249 = pneg %p50
        $region30: #{grl_forward.3} parent=27 // pred_check_branch
          %251 = sbr.rel (%p249) target = $region32
        $region31: #{grl_forward.3} parent=27 // pred_region
          %s252 = smul.u32 16, %s23
          %s253 = smul.u32 4, %s24
          %p254 = scmp.lt.s32.totalorder %s252, 63
          %s255 = scalar_select %p254, %s252, 63
          %p256 = scmp.lt.s32.totalorder %s253, 3
          %s257 = scalar_select %p256, %s253, 3
          %s258 = smul.addr %s255, 4
          %s259 = sadd.s32 %s257, %s258
          %s260 = smul.addr %s259, 4
          %s261 = scalar_lea.vmem %s0, %s260
          %s262 = smul.u32 16, %s23
          %s263 = smul.u32 4, %s24
        $region32: #{grl_forward.3} parent=27 // pred_fallthru
          _
        // Predicated region
        $region33: #{grl_forward.3} parent=27 // pred_check
          %p264 = pneg %p76
        $region34: #{grl_forward.3} parent=27 // pred_check_branch
          %266 = sbr.rel (%p264) target = $region36
        $region35: #{grl_forward.3} parent=27 // pred_region
          %s267 = smul.u32 16, %s23
          %p268 = scmp.lt.s32.totalorder %s267, 63
          %s269 = scalar_select %p268, %s267, 63
          %s270 = smul.addr %s269, 4
          %s271 = scalar_lea.vmem %s1, %s270
          %s272 = smul.u32 16, %s23
        $region36: #{grl_forward.3} parent=27 // pred_fallthru
          _
      $region28: #{grl_forward.3} parent=5 // pred_fallthru
        _
      %p273 = scmp.le.s32.totalorder 1, %s16
      %p274 = scmp.lt.s32.totalorder %s16, 5
      %p275 = pnand %p273, %p274
      %p276 = pneg %p275
      // Predicated region
      $region37: #{grl_forward.3} parent=5 // pred_check
        _
      $region38: #{grl_forward.3} parent=5 // pred_check_branch
        %278 = sbr.rel (%p275) target = $region40
      $region39: #{grl_forward.3} parent=5 // pred_region
        %s279 = ssub.s32 %s16, 1
        %s280 = smul.u32 16, %s25
        %s281 = smul.u32 4, %s26
        %p282 = scmp.lt.s32.totalorder %s280, 63
        %s283 = scalar_select %p282, %s280, 63
        %p284 = scmp.lt.s32.totalorder %s281, 3
        %s285 = scalar_select %p284, %s281, 3
        %s286 = smul.addr %s283, 4
        %s287 = sadd.s32 %s285, %s286
        %s288 = smul.addr %s287, 4
        %s289 = scalar_lea.vmem %s0, %s288
        %p290 = pneg %p56
        %p291 = pneg %p53
        %s292 = smul.u32 16, %s25
        %p293 = scmp.lt.s32.totalorder %s292, 63
        %s294 = scalar_select %p293, %s292, 63
        %s295 = smul.addr %s294, 4
        %s296 = scalar_lea.vmem %s1, %s295
        %p297 = pneg %p82
        %p298 = pneg %p79
        %s299 = smul.u32 4, %s26
        %p300 = scmp.lt.s32.totalorder %s299, 3
        %s301 = scalar_select %p300, %s299, 3
        %s302 = smul.addr %s301, 4
        %s303 = scalar_lea.vmem %s2, %s302
        %p304 = pneg %p108
        %p305 = pneg %p105
        %s306 = smul.u32 64, %s26
        %p307 = scmp.lt.s32.totalorder %s306, 63
        %s308 = scalar_select %p307, %s306, 63
        %s309 = smul.addr %s308, 4
        %s310 = scalar_lea.vmem %s3, %s309
        %p311 = pneg %p134
        %p312 = pneg %p131
        %p313 = pneg %p155
        %p314 = pneg %p152
        %p315 = pneg %p183
        %p316 = pneg %p180
        %s317 = sand.u32 %s170, 1
        %s318 = scalar_lea.sflag [#allocation4], %s317
        %s319 = sand.u32 %s170, 1
        %s320 = smul.addr %s319, 256
        %s321 = scalar_lea.vmem [#allocation3], %s320
        %p322 = pneg %p209
        %p323 = pneg %p206
        %s324 = smul.u32 16, %s25
        %p325 = scmp.lt.s32.totalorder %s324, 63
        %s326 = scalar_select %p325, %s324, 63
        %s327 = smul.addr %s326, 4
        %s328 = scalar_lea.vmem %s6, %s327
        %s329 = smul.u32 16, %s25
        %s330 = smul.u32 4, %s26
        %p331 = scmp.lt.s32.totalorder %s329, 63
        %s332 = scalar_select %p331, %s329, 63
        %p333 = scmp.lt.s32.totalorder %s330, 3
        %s334 = scalar_select %p333, %s330, 3
        %s335 = smul.addr %s332, 4
        %s336 = sadd.s32 %s334, %s335
        %s337 = smul.addr %s336, 4
        %s338 = scalar_lea.vmem %s0, %s337
        %s339 = smul.u32 16, %s25
        %s340 = smul.u32 4, %s26
        %s341 = smul.u32 16, %s25
        %p342 = scmp.lt.s32.totalorder %s341, 63
        %s343 = scalar_select %p342, %s341, 63
        %s344 = smul.addr %s343, 4
        %s345 = scalar_lea.vmem %s1, %s344
        %s346 = smul.u32 16, %s25
        %s347 = smul.u32 4, %s26
        %p348 = scmp.lt.s32.totalorder %s347, 3
        %s349 = scalar_select %p348, %s347, 3
        %s350 = smul.addr %s349, 4
        %s351 = scalar_lea.vmem %s2, %s350
        %s352 = smul.u32 4, %s26
        %s353 = smul.u32 64, %s26
        %p354 = scmp.lt.s32.totalorder %s353, 63
        %s355 = scalar_select %p354, %s353, 63
        %s356 = smul.addr %s355, 4
        %s357 = scalar_lea.vmem %s3, %s356
        %s358 = smul.u32 64, %s26
        %s359 = smul.u32 16, %s25
        %s360 = smul.u32 4, %s26
        %s361 = smul.u32 16, %s25
        %p362 = scmp.lt.s32.totalorder %s361, 63
        %s363 = scalar_select %p362, %s361, 63
        %s364 = smul.addr %s363, 4
        %s365 = scalar_lea.vmem %s6, %s364
        %s366 = smul.u32 16, %s25
        %v368 = vld [vmem:[%s345] sm:$0xf]
        %v369 = vld [vmem:[%s345 + $0x4] sm:$0xf]
        %v370 = vld [vmem:[%s345 + $0x8] sm:$0xf]
        %v371 = vld [vmem:[%s345 + $0xc] sm:$0xf]
        %v372 = vld [vmem:[%s345 + $0x10] sm:$0xf]
        %v373 = vld [vmem:[%s345 + $0x14] sm:$0xf]
        %v374 = vld [vmem:[%s345 + $0x18] sm:$0xf]
        %v375 = vld [vmem:[%s345 + $0x1c] sm:$0xf]
        %v376 = vld [vmem:[%s345 + $0x20] sm:$0xf]
        %v377 = vld [vmem:[%s345 + $0x24] sm:$0xf]
        %v378 = vld [vmem:[%s345 + $0x28] sm:$0xf]
        %v379 = vld [vmem:[%s345 + $0x2c] sm:$0xf]
        %v380 = vld [vmem:[%s345 + $0x30] sm:$0xf]
        %v381 = vld [vmem:[%s345 + $0x34] sm:$0xf]
        %v382 = vld [vmem:[%s345 + $0x38] sm:$0xf]
        %v383 = vld [vmem:[%s345 + $0x3c] sm:$0xf]
        %v384 = vld [vmem:[%s351] sm:$0xff]
        %v385 = vld [vmem:[%s351 + $0x8] sm:$0xff]
        %v386 = vld [vmem:[%s351 + $0x10] sm:$0xff]
        %v387 = vld [vmem:[%s351 + $0x18] sm:$0xff]
        %v388 = vld [vmem:[%s351 + $0x20] sm:$0xff]
        %v389 = vld [vmem:[%s351 + $0x28] sm:$0xff]
        %v390 = vld [vmem:[%s351 + $0x30] sm:$0xff]
        %v391 = vld [vmem:[%s351 + $0x38] sm:$0xff]
        %v392 = vld [vmem:[%s351 + $0x40] sm:$0xff]
        %v393 = vld [vmem:[%s351 + $0x48] sm:$0xff]
        %v394 = vld [vmem:[%s351 + $0x50] sm:$0xff]
        %v395 = vld [vmem:[%s351 + $0x58] sm:$0xff]
        %v396 = vld [vmem:[%s351 + $0x60] sm:$0xff]
        %v397 = vld [vmem:[%s351 + $0x68] sm:$0xff]
        %v398 = vld [vmem:[%s351 + $0x70] sm:$0xff]
        %v399 = vld [vmem:[%s351 + $0x78] sm:$0xff]
        %v400 = vld [vmem:[%s351 + $0x80] sm:$0xff]
        %v401 = vld [vmem:[%s351 + $0x88] sm:$0xff]
        %v402 = vld [vmem:[%s351 + $0x90] sm:$0xff]
        %v403 = vld [vmem:[%s351 + $0x98] sm:$0xff]
        %v404 = vld [vmem:[%s351 + $0xa0] sm:$0xff]
        %v405 = vld [vmem:[%s351 + $0xa8] sm:$0xff]
        %v406 = vld [vmem:[%s351 + $0xb0] sm:$0xff]
        %v407 = vld [vmem:[%s351 + $0xb8] sm:$0xff]
        %v408 = vld [vmem:[%s351 + $0xc0] sm:$0xff]
        %v409 = vld [vmem:[%s351 + $0xc8] sm:$0xff]
        %v410 = vld [vmem:[%s351 + $0xd0] sm:$0xff]
        %v411 = vld [vmem:[%s351 + $0xd8] sm:$0xff]
        %v412 = vld [vmem:[%s351 + $0xe0] sm:$0xff]
        %v413 = vld [vmem:[%s351 + $0xe8] sm:$0xff]
        %v414 = vld [vmem:[%s351 + $0xf0] sm:$0xff]
        %v415 = vld [vmem:[%s351 + $0xf8] sm:$0xff]
        %v432 = vunpack.c.l.b16 %v368
        %v433 = vunpack.c.l.b16 %v369
        %v434 = vunpack.c.l.b16 %v370
        %v435 = vunpack.c.l.b16 %v371
        %v436 = vunpack.c.l.b16 %v372
        %v437 = vunpack.c.l.b16 %v373
        %v438 = vunpack.c.l.b16 %v374
        %v439 = vunpack.c.l.b16 %v375
        %v440 = vunpack.c.l.b16 %v376
        %v441 = vunpack.c.l.b16 %v377
        %v442 = vunpack.c.l.b16 %v378
        %v443 = vunpack.c.l.b16 %v379
        %v444 = vunpack.c.l.b16 %v380
        %v445 = vunpack.c.l.b16 %v381
        %v446 = vunpack.c.l.b16 %v382
        %v447 = vunpack.c.l.b16 %v383
        %v448 = vpack.c.b16 %v433, %v432
        %v449 = vpack.c.b16 %v435, %v434
        %v450 = vpack.c.b16 %v437, %v436
        %v451 = vpack.c.b16 %v439, %v438
        %v452 = vpack.c.b16 %v441, %v440
        %v453 = vpack.c.b16 %v443, %v442
        %v454 = vpack.c.b16 %v445, %v444
        %v455 = vpack.c.b16 %v447, %v446
        %v496 = vunpack.c.l.b16 %v384
        %v497 = vunpack.c.h.b16 %v384
        %v498 = vunpack.c.l.b16 %v385
        %v499 = vunpack.c.h.b16 %v385
        %v500 = vunpack.c.l.b16 %v386
        %v501 = vunpack.c.h.b16 %v386
        %v502 = vunpack.c.l.b16 %v387
        %v503 = vunpack.c.h.b16 %v387
        %v504 = vunpack.c.l.b16 %v388
        %v505 = vunpack.c.h.b16 %v388
        %v506 = vunpack.c.l.b16 %v389
        %v507 = vunpack.c.h.b16 %v389
        %v508 = vunpack.c.l.b16 %v390
        %v509 = vunpack.c.h.b16 %v390
        %v510 = vunpack.c.l.b16 %v391
        %v511 = vunpack.c.h.b16 %v391
        %v512 = vunpack.c.l.b16 %v392
        %v513 = vunpack.c.h.b16 %v392
        %v514 = vunpack.c.l.b16 %v393
        %v515 = vunpack.c.h.b16 %v393
        %v516 = vunpack.c.l.b16 %v394
        %v517 = vunpack.c.h.b16 %v394
        %v518 = vunpack.c.l.b16 %v395
        %v519 = vunpack.c.h.b16 %v395
        %v520 = vunpack.c.l.b16 %v396
        %v521 = vunpack.c.h.b16 %v396
        %v522 = vunpack.c.l.b16 %v397
        %v523 = vunpack.c.h.b16 %v397
        %v524 = vunpack.c.l.b16 %v398
        %v525 = vunpack.c.h.b16 %v398
        %v526 = vunpack.c.l.b16 %v399
        %v527 = vunpack.c.h.b16 %v399
        %v528 = vunpack.c.l.b16 %v400
        %v529 = vunpack.c.h.b16 %v400
        %v530 = vunpack.c.l.b16 %v401
        %v531 = vunpack.c.h.b16 %v401
        %v532 = vunpack.c.l.b16 %v402
        %v533 = vunpack.c.h.b16 %v402
        %v534 = vunpack.c.l.b16 %v403
        %v535 = vunpack.c.h.b16 %v403
        %v536 = vunpack.c.l.b16 %v404
        %v537 = vunpack.c.h.b16 %v404
        %v538 = vunpack.c.l.b16 %v405
        %v539 = vunpack.c.h.b16 %v405
        %v540 = vunpack.c.l.b16 %v406
        %v541 = vunpack.c.h.b16 %v406
        %v542 = vunpack.c.l.b16 %v407
        %v543 = vunpack.c.h.b16 %v407
        %v544 = vunpack.c.l.b16 %v408
        %v545 = vunpack.c.h.b16 %v408
        %v546 = vunpack.c.l.b16 %v409
        %v547 = vunpack.c.h.b16 %v409
        %v548 = vunpack.c.l.b16 %v410
        %v549 = vunpack.c.h.b16 %v410
        %v550 = vunpack.c.l.b16 %v411
        %v551 = vunpack.c.h.b16 %v411
        %v552 = vunpack.c.l.b16 %v412
        %v553 = vunpack.c.h.b16 %v412
        %v554 = vunpack.c.l.b16 %v413
        %v555 = vunpack.c.h.b16 %v413
        %v556 = vunpack.c.l.b16 %v414
        %v557 = vunpack.c.h.b16 %v414
        %v558 = vunpack.c.l.b16 %v415
        %v559 = vunpack.c.h.b16 %v415
        %v560 = vpack.c.b16 %v500, %v496
        %v561 = vpack.c.b16 %v501, %v497
        %v562 = vpack.c.b16 %v502, %v498
        %v563 = vpack.c.b16 %v503, %v499
        %v564 = vpack.c.b16 %v508, %v504
        %v565 = vpack.c.b16 %v509, %v505
        %v566 = vpack.c.b16 %v510, %v506
        %v567 = vpack.c.b16 %v511, %v507
        %v568 = vpack.c.b16 %v516, %v512
        %v569 = vpack.c.b16 %v517, %v513
        %v570 = vpack.c.b16 %v518, %v514
        %v571 = vpack.c.b16 %v519, %v515
        %v572 = vpack.c.b16 %v524, %v520
        %v573 = vpack.c.b16 %v525, %v521
        %v574 = vpack.c.b16 %v526, %v522
        %v575 = vpack.c.b16 %v527, %v523
        %v576 = vpack.c.b16 %v532, %v528
        %v577 = vpack.c.b16 %v533, %v529
        %v578 = vpack.c.b16 %v534, %v530
        %v579 = vpack.c.b16 %v535, %v531
        %v580 = vpack.c.b16 %v540, %v536
        %v581 = vpack.c.b16 %v541, %v537
        %v582 = vpack.c.b16 %v542, %v538
        %v583 = vpack.c.b16 %v543, %v539
        %v584 = vpack.c.b16 %v548, %v544
        %v585 = vpack.c.b16 %v549, %v545
        %v586 = vpack.c.b16 %v550, %v546
        %v587 = vpack.c.b16 %v551, %v547
        %v588 = vpack.c.b16 %v556, %v552
        %v589 = vpack.c.b16 %v557, %v553
        %v590 = vpack.c.b16 %v558, %v554
        %v591 = vpack.c.b16 %v559, %v555
        %624 = vmatprep.subr.bf16.mxu0 %v561
        %625 = vmatpush1.bf16.msra.mxu0 %v560
        %626 = vmatprep.subr.bf16.mxu0 %v565
        %627 = vmatpush1.bf16.msra.mxu0 %v564
        %628 = vmatprep.subr.bf16.mxu0 %v569
        %629 = vmatpush1.bf16.msra.mxu0 %v568
        %630 = vmatprep.subr.bf16.mxu0 %v573
        %631 = vmatpush1.bf16.msra.mxu0 %v572
        %632 = vmatprep.subr.bf16.mxu0 %v577
        %633 = vmatpush1.bf16.msra.mxu0 %v576
        %634 = vmatprep.subr.bf16.mxu0 %v581
        %635 = vmatpush1.bf16.msra.mxu0 %v580
        %636 = vmatprep.subr.bf16.mxu0 %v585
        %637 = vmatpush1.bf16.msra.mxu0 %v584
        %638 = vmatprep.subr.bf16.mxu0 %v589
        %639 = vmatpush1.bf16.msra.mxu0 %v588
        %640 = vmatprep.subr.bf16.mxu0 0
        %641 = vmatpush1.bf16.msra.mxu0 0
        %642 = vmatprep.subr.bf16.mxu0 0
        %643 = vmatpush1.bf16.msra.mxu0 0
        %644 = vmatprep.subr.bf16.mxu0 0
        %645 = vmatpush1.bf16.msra.mxu0 0
        %646 = vmatprep.subr.bf16.mxu0 0
        %647 = vmatpush1.bf16.msra.mxu0 0
        %648 = vmatprep.subr.bf16.mxu0 0
        %649 = vmatpush1.bf16.msra.mxu0 0
        %650 = vmatprep.subr.bf16.mxu0 0
        %651 = vmatpush1.bf16.msra.mxu0 0
        %652 = vmatprep.subr.bf16.mxu0 0
        %653 = vmatpush1.bf16.msra.mxu0 0
        %654 = vmatprep.subr.bf16.mxu0 0
        %655 = vmatpush1.bf16.msra.mxu0 0
        %656 = vmatprep.mubr.bf16.mxu0 0
        %657 = vmatmul.mubr.bf16.gmra.mrb[0].mxu0 %v448
        %v658 = vpop.f32.mrb[0].mxu0
        %v659 = vadd.f32 0.0, %v658
        %v660 = vpop.f32.mrb[0].mxu0
        %v661 = vadd.f32 0.0, %v660
        %v662 = vpop.f32.mrb[0].mxu0
        %v663 = vadd.f32 0.0, %v662
        %v664 = vpop.f32.mrb[0].mxu0
        %v665 = vadd.f32 0.0, %v664
        %666 = vmatprep.mubr.bf16.mxu0 0
        %667 = vmatmul.mubr.bf16.gmra.mrb[0].mxu0 %v449
        %v668 = vpop.f32.mrb[0].mxu0
        %v669 = vadd.f32 0.0, %v668
        %v670 = vpop.f32.mrb[0].mxu0
        %v671 = vadd.f32 0.0, %v670
        %v672 = vpop.f32.mrb[0].mxu0
        %v673 = vadd.f32 0.0, %v672
        %v674 = vpop.f32.mrb[0].mxu0
        %v675 = vadd.f32 0.0, %v674
        %676 = vmatprep.mubr.bf16.mxu0 0
        %677 = vmatmul.mubr.bf16.gmra.mrb[0].mxu0 %v450
        %v678 = vpop.f32.mrb[0].mxu0
        %v679 = vadd.f32 0.0, %v678
        %v680 = vpop.f32.mrb[0].mxu0
        %v681 = vadd.f32 0.0, %v680
        %v682 = vpop.f32.mrb[0].mxu0
        %v683 = vadd.f32 0.0, %v682
        %v684 = vpop.f32.mrb[0].mxu0
        %v685 = vadd.f32 0.0, %v684
        %686 = vmatprep.mubr.bf16.mxu0 0
        %687 = vmatmul.mubr.bf16.gmra.mrb[0].mxu0 %v451
        %v688 = vpop.f32.mrb[0].mxu0
        %v689 = vadd.f32 0.0, %v688
        %v690 = vpop.f32.mrb[0].mxu0
        %v691 = vadd.f32 0.0, %v690
        %v692 = vpop.f32.mrb[0].mxu0
        %v693 = vadd.f32 0.0, %v692
        %v694 = vpop.f32.mrb[0].mxu0
        %v695 = vadd.f32 0.0, %v694
        %696 = vmatprep.mubr.bf16.mxu0 0
        %697 = vmatmul.mubr.bf16.gmra.mrb[0].mxu0 %v452
        %v698 = vpop.f32.mrb[0].mxu0
        %v699 = vadd.f32 0.0, %v698
        %v700 = vpop.f32.mrb[0].mxu0
        %v701 = vadd.f32 0.0, %v700
        %v702 = vpop.f32.mrb[0].mxu0
        %v703 = vadd.f32 0.0, %v702
        %v704 = vpop.f32.mrb[0].mxu0
        %v705 = vadd.f32 0.0, %v704
        %706 = vmatprep.mubr.bf16.mxu0 0
        %707 = vmatmul.mubr.bf16.gmra.mrb[0].mxu0 %v453
        %v708 = vpop.f32.mrb[0].mxu0
        %v709 = vadd.f32 0.0, %v708
        %v710 = vpop.f32.mrb[0].mxu0
        %v711 = vadd.f32 0.0, %v710
        %v712 = vpop.f32.mrb[0].mxu0
        %v713 = vadd.f32 0.0, %v712
        %v714 = vpop.f32.mrb[0].mxu0
        %v715 = vadd.f32 0.0, %v714
        %716 = vmatprep.mubr.bf16.mxu0 0
        %717 = vmatmul.mubr.bf16.gmra.mrb[0].mxu0 %v454
        %v718 = vpop.f32.mrb[0].mxu0
        %v719 = vadd.f32 0.0, %v718
        %v720 = vpop.f32.mrb[0].mxu0
        %v721 = vadd.f32 0.0, %v720
        %v722 = vpop.f32.mrb[0].mxu0
        %v723 = vadd.f32 0.0, %v722
        %v724 = vpop.f32.mrb[0].mxu0
        %v725 = vadd.f32 0.0, %v724
        %726 = vmatprep.mubr.bf16.mxu0 0
        %727 = vmatmul.mubr.bf16.gmra.mrb[0].mxu0 %v455
        %v728 = vpop.f32.mrb[0].mxu0
        %v729 = vadd.f32 0.0, %v728
        %v730 = vpop.f32.mrb[0].mxu0
        %v731 = vadd.f32 0.0, %v730
        %v732 = vpop.f32.mrb[0].mxu0
        %v733 = vadd.f32 0.0, %v732
        %v734 = vpop.f32.mrb[0].mxu0
        %v735 = vadd.f32 0.0, %v734
        %736 = vdwg.mxu0
        %737 = vmatprep.subr.bf16.mxu0 %v563
        %738 = vmatpush1.bf16.msra.mxu0 %v562
        %739 = vmatprep.subr.bf16.mxu0 %v567
        %740 = vmatpush1.bf16.msra.mxu0 %v566
        %741 = vmatprep.subr.bf16.mxu0 %v571
        %742 = vmatpush1.bf16.msra.mxu0 %v570
        %743 = vmatprep.subr.bf16.mxu0 %v575
        %744 = vmatpush1.bf16.msra.mxu0 %v574
        %745 = vmatprep.subr.bf16.mxu0 %v579
        %746 = vmatpush1.bf16.msra.mxu0 %v578
        %747 = vmatprep.subr.bf16.mxu0 %v583
        %748 = vmatpush1.bf16.msra.mxu0 %v582
        %749 = vmatprep.subr.bf16.mxu0 %v587
        %750 = vmatpush1.bf16.msra.mxu0 %v586
        %751 = vmatprep.subr.bf16.mxu0 %v591
        %752 = vmatpush1.bf16.msra.mxu0 %v590
        %753 = vmatprep.subr.bf16.mxu0 0
        %754 = vmatpush1.bf16.msra.mxu0 0
        %755 = vmatprep.subr.bf16.mxu0 0
        %756 = vmatpush1.bf16.msra.mxu0 0
        %757 = vmatprep.subr.bf16.mxu0 0
        %758 = vmatpush1.bf16.msra.mxu0 0
        %759 = vmatprep.subr.bf16.mxu0 0
        %760 = vmatpush1.bf16.msra.mxu0 0
        %761 = vmatprep.subr.bf16.mxu0 0
        %762 = vmatpush1.bf16.msra.mxu0 0
        %763 = vmatprep.subr.bf16.mxu0 0
        %764 = vmatpush1.bf16.msra.mxu0 0
        %765 = vmatprep.subr.bf16.mxu0 0
        %766 = vmatpush1.bf16.msra.mxu0 0
        %767 = vmatprep.subr.bf16.mxu0 0
        %768 = vmatpush1.bf16.msra.mxu0 0
        %769 = vmatprep.mubr.bf16.mxu0 0
        %770 = vmatmul.mubr.bf16.gmra.mrb[0].mxu0 %v448
        %v771 = vpop.f32.mrb[0].mxu0
        %v772 = vadd.f32 0.0, %v771
        %v773 = vpop.f32.mrb[0].mxu0
        %v774 = vadd.f32 0.0, %v773
        %v775 = vpop.f32.mrb[0].mxu0
        %v776 = vadd.f32 0.0, %v775
        %v777 = vpop.f32.mrb[0].mxu0
        %v778 = vadd.f32 0.0, %v777
        %779 = vmatprep.mubr.bf16.mxu0 0
        %780 = vmatmul.mubr.bf16.gmra.mrb[0].mxu0 %v449
        %v781 = vpop.f32.mrb[0].mxu0
        %v782 = vadd.f32 0.0, %v781
        %v783 = vpop.f32.mrb[0].mxu0
        %v784 = vadd.f32 0.0, %v783
        %v785 = vpop.f32.mrb[0].mxu0
        %v786 = vadd.f32 0.0, %v785
        %v787 = vpop.f32.mrb[0].mxu0
        %v788 = vadd.f32 0.0, %v787
        %789 = vmatprep.mubr.bf16.mxu0 0
        %790 = vmatmul.mubr.bf16.gmra.mrb[0].mxu0 %v450
        %v791 = vpop.f32.mrb[0].mxu0
        %v792 = vadd.f32 0.0, %v791
        %v793 = vpop.f32.mrb[0].mxu0
        %v794 = vadd.f32 0.0, %v793
        %v795 = vpop.f32.mrb[0].mxu0
        %v796 = vadd.f32 0.0, %v795
        %v797 = vpop.f32.mrb[0].mxu0
        %v798 = vadd.f32 0.0, %v797
        %799 = vmatprep.mubr.bf16.mxu0 0
        %800 = vmatmul.mubr.bf16.gmra.mrb[0].mxu0 %v451
        %v801 = vpop.f32.mrb[0].mxu0
        %v802 = vadd.f32 0.0, %v801
        %v803 = vpop.f32.mrb[0].mxu0
        %v804 = vadd.f32 0.0, %v803
        %v805 = vpop.f32.mrb[0].mxu0
        %v806 = vadd.f32 0.0, %v805
        %v807 = vpop.f32.mrb[0].mxu0
        %v808 = vadd.f32 0.0, %v807
        %809 = vmatprep.mubr.bf16.mxu0 0
        %810 = vmatmul.mubr.bf16.gmra.mrb[0].mxu0 %v452
        %v811 = vpop.f32.mrb[0].mxu0
        %v812 = vadd.f32 0.0, %v811
        %v813 = vpop.f32.mrb[0].mxu0
        %v814 = vadd.f32 0.0, %v813
        %v815 = vpop.f32.mrb[0].mxu0
        %v816 = vadd.f32 0.0, %v815
        %v817 = vpop.f32.mrb[0].mxu0
        %v818 = vadd.f32 0.0, %v817
        %819 = vmatprep.mubr.bf16.mxu0 0
        %820 = vmatmul.mubr.bf16.gmra.mrb[0].mxu0 %v453
        %v821 = vpop.f32.mrb[0].mxu0
        %v822 = vadd.f32 0.0, %v821
        %v823 = vpop.f32.mrb[0].mxu0
        %v824 = vadd.f32 0.0, %v823
        %v825 = vpop.f32.mrb[0].mxu0
        %v826 = vadd.f32 0.0, %v825
        %v827 = vpop.f32.mrb[0].mxu0
        %v828 = vadd.f32 0.0, %v827
        %829 = vmatprep.mubr.bf16.mxu0 0
        %830 = vmatmul.mubr.bf16.gmra.mrb[0].mxu0 %v454
        %v831 = vpop.f32.mrb[0].mxu0
        %v832 = vadd.f32 0.0, %v831
        %v833 = vpop.f32.mrb[0].mxu0
        %v834 = vadd.f32 0.0, %v833
        %v835 = vpop.f32.mrb[0].mxu0
        %v836 = vadd.f32 0.0, %v835
        %v837 = vpop.f32.mrb[0].mxu0
        %v838 = vadd.f32 0.0, %v837
        %839 = vmatprep.mubr.bf16.mxu0 0
        %840 = vmatmul.mubr.bf16.gmra.mrb[0].mxu0 %v455
        %v841 = vpop.f32.mrb[0].mxu0
        %v842 = vadd.f32 0.0, %v841
        %v843 = vpop.f32.mrb[0].mxu0
        %v844 = vadd.f32 0.0, %v843
        %v845 = vpop.f32.mrb[0].mxu0
        %v846 = vadd.f32 0.0, %v845
        %v847 = vpop.f32.mrb[0].mxu0
        %v848 = vadd.f32 0.0, %v847
        %849 = vdwg.mxu0
        %v850 = vmul.f32 %v659, 0.5
        %v851 = vmul.f32 %v661, 0.5
        %v852 = vmul.f32 %v772, 0.5
        %v853 = vmul.f32 %v774, 0.5
        %v854 = vmul.f32 %v663, 0.5
        %v855 = vmul.f32 %v665, 0.5
        %v856 = vmul.f32 %v776, 0.5
        %v857 = vmul.f32 %v778, 0.5
        %v858 = vmul.f32 %v669, 0.5
        %v859 = vmul.f32 %v671, 0.5
        %v860 = vmul.f32 %v782, 0.5
        %v861 = vmul.f32 %v784, 0.5
        %v862 = vmul.f32 %v673, 0.5
        %v863 = vmul.f32 %v675, 0.5
        %v864 = vmul.f32 %v786, 0.5
        %v865 = vmul.f32 %v788, 0.5
        %v866 = vmul.f32 %v679, 0.5
        %v867 = vmul.f32 %v681, 0.5
        %v868 = vmul.f32 %v792, 0.5
        %v869 = vmul.f32 %v794, 0.5
        %v870 = vmul.f32 %v683, 0.5
        %v871 = vmul.f32 %v685, 0.5
        %v872 = vmul.f32 %v796, 0.5
        %v873 = vmul.f32 %v798, 0.5
        %v874 = vmul.f32 %v689, 0.5
        %v875 = vmul.f32 %v691, 0.5
        %v876 = vmul.f32 %v802, 0.5
        %v877 = vmul.f32 %v804, 0.5
        %v878 = vmul.f32 %v693, 0.5
        %v879 = vmul.f32 %v695, 0.5
        %v880 = vmul.f32 %v806, 0.5
        %v881 = vmul.f32 %v808, 0.5
        %v882 = vmul.f32 %v699, 0.5
        %v883 = vmul.f32 %v701, 0.5
        %v884 = vmul.f32 %v812, 0.5
        %v885 = vmul.f32 %v814, 0.5
        %v886 = vmul.f32 %v703, 0.5
        %v887 = vmul.f32 %v705, 0.5
        %v888 = vmul.f32 %v816, 0.5
        %v889 = vmul.f32 %v818, 0.5
        %v890 = vmul.f32 %v709, 0.5
        %v891 = vmul.f32 %v711, 0.5
        %v892 = vmul.f32 %v822, 0.5
        %v893 = vmul.f32 %v824, 0.5
        %v894 = vmul.f32 %v713, 0.5
        %v895 = vmul.f32 %v715, 0.5
        %v896 = vmul.f32 %v826, 0.5
        %v897 = vmul.f32 %v828, 0.5
        %v898 = vmul.f32 %v719, 0.5
        %v899 = vmul.f32 %v721, 0.5
        %v900 = vmul.f32 %v832, 0.5
        %v901 = vmul.f32 %v834, 0.5
        %v902 = vmul.f32 %v723, 0.5
        %v903 = vmul.f32 %v725, 0.5
        %v904 = vmul.f32 %v836, 0.5
        %v905 = vmul.f32 %v838, 0.5
        %v906 = vmul.f32 %v729, 0.5
        %v907 = vmul.f32 %v731, 0.5
        %v908 = vmul.f32 %v842, 0.5
        %v909 = vmul.f32 %v844, 0.5
        %v910 = vmul.f32 %v733, 0.5
        %v911 = vmul.f32 %v735, 0.5
        %v912 = vmul.f32 %v846, 0.5
        %v913 = vmul.f32 %v848, 0.5
        %v914 = vtanh.pop %v850
        %v915 = vtanh.pop %v851
        %v916 = vtanh.pop %v852
        %v917 = vtanh.pop %v853
        %v918 = vtanh.pop %v854
        %v919 = vtanh.pop %v855
        %v920 = vtanh.pop %v856
        %v921 = vtanh.pop %v857
        %v922 = vtanh.pop %v858
        %v923 = vtanh.pop %v859
        %v924 = vtanh.pop %v860
        %v925 = vtanh.pop %v861
        %v926 = vtanh.pop %v862
        %v927 = vtanh.pop %v863
        %v928 = vtanh.pop %v864
        %v929 = vtanh.pop %v865
        %v930 = vtanh.pop %v866
        %v931 = vtanh.pop %v867
        %v932 = vtanh.pop %v868
        %v933 = vtanh.pop %v869
        %v934 = vtanh.pop %v870
        %v935 = vtanh.pop %v871
        %v936 = vtanh.pop %v872
        %v937 = vtanh.pop %v873
        %v938 = vtanh.pop %v874
        %v939 = vtanh.pop %v875
        %v940 = vtanh.pop %v876
        %v941 = vtanh.pop %v877
        %v942 = vtanh.pop %v878
        %v943 = vtanh.pop %v879
        %v944 = vtanh.pop %v880
        %v945 = vtanh.pop %v881
        %v946 = vtanh.pop %v882
        %v947 = vtanh.pop %v883
        %v948 = vtanh.pop %v884
        %v949 = vtanh.pop %v885
        %v950 = vtanh.pop %v886
        %v951 = vtanh.pop %v887
        %v952 = vtanh.pop %v888
        %v953 = vtanh.pop %v889
        %v954 = vtanh.pop %v890
        %v955 = vtanh.pop %v891
        %v956 = vtanh.pop %v892
        %v957 = vtanh.pop %v893
        %v958 = vtanh.pop %v894
        %v959 = vtanh.pop %v895
        %v960 = vtanh.pop %v896
        %v961 = vtanh.pop %v897
        %v962 = vtanh.pop %v898
        %v963 = vtanh.pop %v899
        %v964 = vtanh.pop %v900
        %v965 = vtanh.pop %v901
        %v966 = vtanh.pop %v902
        %v967 = vtanh.pop %v903
        %v968 = vtanh.pop %v904
        %v969 = vtanh.pop %v905
        %v970 = vtanh.pop %v906
        %v971 = vtanh.pop %v907
        %v972 = vtanh.pop %v908
        %v973 = vtanh.pop %v909
        %v974 = vtanh.pop %v910
        %v975 = vtanh.pop %v911
        %v976 = vtanh.pop %v912
        %v977 = vtanh.pop %v913
        %v978 = vmul.f32 %v914, 0.5
        %v979 = vmul.f32 %v915, 0.5
        %v980 = vmul.f32 %v916, 0.5
        %v981 = vmul.f32 %v917, 0.5
        %v982 = vmul.f32 %v918, 0.5
        %v983 = vmul.f32 %v919, 0.5
        %v984 = vmul.f32 %v920, 0.5
        %v985 = vmul.f32 %v921, 0.5
        %v986 = vmul.f32 %v922, 0.5
        %v987 = vmul.f32 %v923, 0.5
        %v988 = vmul.f32 %v924, 0.5
        %v989 = vmul.f32 %v925, 0.5
        %v990 = vmul.f32 %v926, 0.5
        %v991 = vmul.f32 %v927, 0.5
        %v992 = vmul.f32 %v928, 0.5
        %v993 = vmul.f32 %v929, 0.5
        %v994 = vmul.f32 %v930, 0.5
        %v995 = vmul.f32 %v931, 0.5
        %v996 = vmul.f32 %v932, 0.5
        %v997 = vmul.f32 %v933, 0.5
        %v998 = vmul.f32 %v934, 0.5
        %v999 = vmul.f32 %v935, 0.5
        %v1000 = vmul.f32 %v936, 0.5
        %v1001 = vmul.f32 %v937, 0.5
        %v1002 = vmul.f32 %v938, 0.5
        %v1003 = vmul.f32 %v939, 0.5
        %v1004 = vmul.f32 %v940, 0.5
        %v1005 = vmul.f32 %v941, 0.5
        %v1006 = vmul.f32 %v942, 0.5
        %v1007 = vmul.f32 %v943, 0.5
        %v1008 = vmul.f32 %v944, 0.5
        %v1009 = vmul.f32 %v945, 0.5
        %v1010 = vmul.f32 %v946, 0.5
        %v1011 = vmul.f32 %v947, 0.5
        %v1012 = vmul.f32 %v948, 0.5
        %v1013 = vmul.f32 %v949, 0.5
        %v1014 = vmul.f32 %v950, 0.5
        %v1015 = vmul.f32 %v951, 0.5
        %v1016 = vmul.f32 %v952, 0.5
        %v1017 = vmul.f32 %v953, 0.5
        %v1018 = vmul.f32 %v954, 0.5
        %v1019 = vmul.f32 %v955, 0.5
        %v1020 = vmul.f32 %v956, 0.5
        %v1021 = vmul.f32 %v957, 0.5
        %v1022 = vmul.f32 %v958, 0.5
        %v1023 = vmul.f32 %v959, 0.5
        %v1024 = vmul.f32 %v960, 0.5
        %v1025 = vmul.f32 %v961, 0.5
        %v1026 = vmul.f32 %v962, 0.5
        %v1027 = vmul.f32 %v963, 0.5
        %v1028 = vmul.f32 %v964, 0.5
        %v1029 = vmul.f32 %v965, 0.5
        %v1030 = vmul.f32 %v966, 0.5
        %v1031 = vmul.f32 %v967, 0.5
        %v1032 = vmul.f32 %v968, 0.5
        %v1033 = vmul.f32 %v969, 0.5
        %v1034 = vmul.f32 %v970, 0.5
        %v1035 = vmul.f32 %v971, 0.5
        %v1036 = vmul.f32 %v972, 0.5
        %v1037 = vmul.f32 %v973, 0.5
        %v1038 = vmul.f32 %v974, 0.5
        %v1039 = vmul.f32 %v975, 0.5
        %v1040 = vmul.f32 %v976, 0.5
        %v1041 = vmul.f32 %v977, 0.5
        %v1042 = vadd.f32 %v978, 0.5
        %v1043 = vadd.f32 %v979, 0.5
        %v1044 = vadd.f32 %v980, 0.5
        %v1045 = vadd.f32 %v981, 0.5
        %v1046 = vadd.f32 %v982, 0.5
        %v1047 = vadd.f32 %v983, 0.5
        %v1048 = vadd.f32 %v984, 0.5
        %v1049 = vadd.f32 %v985, 0.5
        %v1050 = vadd.f32 %v986, 0.5
        %v1051 = vadd.f32 %v987, 0.5
        %v1052 = vadd.f32 %v988, 0.5
        %v1053 = vadd.f32 %v989, 0.5
        %v1054 = vadd.f32 %v990, 0.5
        %v1055 = vadd.f32 %v991, 0.5
        %v1056 = vadd.f32 %v992, 0.5
        %v1057 = vadd.f32 %v993, 0.5
        %v1058 = vadd.f32 %v994, 0.5
        %v1059 = vadd.f32 %v995, 0.5
        %v1060 = vadd.f32 %v996, 0.5
        %v1061 = vadd.f32 %v997, 0.5
        %v1062 = vadd.f32 %v998, 0.5
        %v1063 = vadd.f32 %v999, 0.5
        %v1064 = vadd.f32 %v1000, 0.5
        %v1065 = vadd.f32 %v1001, 0.5
        %v1066 = vadd.f32 %v1002, 0.5
        %v1067 = vadd.f32 %v1003, 0.5
        %v1068 = vadd.f32 %v1004, 0.5
        %v1069 = vadd.f32 %v1005, 0.5
        %v1070 = vadd.f32 %v1006, 0.5
        %v1071 = vadd.f32 %v1007, 0.5
        %v1072 = vadd.f32 %v1008, 0.5
        %v1073 = vadd.f32 %v1009, 0.5
        %v1074 = vadd.f32 %v1010, 0.5
        %v1075 = vadd.f32 %v1011, 0.5
        %v1076 = vadd.f32 %v1012, 0.5
        %v1077 = vadd.f32 %v1013, 0.5
        %v1078 = vadd.f32 %v1014, 0.5
        %v1079 = vadd.f32 %v1015, 0.5
        %v1080 = vadd.f32 %v1016, 0.5
        %v1081 = vadd.f32 %v1017, 0.5
        %v1082 = vadd.f32 %v1018, 0.5
        %v1083 = vadd.f32 %v1019, 0.5
        %v1084 = vadd.f32 %v1020, 0.5
        %v1085 = vadd.f32 %v1021, 0.5
        %v1086 = vadd.f32 %v1022, 0.5
        %v1087 = vadd.f32 %v1023, 0.5
        %v1088 = vadd.f32 %v1024, 0.5
        %v1089 = vadd.f32 %v1025, 0.5
        %v1090 = vadd.f32 %v1026, 0.5
        %v1091 = vadd.f32 %v1027, 0.5
        %v1092 = vadd.f32 %v1028, 0.5
        %v1093 = vadd.f32 %v1029, 0.5
        %v1094 = vadd.f32 %v1030, 0.5
        %v1095 = vadd.f32 %v1031, 0.5
        %v1096 = vadd.f32 %v1032, 0.5
        %v1097 = vadd.f32 %v1033, 0.5
        %v1098 = vadd.f32 %v1034, 0.5
        %v1099 = vadd.f32 %v1035, 0.5
        %v1100 = vadd.f32 %v1036, 0.5
        %v1101 = vadd.f32 %v1037, 0.5
        %v1102 = vadd.f32 %v1038, 0.5
        %v1103 = vadd.f32 %v1039, 0.5
        %v1104 = vadd.f32 %v1040, 0.5
        %v1105 = vadd.f32 %v1041, 0.5
        %v1106 = vpack.c.bf16 %v1046, %v1042
        %v1107 = vpack.c.bf16 %v1047, %v1043
        %v1108 = vpack.c.bf16 %v1048, %v1044
        %v1109 = vpack.c.bf16 %v1049, %v1045
        %v1110 = vpack.c.bf16 %v1054, %v1050
        %v1111 = vpack.c.bf16 %v1055, %v1051
        %v1112 = vpack.c.bf16 %v1056, %v1052
        %v1113 = vpack.c.bf16 %v1057, %v1053
        %v1114 = vpack.c.bf16 %v1062, %v1058
        %v1115 = vpack.c.bf16 %v1063, %v1059
        %v1116 = vpack.c.bf16 %v1064, %v1060
        %v1117 = vpack.c.bf16 %v1065, %v1061
        %v1118 = vpack.c.bf16 %v1070, %v1066
        %v1119 = vpack.c.bf16 %v1071, %v1067
        %v1120 = vpack.c.bf16 %v1072, %v1068
        %v1121 = vpack.c.bf16 %v1073, %v1069
        %v1122 = vpack.c.bf16 %v1078, %v1074
        %v1123 = vpack.c.bf16 %v1079, %v1075
        %v1124 = vpack.c.bf16 %v1080, %v1076
        %v1125 = vpack.c.bf16 %v1081, %v1077
        %v1126 = vpack.c.bf16 %v1086, %v1082
        %v1127 = vpack.c.bf16 %v1087, %v1083
        %v1128 = vpack.c.bf16 %v1088, %v1084
        %v1129 = vpack.c.bf16 %v1089, %v1085
        %v1130 = vpack.c.bf16 %v1094, %v1090
        %v1131 = vpack.c.bf16 %v1095, %v1091
        %v1132 = vpack.c.bf16 %v1096, %v1092
        %v1133 = vpack.c.bf16 %v1097, %v1093
        %v1134 = vpack.c.bf16 %v1102, %v1098
        %v1135 = vpack.c.bf16 %v1103, %v1099
        %v1136 = vpack.c.bf16 %v1104, %v1100
        %v1137 = vpack.c.bf16 %v1105, %v1101
        %v1170 = vunpack.c.l.b16 %v1106
        %v1171 = vunpack.c.l.b16 %v1107
        %v1172 = vunpack.c.l.b16 %v1108
        %v1173 = vunpack.c.l.b16 %v1109
        %v1174 = vunpack.c.h.b16 %v1106
        %v1175 = vunpack.c.h.b16 %v1107
        %v1176 = vunpack.c.h.b16 %v1108
        %v1177 = vunpack.c.h.b16 %v1109
        %v1178 = vunpack.c.l.b16 %v1110
        %v1179 = vunpack.c.l.b16 %v1111
        %v1180 = vunpack.c.l.b16 %v1112
        %v1181 = vunpack.c.l.b16 %v1113
        %v1182 = vunpack.c.h.b16 %v1110
        %v1183 = vunpack.c.h.b16 %v1111
        %v1184 = vunpack.c.h.b16 %v1112
        %v1185 = vunpack.c.h.b16 %v1113
        %v1186 = vunpack.c.l.b16 %v1114
        %v1187 = vunpack.c.l.b16 %v1115
        %v1188 = vunpack.c.l.b16 %v1116
        %v1189 = vunpack.c.l.b16 %v1117
        %v1190 = vunpack.c.h.b16 %v1114
        %v1191 = vunpack.c.h.b16 %v1115
        %v1192 = vunpack.c.h.b16 %v1116
        %v1193 = vunpack.c.h.b16 %v1117
        %v1194 = vunpack.c.l.b16 %v1118
        %v1195 = vunpack.c.l.b16 %v1119
        %v1196 = vunpack.c.l.b16 %v1120
        %v1197 = vunpack.c.l.b16 %v1121
        %v1198 = vunpack.c.h.b16 %v1118
        %v1199 = vunpack.c.h.b16 %v1119
        %v1200 = vunpack.c.h.b16 %v1120
        %v1201 = vunpack.c.h.b16 %v1121
        %v1202 = vunpack.c.l.b16 %v1122
        %v1203 = vunpack.c.l.b16 %v1123
        %v1204 = vunpack.c.l.b16 %v1124
        %v1205 = vunpack.c.l.b16 %v1125
        %v1206 = vunpack.c.h.b16 %v1122
        %v1207 = vunpack.c.h.b16 %v1123
        %v1208 = vunpack.c.h.b16 %v1124
        %v1209 = vunpack.c.h.b16 %v1125
        %v1210 = vunpack.c.l.b16 %v1126
        %v1211 = vunpack.c.l.b16 %v1127
        %v1212 = vunpack.c.l.b16 %v1128
        %v1213 = vunpack.c.l.b16 %v1129
        %v1214 = vunpack.c.h.b16 %v1126
        %v1215 = vunpack.c.h.b16 %v1127
        %v1216 = vunpack.c.h.b16 %v1128
        %v1217 = vunpack.c.h.b16 %v1129
        %v1218 = vunpack.c.l.b16 %v1130
        %v1219 = vunpack.c.l.b16 %v1131
        %v1220 = vunpack.c.l.b16 %v1132
        %v1221 = vunpack.c.l.b16 %v1133
        %v1222 = vunpack.c.h.b16 %v1130
        %v1223 = vunpack.c.h.b16 %v1131
        %v1224 = vunpack.c.h.b16 %v1132
        %v1225 = vunpack.c.h.b16 %v1133
        %v1226 = vunpack.c.l.b16 %v1134
        %v1227 = vunpack.c.l.b16 %v1135
        %v1228 = vunpack.c.l.b16 %v1136
        %v1229 = vunpack.c.l.b16 %v1137
        %v1230 = vunpack.c.h.b16 %v1134
        %v1231 = vunpack.c.h.b16 %v1135
        %v1232 = vunpack.c.h.b16 %v1136
        %v1233 = vunpack.c.h.b16 %v1137
        %v1234 = vpack.c.b16 %v1171, %v1170
        %v1235 = vpack.c.b16 %v1173, %v1172
        %v1236 = vpack.c.b16 %v1175, %v1174
        %v1237 = vpack.c.b16 %v1177, %v1176
        %v1238 = vpack.c.b16 %v1179, %v1178
        %v1239 = vpack.c.b16 %v1181, %v1180
        %v1240 = vpack.c.b16 %v1183, %v1182
        %v1241 = vpack.c.b16 %v1185, %v1184
        %v1242 = vpack.c.b16 %v1187, %v1186
        %v1243 = vpack.c.b16 %v1189, %v1188
        %v1244 = vpack.c.b16 %v1191, %v1190
        %v1245 = vpack.c.b16 %v1193, %v1192
        %v1246 = vpack.c.b16 %v1195, %v1194
        %v1247 = vpack.c.b16 %v1197, %v1196
        %v1248 = vpack.c.b16 %v1199, %v1198
        %v1249 = vpack.c.b16 %v1201, %v1200
        %v1250 = vpack.c.b16 %v1203, %v1202
        %v1251 = vpack.c.b16 %v1205, %v1204
        %v1252 = vpack.c.b16 %v1207, %v1206
        %v1253 = vpack.c.b16 %v1209, %v1208
        %v1254 = vpack.c.b16 %v1211, %v1210
        %v1255 = vpack.c.b16 %v1213, %v1212
        %v1256 = vpack.c.b16 %v1215, %v1214
        %v1257 = vpack.c.b16 %v1217, %v1216
        %v1258 = vpack.c.b16 %v1219, %v1218
        %v1259 = vpack.c.b16 %v1221, %v1220
        %v1260 = vpack.c.b16 %v1223, %v1222
        %v1261 = vpack.c.b16 %v1225, %v1224
        %v1262 = vpack.c.b16 %v1227, %v1226
        %v1263 = vpack.c.b16 %v1229, %v1228
        %v1264 = vpack.c.b16 %v1231, %v1230
        %v1265 = vpack.c.b16 %v1233, %v1232
        %1298 = vst [vmem:[%s321] sm:$0xff] %v1234
        %1299 = vst [vmem:[%s321 + $0x8] sm:$0xff] %v1235
        %1300 = vst [vmem:[%s321 + $0x10] sm:$0xff] %v1236
        %1301 = vst [vmem:[%s321 + $0x18] sm:$0xff] %v1237
        %1302 = vst [vmem:[%s321 + $0x20] sm:$0xff] %v1238
        %1303 = vst [vmem:[%s321 + $0x28] sm:$0xff] %v1239
        %1304 = vst [vmem:[%s321 + $0x30] sm:$0xff] %v1240
        %1305 = vst [vmem:[%s321 + $0x38] sm:$0xff] %v1241
        %1306 = vst [vmem:[%s321 + $0x40] sm:$0xff] %v1242
        %1307 = vst [vmem:[%s321 + $0x48] sm:$0xff] %v1243
        %1308 = vst [vmem:[%s321 + $0x50] sm:$0xff] %v1244
        %1309 = vst [vmem:[%s321 + $0x58] sm:$0xff] %v1245
        %1310 = vst [vmem:[%s321 + $0x60] sm:$0xff] %v1246
        %1311 = vst [vmem:[%s321 + $0x68] sm:$0xff] %v1247
        %1312 = vst [vmem:[%s321 + $0x70] sm:$0xff] %v1248
        %1313 = vst [vmem:[%s321 + $0x78] sm:$0xff] %v1249
        %1314 = vst [vmem:[%s321 + $0x80] sm:$0xff] %v1250
        %1315 = vst [vmem:[%s321 + $0x88] sm:$0xff] %v1251
        %1316 = vst [vmem:[%s321 + $0x90] sm:$0xff] %v1252
        %1317 = vst [vmem:[%s321 + $0x98] sm:$0xff] %v1253
        %1318 = vst [vmem:[%s321 + $0xa0] sm:$0xff] %v1254
        %1319 = vst [vmem:[%s321 + $0xa8] sm:$0xff] %v1255
        %1320 = vst [vmem:[%s321 + $0xb0] sm:$0xff] %v1256
        %1321 = vst [vmem:[%s321 + $0xb8] sm:$0xff] %v1257
        %1322 = vst [vmem:[%s321 + $0xc0] sm:$0xff] %v1258
        %1323 = vst [vmem:[%s321 + $0xc8] sm:$0xff] %v1259
        %1324 = vst [vmem:[%s321 + $0xd0] sm:$0xff] %v1260
        %1325 = vst [vmem:[%s321 + $0xd8] sm:$0xff] %v1261
        %1326 = vst [vmem:[%s321 + $0xe0] sm:$0xff] %v1262
        %1327 = vst [vmem:[%s321 + $0xe8] sm:$0xff] %v1263
        %1328 = vst [vmem:[%s321 + $0xf0] sm:$0xff] %v1264
        %1329 = vst [vmem:[%s321 + $0xf8] sm:$0xff] %v1265
        %p1330 = scmp.eq.s32.totalorder %s26, 0
        // Predicated region
        $region41: #{grl_forward.3} parent=39 // pred_check
          %p1331 = pneg %p1330
        $region42: #{grl_forward.3} parent=39 // pred_check_branch
          %1333 = sbr.rel (%p1331) target = $region44
        $region43: #{grl_forward.3} parent=39 // pred_region
          %1334 = vst [vmem:[#allocation2] sm:$0xff] 0.0
          %1335 = vst [vmem:[#allocation2 + $0x8] sm:$0xff] 0.0
          %1336 = vst [vmem:[#allocation2 + $0x10] sm:$0xff] 0.0
          %1337 = vst [vmem:[#allocation2 + $0x18] sm:$0xff] 0.0
          %1338 = vst [vmem:[#allocation2 + $0x20] sm:$0xff] 0.0
          %1339 = vst [vmem:[#allocation2 + $0x28] sm:$0xff] 0.0
          %1340 = vst [vmem:[#allocation2 + $0x30] sm:$0xff] 0.0
          %1341 = vst [vmem:[#allocation2 + $0x38] sm:$0xff] 0.0
          %1342 = vst [vmem:[#allocation2 + $0x40] sm:$0xff] 0.0
          %1343 = vst [vmem:[#allocation2 + $0x48] sm:$0xff] 0.0
          %1344 = vst [vmem:[#allocation2 + $0x50] sm:$0xff] 0.0
          %1345 = vst [vmem:[#allocation2 + $0x58] sm:$0xff] 0.0
          %1346 = vst [vmem:[#allocation2 + $0x60] sm:$0xff] 0.0
          %1347 = vst [vmem:[#allocation2 + $0x68] sm:$0xff] 0.0
          %1348 = vst [vmem:[#allocation2 + $0x70] sm:$0xff] 0.0
          %1349 = vst [vmem:[#allocation2 + $0x78] sm:$0xff] 0.0
        $region44: #{grl_forward.3} parent=39 // pred_fallthru
          _
        %v1350 = vld [vmem:[#allocation2] sm:$0xff]
        %v1351 = vld [vmem:[#allocation2 + $0x8] sm:$0xff]
        %v1352 = vld [vmem:[#allocation2 + $0x10] sm:$0xff]
        %v1353 = vld [vmem:[#allocation2 + $0x18] sm:$0xff]
        %v1354 = vld [vmem:[#allocation2 + $0x20] sm:$0xff]
        %v1355 = vld [vmem:[#allocation2 + $0x28] sm:$0xff]
        %v1356 = vld [vmem:[#allocation2 + $0x30] sm:$0xff]
        %v1357 = vld [vmem:[#allocation2 + $0x38] sm:$0xff]
        %v1358 = vld [vmem:[#allocation2 + $0x40] sm:$0xff]
        %v1359 = vld [vmem:[#allocation2 + $0x48] sm:$0xff]
        %v1360 = vld [vmem:[#allocation2 + $0x50] sm:$0xff]
        %v1361 = vld [vmem:[#allocation2 + $0x58] sm:$0xff]
        %v1362 = vld [vmem:[#allocation2 + $0x60] sm:$0xff]
        %v1363 = vld [vmem:[#allocation2 + $0x68] sm:$0xff]
        %v1364 = vld [vmem:[#allocation2 + $0x70] sm:$0xff]
        %v1365 = vld [vmem:[#allocation2 + $0x78] sm:$0xff]
        %v1366 = vld [vmem:[%s338] sm:$0xff]
        %v1367 = vld [vmem:[%s338 + $0x8] sm:$0xff]
        %v1368 = vld [vmem:[%s338 + $0x10] sm:$0xff]
        %v1369 = vld [vmem:[%s338 + $0x18] sm:$0xff]
        %v1370 = vld [vmem:[%s338 + $0x20] sm:$0xff]
        %v1371 = vld [vmem:[%s338 + $0x28] sm:$0xff]
        %v1372 = vld [vmem:[%s338 + $0x30] sm:$0xff]
        %v1373 = vld [vmem:[%s338 + $0x38] sm:$0xff]
        %v1374 = vld [vmem:[%s338 + $0x40] sm:$0xff]
        %v1375 = vld [vmem:[%s338 + $0x48] sm:$0xff]
        %v1376 = vld [vmem:[%s338 + $0x50] sm:$0xff]
        %v1377 = vld [vmem:[%s338 + $0x58] sm:$0xff]
        %v1378 = vld [vmem:[%s338 + $0x60] sm:$0xff]
        %v1379 = vld [vmem:[%s338 + $0x68] sm:$0xff]
        %v1380 = vld [vmem:[%s338 + $0x70] sm:$0xff]
        %v1381 = vld [vmem:[%s338 + $0x78] sm:$0xff]
        %v1382 = vld [vmem:[%s338 + $0x80] sm:$0xff]
        %v1383 = vld [vmem:[%s338 + $0x88] sm:$0xff]
        %v1384 = vld [vmem:[%s338 + $0x90] sm:$0xff]
        %v1385 = vld [vmem:[%s338 + $0x98] sm:$0xff]
        %v1386 = vld [vmem:[%s338 + $0xa0] sm:$0xff]
        %v1387 = vld [vmem:[%s338 + $0xa8] sm:$0xff]
        %v1388 = vld [vmem:[%s338 + $0xb0] sm:$0xff]
        %v1389 = vld [vmem:[%s338 + $0xb8] sm:$0xff]
        %v1390 = vld [vmem:[%s338 + $0xc0] sm:$0xff]
        %v1391 = vld [vmem:[%s338 + $0xc8] sm:$0xff]
        %v1392 = vld [vmem:[%s338 + $0xd0] sm:$0xff]
        %v1393 = vld [vmem:[%s338 + $0xd8] sm:$0xff]
        %v1394 = vld [vmem:[%s338 + $0xe0] sm:$0xff]
        %v1395 = vld [vmem:[%s338 + $0xe8] sm:$0xff]
        %v1396 = vld [vmem:[%s338 + $0xf0] sm:$0xff]
        %v1397 = vld [vmem:[%s338 + $0xf8] sm:$0xff]
        %v1398 = vld [vmem:[%s357] sm:$0xf]
        %v1399 = vld [vmem:[%s357 + $0x4] sm:$0xf]
        %v1400 = vld [vmem:[%s357 + $0x8] sm:$0xf]
        %v1401 = vld [vmem:[%s357 + $0xc] sm:$0xf]
        %v1402 = vld [vmem:[%s357 + $0x10] sm:$0xf]
        %v1403 = vld [vmem:[%s357 + $0x14] sm:$0xf]
        %v1404 = vld [vmem:[%s357 + $0x18] sm:$0xf]
        %v1405 = vld [vmem:[%s357 + $0x1c] sm:$0xf]
        %v1406 = vld [vmem:[%s357 + $0x20] sm:$0xf]
        %v1407 = vld [vmem:[%s357 + $0x24] sm:$0xf]
        %v1408 = vld [vmem:[%s357 + $0x28] sm:$0xf]
        %v1409 = vld [vmem:[%s357 + $0x2c] sm:$0xf]
        %v1410 = vld [vmem:[%s357 + $0x30] sm:$0xf]
        %v1411 = vld [vmem:[%s357 + $0x34] sm:$0xf]
        %v1412 = vld [vmem:[%s357 + $0x38] sm:$0xf]
        %v1413 = vld [vmem:[%s357 + $0x3c] sm:$0xf]
        %v1414 = vld [vmem:[%s357 + $0x40] sm:$0xf]
        %v1415 = vld [vmem:[%s357 + $0x44] sm:$0xf]
        %v1416 = vld [vmem:[%s357 + $0x48] sm:$0xf]
        %v1417 = vld [vmem:[%s357 + $0x4c] sm:$0xf]
        %v1418 = vld [vmem:[%s357 + $0x50] sm:$0xf]
        %v1419 = vld [vmem:[%s357 + $0x54] sm:$0xf]
        %v1420 = vld [vmem:[%s357 + $0x58] sm:$0xf]
        %v1421 = vld [vmem:[%s357 + $0x5c] sm:$0xf]
        %v1422 = vld [vmem:[%s357 + $0x60] sm:$0xf]
        %v1423 = vld [vmem:[%s357 + $0x64] sm:$0xf]
        %v1424 = vld [vmem:[%s357 + $0x68] sm:$0xf]
        %v1425 = vld [vmem:[%s357 + $0x6c] sm:$0xf]
        %v1426 = vld [vmem:[%s357 + $0x70] sm:$0xf]
        %v1427 = vld [vmem:[%s357 + $0x74] sm:$0xf]
        %v1428 = vld [vmem:[%s357 + $0x78] sm:$0xf]
        %v1429 = vld [vmem:[%s357 + $0x7c] sm:$0xf]
        %v1430 = vld [vmem:[%s357 + $0x80] sm:$0xf]
        %v1431 = vld [vmem:[%s357 + $0x84] sm:$0xf]
        %v1432 = vld [vmem:[%s357 + $0x88] sm:$0xf]
        %v1433 = vld [vmem:[%s357 + $0x8c] sm:$0xf]
        %v1434 = vld [vmem:[%s357 + $0x90] sm:$0xf]
        %v1435 = vld [vmem:[%s357 + $0x94] sm:$0xf]
        %v1436 = vld [vmem:[%s357 + $0x98] sm:$0xf]
        %v1437 = vld [vmem:[%s357 + $0x9c] sm:$0xf]
        %v1438 = vld [vmem:[%s357 + $0xa0] sm:$0xf]
        %v1439 = vld [vmem:[%s357 + $0xa4] sm:$0xf]
        %v1440 = vld [vmem:[%s357 + $0xa8] sm:$0xf]
        %v1441 = vld [vmem:[%s357 + $0xac] sm:$0xf]
        %v1442 = vld [vmem:[%s357 + $0xb0] sm:$0xf]
        %v1443 = vld [vmem:[%s357 + $0xb4] sm:$0xf]
        %v1444 = vld [vmem:[%s357 + $0xb8] sm:$0xf]
        %v1445 = vld [vmem:[%s357 + $0xbc] sm:$0xf]
        %v1446 = vld [vmem:[%s357 + $0xc0] sm:$0xf]
        %v1447 = vld [vmem:[%s357 + $0xc4] sm:$0xf]
        %v1448 = vld [vmem:[%s357 + $0xc8] sm:$0xf]
        %v1449 = vld [vmem:[%s357 + $0xcc] sm:$0xf]
        %v1450 = vld [vmem:[%s357 + $0xd0] sm:$0xf]
        %v1451 = vld [vmem:[%s357 + $0xd4] sm:$0xf]
        %v1452 = vld [vmem:[%s357 + $0xd8] sm:$0xf]
        %v1453 = vld [vmem:[%s357 + $0xdc] sm:$0xf]
        %v1454 = vld [vmem:[%s357 + $0xe0] sm:$0xf]
        %v1455 = vld [vmem:[%s357 + $0xe4] sm:$0xf]
        %v1456 = vld [vmem:[%s357 + $0xe8] sm:$0xf]
        %v1457 = vld [vmem:[%s357 + $0xec] sm:$0xf]
        %v1458 = vld [vmem:[%s357 + $0xf0] sm:$0xf]
        %v1459 = vld [vmem:[%s357 + $0xf4] sm:$0xf]
        %v1460 = vld [vmem:[%s357 + $0xf8] sm:$0xf]
        %v1461 = vld [vmem:[%s357 + $0xfc] sm:$0xf]
        %v1494 = vunpack.c.l.b16 %v1366
        %v1495 = vunpack.c.h.b16 %v1366
        %v1496 = vunpack.c.l.b16 %v1367
        %v1497 = vunpack.c.h.b16 %v1367
        %v1498 = vunpack.c.l.b16 %v1368
        %v1499 = vunpack.c.h.b16 %v1368
        %v1500 = vunpack.c.l.b16 %v1369
        %v1501 = vunpack.c.h.b16 %v1369
        %v1502 = vunpack.c.l.b16 %v1370
        %v1503 = vunpack.c.h.b16 %v1370
        %v1504 = vunpack.c.l.b16 %v1371
        %v1505 = vunpack.c.h.b16 %v1371
        %v1506 = vunpack.c.l.b16 %v1372
        %v1507 = vunpack.c.h.b16 %v1372
        %v1508 = vunpack.c.l.b16 %v1373
        %v1509 = vunpack.c.h.b16 %v1373
        %v1510 = vunpack.c.l.b16 %v1374
        %v1511 = vunpack.c.h.b16 %v1374
        %v1512 = vunpack.c.l.b16 %v1375
        %v1513 = vunpack.c.h.b16 %v1375
        %v1514 = vunpack.c.l.b16 %v1376
        %v1515 = vunpack.c.h.b16 %v1376
        %v1516 = vunpack.c.l.b16 %v1377
        %v1517 = vunpack.c.h.b16 %v1377
        %v1518 = vunpack.c.l.b16 %v1378
        %v1519 = vunpack.c.h.b16 %v1378
        %v1520 = vunpack.c.l.b16 %v1379
        %v1521 = vunpack.c.h.b16 %v1379
        %v1522 = vunpack.c.l.b16 %v1380
        %v1523 = vunpack.c.h.b16 %v1380
        %v1524 = vunpack.c.l.b16 %v1381
        %v1525 = vunpack.c.h.b16 %v1381
        %v1526 = vunpack.c.l.b16 %v1382
        %v1527 = vunpack.c.h.b16 %v1382
        %v1528 = vunpack.c.l.b16 %v1383
        %v1529 = vunpack.c.h.b16 %v1383
        %v1530 = vunpack.c.l.b16 %v1384
        %v1531 = vunpack.c.h.b16 %v1384
        %v1532 = vunpack.c.l.b16 %v1385
        %v1533 = vunpack.c.h.b16 %v1385
        %v1534 = vunpack.c.l.b16 %v1386
        %v1535 = vunpack.c.h.b16 %v1386
        %v1536 = vunpack.c.l.b16 %v1387
        %v1537 = vunpack.c.h.b16 %v1387
        %v1538 = vunpack.c.l.b16 %v1388
        %v1539 = vunpack.c.h.b16 %v1388
        %v1540 = vunpack.c.l.b16 %v1389
        %v1541 = vunpack.c.h.b16 %v1389
        %v1542 = vunpack.c.l.b16 %v1390
        %v1543 = vunpack.c.h.b16 %v1390
        %v1544 = vunpack.c.l.b16 %v1391
        %v1545 = vunpack.c.h.b16 %v1391
        %v1546 = vunpack.c.l.b16 %v1392
        %v1547 = vunpack.c.h.b16 %v1392
        %v1548 = vunpack.c.l.b16 %v1393
        %v1549 = vunpack.c.h.b16 %v1393
        %v1550 = vunpack.c.l.b16 %v1394
        %v1551 = vunpack.c.h.b16 %v1394
        %v1552 = vunpack.c.l.b16 %v1395
        %v1553 = vunpack.c.h.b16 %v1395
        %v1554 = vunpack.c.l.b16 %v1396
        %v1555 = vunpack.c.h.b16 %v1396
        %v1556 = vunpack.c.l.b16 %v1397
        %v1557 = vunpack.c.h.b16 %v1397
        %v1558 = vpack.c.b16 %v1498, %v1494
        %v1559 = vpack.c.b16 %v1499, %v1495
        %v1560 = vpack.c.b16 %v1500, %v1496
        %v1561 = vpack.c.b16 %v1501, %v1497
        %v1562 = vpack.c.b16 %v1506, %v1502
        %v1563 = vpack.c.b16 %v1507, %v1503
        %v1564 = vpack.c.b16 %v1508, %v1504
        %v1565 = vpack.c.b16 %v1509, %v1505
        %v1566 = vpack.c.b16 %v1514, %v1510
        %v1567 = vpack.c.b16 %v1515, %v1511
        %v1568 = vpack.c.b16 %v1516, %v1512
        %v1569 = vpack.c.b16 %v1517, %v1513
        %v1570 = vpack.c.b16 %v1522, %v1518
        %v1571 = vpack.c.b16 %v1523, %v1519
        %v1572 = vpack.c.b16 %v1524, %v1520
        %v1573 = vpack.c.b16 %v1525, %v1521
        %v1574 = vpack.c.b16 %v1530, %v1526
        %v1575 = vpack.c.b16 %v1531, %v1527
        %v1576 = vpack.c.b16 %v1532, %v1528
        %v1577 = vpack.c.b16 %v1533, %v1529
        %v1578 = vpack.c.b16 %v1538, %v1534
        %v1579 = vpack.c.b16 %v1539, %v1535
        %v1580 = vpack.c.b16 %v1540, %v1536
        %v1581 = vpack.c.b16 %v1541, %v1537
        %v1582 = vpack.c.b16 %v1546, %v1542
        %v1583 = vpack.c.b16 %v1547, %v1543
        %v1584 = vpack.c.b16 %v1548, %v1544
        %v1585 = vpack.c.b16 %v1549, %v1545
        %v1586 = vpack.c.b16 %v1554, %v1550
        %v1587 = vpack.c.b16 %v1555, %v1551
        %v1588 = vpack.c.b16 %v1556, %v1552
        %v1589 = vpack.c.b16 %v1557, %v1553
        %v1686 = vunpack.c.l.b16 %v1398
        %v1687 = vunpack.c.l.b16 %v1399
        %v1688 = vunpack.c.l.b16 %v1400
        %v1689 = vunpack.c.l.b16 %v1401
        %v1690 = vunpack.c.l.b16 %v1402
        %v1691 = vunpack.c.l.b16 %v1403
        %v1692 = vunpack.c.l.b16 %v1404
        %v1693 = vunpack.c.l.b16 %v1405
        %v1694 = vunpack.c.l.b16 %v1406
        %v1695 = vunpack.c.l.b16 %v1407
        %v1696 = vunpack.c.l.b16 %v1408
        %v1697 = vunpack.c.l.b16 %v1409
        %v1698 = vunpack.c.l.b16 %v1410
        %v1699 = vunpack.c.l.b16 %v1411
        %v1700 = vunpack.c.l.b16 %v1412
        %v1701 = vunpack.c.l.b16 %v1413
        %v1702 = vunpack.c.l.b16 %v1414
        %v1703 = vunpack.c.l.b16 %v1415
        %v1704 = vunpack.c.l.b16 %v1416
        %v1705 = vunpack.c.l.b16 %v1417
        %v1706 = vunpack.c.l.b16 %v1418
        %v1707 = vunpack.c.l.b16 %v1419
        %v1708 = vunpack.c.l.b16 %v1420
        %v1709 = vunpack.c.l.b16 %v1421
        %v1710 = vunpack.c.l.b16 %v1422
        %v1711 = vunpack.c.l.b16 %v1423
        %v1712 = vunpack.c.l.b16 %v1424
        %v1713 = vunpack.c.l.b16 %v1425
        %v1714 = vunpack.c.l.b16 %v1426
        %v1715 = vunpack.c.l.b16 %v1427
        %v1716 = vunpack.c.l.b16 %v1428
        %v1717 = vunpack.c.l.b16 %v1429
        %v1718 = vunpack.c.l.b16 %v1430
        %v1719 = vunpack.c.l.b16 %v1431
        %v1720 = vunpack.c.l.b16 %v1432
        %v1721 = vunpack.c.l.b16 %v1433
        %v1722 = vunpack.c.l.b16 %v1434
        %v1723 = vunpack.c.l.b16 %v1435
        %v1724 = vunpack.c.l.b16 %v1436
        %v1725 = vunpack.c.l.b16 %v1437
        %v1726 = vunpack.c.l.b16 %v1438
        %v1727 = vunpack.c.l.b16 %v1439
        %v1728 = vunpack.c.l.b16 %v1440
        %v1729 = vunpack.c.l.b16 %v1441
        %v1730 = vunpack.c.l.b16 %v1442
        %v1731 = vunpack.c.l.b16 %v1443
        %v1732 = vunpack.c.l.b16 %v1444
        %v1733 = vunpack.c.l.b16 %v1445
        %v1734 = vunpack.c.l.b16 %v1446
        %v1735 = vunpack.c.l.b16 %v1447
        %v1736 = vunpack.c.l.b16 %v1448
        %v1737 = vunpack.c.l.b16 %v1449
        %v1738 = vunpack.c.l.b16 %v1450
        %v1739 = vunpack.c.l.b16 %v1451
        %v1740 = vunpack.c.l.b16 %v1452
        %v1741 = vunpack.c.l.b16 %v1453
        %v1742 = vunpack.c.l.b16 %v1454
        %v1743 = vunpack.c.l.b16 %v1455
        %v1744 = vunpack.c.l.b16 %v1456
        %v1745 = vunpack.c.l.b16 %v1457
        %v1746 = vunpack.c.l.b16 %v1458
        %v1747 = vunpack.c.l.b16 %v1459
        %v1748 = vunpack.c.l.b16 %v1460
        %v1749 = vunpack.c.l.b16 %v1461
        %v1750 = vpack.c.b16 %v1687, %v1686
        %v1751 = vpack.c.b16 %v1689, %v1688
        %v1752 = vpack.c.b16 %v1691, %v1690
        %v1753 = vpack.c.b16 %v1693, %v1692
        %v1754 = vpack.c.b16 %v1695, %v1694
        %v1755 = vpack.c.b16 %v1697, %v1696
        %v1756 = vpack.c.b16 %v1699, %v1698
        %v1757 = vpack.c.b16 %v1701, %v1700
        %v1758 = vpack.c.b16 %v1703, %v1702
        %v1759 = vpack.c.b16 %v1705, %v1704
        %v1760 = vpack.c.b16 %v1707, %v1706
        %v1761 = vpack.c.b16 %v1709, %v1708
        %v1762 = vpack.c.b16 %v1711, %v1710
        %v1763 = vpack.c.b16 %v1713, %v1712
        %v1764 = vpack.c.b16 %v1715, %v1714
        %v1765 = vpack.c.b16 %v1717, %v1716
        %v1766 = vpack.c.b16 %v1719, %v1718
        %v1767 = vpack.c.b16 %v1721, %v1720
        %v1768 = vpack.c.b16 %v1723, %v1722
        %v1769 = vpack.c.b16 %v1725, %v1724
        %v1770 = vpack.c.b16 %v1727, %v1726
        %v1771 = vpack.c.b16 %v1729, %v1728
        %v1772 = vpack.c.b16 %v1731, %v1730
        %v1773 = vpack.c.b16 %v1733, %v1732
        %v1774 = vpack.c.b16 %v1735, %v1734
        %v1775 = vpack.c.b16 %v1737, %v1736
        %v1776 = vpack.c.b16 %v1739, %v1738
        %v1777 = vpack.c.b16 %v1741, %v1740
        %v1778 = vpack.c.b16 %v1743, %v1742
        %v1779 = vpack.c.b16 %v1745, %v1744
        %v1780 = vpack.c.b16 %v1747, %v1746
        %v1781 = vpack.c.b16 %v1749, %v1748
        %1814 = vmatprep.subr.bf16.mxu0 0
        %1815 = vmatpush1.bf16.msra.mxu0 %v1750
        %1816 = vmatprep.subr.bf16.mxu0 0
        %1817 = vmatpush1.bf16.msra.mxu0 %v1751
        %1818 = vmatprep.subr.bf16.mxu0 0
        %1819 = vmatpush1.bf16.msra.mxu0 %v1752
        %1820 = vmatprep.subr.bf16.mxu0 0
        %1821 = vmatpush1.bf16.msra.mxu0 %v1753
        %1822 = vmatprep.subr.bf16.mxu0 0
        %1823 = vmatpush1.bf16.msra.mxu0 %v1754
        %1824 = vmatprep.subr.bf16.mxu0 0
        %1825 = vmatpush1.bf16.msra.mxu0 %v1755
        %1826 = vmatprep.subr.bf16.mxu0 0
        %1827 = vmatpush1.bf16.msra.mxu0 %v1756
        %1828 = vmatprep.subr.bf16.mxu0 0
        %1829 = vmatpush1.bf16.msra.mxu0 %v1757
        %1830 = vmatprep.subr.bf16.mxu0 0
        %1831 = vmatpush1.bf16.msra.mxu0 %v1758
        %1832 = vmatprep.subr.bf16.mxu0 0
        %1833 = vmatpush1.bf16.msra.mxu0 %v1759
        %1834 = vmatprep.subr.bf16.mxu0 0
        %1835 = vmatpush1.bf16.msra.mxu0 %v1760
        %1836 = vmatprep.subr.bf16.mxu0 0
        %1837 = vmatpush1.bf16.msra.mxu0 %v1761
        %1838 = vmatprep.subr.bf16.mxu0 0
        %1839 = vmatpush1.bf16.msra.mxu0 %v1762
        %1840 = vmatprep.subr.bf16.mxu0 0
        %1841 = vmatpush1.bf16.msra.mxu0 %v1763
        %1842 = vmatprep.subr.bf16.mxu0 0
        %1843 = vmatpush1.bf16.msra.mxu0 %v1764
        %1844 = vmatprep.subr.bf16.mxu0 0
        %1845 = vmatpush1.bf16.msra.mxu0 %v1765
        %1846 = vmatprep.mubr.bf16.mxu0 %v1559
        %1847 = vmatmul.mubr.bf16.gmra.mrb[0].mxu0 %v1558
        %v1848 = vpop.f32.mrb[0].mxu0
        %v1849 = vadd.f32 0.0, %v1848
        %v1850 = vpop.f32.mrb[0].mxu0
        %v1851 = vpop.f32.mrb[0].mxu0
        %v1852 = vadd.f32 0.0, %v1851
        %v1853 = vpop.f32.mrb[0].mxu0
        %1854 = vmatprep.mubr.bf16.mxu0 %v1563
        %1855 = vmatmul.mubr.bf16.gmra.mrb[0].mxu0 %v1562
        %v1856 = vpop.f32.mrb[0].mxu0
        %v1857 = vadd.f32 0.0, %v1856
        %v1858 = vpop.f32.mrb[0].mxu0
        %v1859 = vpop.f32.mrb[0].mxu0
        %v1860 = vadd.f32 0.0, %v1859
        %v1861 = vpop.f32.mrb[0].mxu0
        %1862 = vmatprep.mubr.bf16.mxu0 %v1567
        %1863 = vmatmul.mubr.bf16.gmra.mrb[0].mxu0 %v1566
        %v1864 = vpop.f32.mrb[0].mxu0
        %v1865 = vadd.f32 0.0, %v1864
        %v1866 = vpop.f32.mrb[0].mxu0
        %v1867 = vpop.f32.mrb[0].mxu0
        %v1868 = vadd.f32 0.0, %v1867
        %v1869 = vpop.f32.mrb[0].mxu0
        %1870 = vmatprep.mubr.bf16.mxu0 %v1571
        %1871 = vmatmul.mubr.bf16.gmra.mrb[0].mxu0 %v1570
        %v1872 = vpop.f32.mrb[0].mxu0
        %v1873 = vadd.f32 0.0, %v1872
        %v1874 = vpop.f32.mrb[0].mxu0
        %v1875 = vpop.f32.mrb[0].mxu0
        %v1876 = vadd.f32 0.0, %v1875
        %v1877 = vpop.f32.mrb[0].mxu0
        %1878 = vmatprep.mubr.bf16.mxu0 %v1575
        %1879 = vmatmul.mubr.bf16.gmra.mrb[0].mxu0 %v1574
        %v1880 = vpop.f32.mrb[0].mxu0
        %v1881 = vadd.f32 0.0, %v1880
        %v1882 = vpop.f32.mrb[0].mxu0
        %v1883 = vpop.f32.mrb[0].mxu0
        %v1884 = vadd.f32 0.0, %v1883
        %v1885 = vpop.f32.mrb[0].mxu0
        %1886 = vmatprep.mubr.bf16.mxu0 %v1579
        %1887 = vmatmul.mubr.bf16.gmra.mrb[0].mxu0 %v1578
        %v1888 = vpop.f32.mrb[0].mxu0
        %v1889 = vadd.f32 0.0, %v1888
        %v1890 = vpop.f32.mrb[0].mxu0
        %v1891 = vpop.f32.mrb[0].mxu0
        %v1892 = vadd.f32 0.0, %v1891
        %v1893 = vpop.f32.mrb[0].mxu0
        %1894 = vmatprep.mubr.bf16.mxu0 %v1583
        %1895 = vmatmul.mubr.bf16.gmra.mrb[0].mxu0 %v1582
        %v1896 = vpop.f32.mrb[0].mxu0
        %v1897 = vadd.f32 0.0, %v1896
        %v1898 = vpop.f32.mrb[0].mxu0
        %v1899 = vpop.f32.mrb[0].mxu0
        %v1900 = vadd.f32 0.0, %v1899
        %v1901 = vpop.f32.mrb[0].mxu0
        %1902 = vmatprep.mubr.bf16.mxu0 %v1587
        %1903 = vmatmul.mubr.bf16.gmra.mrb[0].mxu0 %v1586
        %v1904 = vpop.f32.mrb[0].mxu0
        %v1905 = vadd.f32 0.0, %v1904
        %v1906 = vpop.f32.mrb[0].mxu0
        %v1907 = vpop.f32.mrb[0].mxu0
        %v1908 = vadd.f32 0.0, %v1907
        %v1909 = vpop.f32.mrb[0].mxu0
        %1910 = vdwg.mxu0
        %1911 = vmatprep.subr.bf16.mxu0 0
        %1912 = vmatpush1.bf16.msra.mxu0 %v1766
        %1913 = vmatprep.subr.bf16.mxu0 0
        %1914 = vmatpush1.bf16.msra.mxu0 %v1767
        %1915 = vmatprep.subr.bf16.mxu0 0
        %1916 = vmatpush1.bf16.msra.mxu0 %v1768
        %1917 = vmatprep.subr.bf16.mxu0 0
        %1918 = vmatpush1.bf16.msra.mxu0 %v1769
        %1919 = vmatprep.subr.bf16.mxu0 0
        %1920 = vmatpush1.bf16.msra.mxu0 %v1770
        %1921 = vmatprep.subr.bf16.mxu0 0
        %1922 = vmatpush1.bf16.msra.mxu0 %v1771
        %1923 = vmatprep.subr.bf16.mxu0 0
        %1924 = vmatpush1.bf16.msra.mxu0 %v1772
        %1925 = vmatprep.subr.bf16.mxu0 0
        %1926 = vmatpush1.bf16.msra.mxu0 %v1773
        %1927 = vmatprep.subr.bf16.mxu0 0
        %1928 = vmatpush1.bf16.msra.mxu0 %v1774
        %1929 = vmatprep.subr.bf16.mxu0 0
        %1930 = vmatpush1.bf16.msra.mxu0 %v1775
        %1931 = vmatprep.subr.bf16.mxu0 0
        %1932 = vmatpush1.bf16.msra.mxu0 %v1776
        %1933 = vmatprep.subr.bf16.mxu0 0
        %1934 = vmatpush1.bf16.msra.mxu0 %v1777
        %1935 = vmatprep.subr.bf16.mxu0 0
        %1936 = vmatpush1.bf16.msra.mxu0 %v1778
        %1937 = vmatprep.subr.bf16.mxu0 0
        %1938 = vmatpush1.bf16.msra.mxu0 %v1779
        %1939 = vmatprep.subr.bf16.mxu0 0
        %1940 = vmatpush1.bf16.msra.mxu0 %v1780
        %1941 = vmatprep.subr.bf16.mxu0 0
        %1942 = vmatpush1.bf16.msra.mxu0 %v1781
        %1943 = vmatprep.mubr.bf16.mxu0 %v1561
        %1944 = vmatmul.mubr.bf16.gmra.mrb[0].mxu0 %v1560
        %v1945 = vpop.f32.mrb[0].mxu0
        %v1946 = vadd.f32 %v1849, %v1945
        %v1947 = vpop.f32.mrb[0].mxu0
        %v1948 = vpop.f32.mrb[0].mxu0
        %v1949 = vadd.f32 %v1852, %v1948
        %v1950 = vpop.f32.mrb[0].mxu0
        %1951 = vmatprep.mubr.bf16.mxu0 %v1565
        %1952 = vmatmul.mubr.bf16.gmra.mrb[0].mxu0 %v1564
        %v1953 = vpop.f32.mrb[0].mxu0
        %v1954 = vadd.f32 %v1857, %v1953
        %v1955 = vpop.f32.mrb[0].mxu0
        %v1956 = vpop.f32.mrb[0].mxu0
        %v1957 = vadd.f32 %v1860, %v1956
        %v1958 = vpop.f32.mrb[0].mxu0
        %1959 = vmatprep.mubr.bf16.mxu0 %v1569
        %1960 = vmatmul.mubr.bf16.gmra.mrb[0].mxu0 %v1568
        %v1961 = vpop.f32.mrb[0].mxu0
        %v1962 = vadd.f32 %v1865, %v1961
        %v1963 = vpop.f32.mrb[0].mxu0
        %v1964 = vpop.f32.mrb[0].mxu0
        %v1965 = vadd.f32 %v1868, %v1964
        %v1966 = vpop.f32.mrb[0].mxu0
        %1967 = vmatprep.mubr.bf16.mxu0 %v1573
        %1968 = vmatmul.mubr.bf16.gmra.mrb[0].mxu0 %v1572
        %v1969 = vpop.f32.mrb[0].mxu0
        %v1970 = vadd.f32 %v1873, %v1969
        %v1971 = vpop.f32.mrb[0].mxu0
        %v1972 = vpop.f32.mrb[0].mxu0
        %v1973 = vadd.f32 %v1876, %v1972
        %v1974 = vpop.f32.mrb[0].mxu0
        %1975 = vmatprep.mubr.bf16.mxu0 %v1577
        %1976 = vmatmul.mubr.bf16.gmra.mrb[0].mxu0 %v1576
        %v1977 = vpop.f32.mrb[0].mxu0
        %v1978 = vadd.f32 %v1881, %v1977
        %v1979 = vpop.f32.mrb[0].mxu0
        %v1980 = vpop.f32.mrb[0].mxu0
        %v1981 = vadd.f32 %v1884, %v1980
        %v1982 = vpop.f32.mrb[0].mxu0
        %1983 = vmatprep.mubr.bf16.mxu0 %v1581
        %1984 = vmatmul.mubr.bf16.gmra.mrb[0].mxu0 %v1580
        %v1985 = vpop.f32.mrb[0].mxu0
        %v1986 = vadd.f32 %v1889, %v1985
        %v1987 = vpop.f32.mrb[0].mxu0
        %v1988 = vpop.f32.mrb[0].mxu0
        %v1989 = vadd.f32 %v1892, %v1988
        %v1990 = vpop.f32.mrb[0].mxu0
        %1991 = vmatprep.mubr.bf16.mxu0 %v1585
        %1992 = vmatmul.mubr.bf16.gmra.mrb[0].mxu0 %v1584
        %v1993 = vpop.f32.mrb[0].mxu0
        %v1994 = vadd.f32 %v1897, %v1993
        %v1995 = vpop.f32.mrb[0].mxu0
        %v1996 = vpop.f32.mrb[0].mxu0
        %v1997 = vadd.f32 %v1900, %v1996
        %v1998 = vpop.f32.mrb[0].mxu0
        %1999 = vmatprep.mubr.bf16.mxu0 %v1589
        %2000 = vmatmul.mubr.bf16.gmra.mrb[0].mxu0 %v1588
        %v2001 = vpop.f32.mrb[0].mxu0
        %v2002 = vadd.f32 %v1905, %v2001
        %v2003 = vpop.f32.mrb[0].mxu0
        %v2004 = vpop.f32.mrb[0].mxu0
        %v2005 = vadd.f32 %v1908, %v2004
        %v2006 = vpop.f32.mrb[0].mxu0
        %2007 = vdwg.mxu0
        %v2008 = vadd.f32 %v1350, %v1946
        %v2009 = vadd.f32 %v1351, %v1949
        %v2010 = vadd.f32 %v1352, %v1954
        %v2011 = vadd.f32 %v1353, %v1957
        %v2012 = vadd.f32 %v1354, %v1962
        %v2013 = vadd.f32 %v1355, %v1965
        %v2014 = vadd.f32 %v1356, %v1970
        %v2015 = vadd.f32 %v1357, %v1973
        %v2016 = vadd.f32 %v1358, %v1978
        %v2017 = vadd.f32 %v1359, %v1981
        %v2018 = vadd.f32 %v1360, %v1986
        %v2019 = vadd.f32 %v1361, %v1989
        %v2020 = vadd.f32 %v1362, %v1994
        %v2021 = vadd.f32 %v1363, %v1997
        %v2022 = vadd.f32 %v1364, %v2002
        %v2023 = vadd.f32 %v1365, %v2005
        %2024 = vst [vmem:[#allocation2] sm:$0xff] %v2008
        %2025 = vst [vmem:[#allocation2 + $0x8] sm:$0xff] %v2009
        %2026 = vst [vmem:[#allocation2 + $0x10] sm:$0xff] %v2010
        %2027 = vst [vmem:[#allocation2 + $0x18] sm:$0xff] %v2011
        %2028 = vst [vmem:[#allocation2 + $0x20] sm:$0xff] %v2012
        %2029 = vst [vmem:[#allocation2 + $0x28] sm:$0xff] %v2013
        %2030 = vst [vmem:[#allocation2 + $0x30] sm:$0xff] %v2014
        %2031 = vst [vmem:[#allocation2 + $0x38] sm:$0xff] %v2015
        %2032 = vst [vmem:[#allocation2 + $0x40] sm:$0xff] %v2016
        %2033 = vst [vmem:[#allocation2 + $0x48] sm:$0xff] %v2017
        %2034 = vst [vmem:[#allocation2 + $0x50] sm:$0xff] %v2018
        %2035 = vst [vmem:[#allocation2 + $0x58] sm:$0xff] %v2019
        %2036 = vst [vmem:[#allocation2 + $0x60] sm:$0xff] %v2020
        %2037 = vst [vmem:[#allocation2 + $0x68] sm:$0xff] %v2021
        %2038 = vst [vmem:[#allocation2 + $0x70] sm:$0xff] %v2022
        %2039 = vst [vmem:[#allocation2 + $0x78] sm:$0xff] %v2023
        // Predicated region
        $region45: #{grl_forward.3} parent=39 // pred_check
          %p2040 = pneg %p1330
        $region46: #{grl_forward.3} parent=39 // pred_check_branch
          %2042 = sbr.rel (%p2040) target = $region48
        $region47: #{grl_forward.3} parent=39 // pred_region
          %v2043 = vld [vmem:[#allocation2] sm:$0xff]
          %v2044 = vld [vmem:[#allocation2 + $0x8] sm:$0xff]
          %v2045 = vld [vmem:[#allocation2 + $0x10] sm:$0xff]
          %v2046 = vld [vmem:[#allocation2 + $0x18] sm:$0xff]
          %v2047 = vld [vmem:[#allocation2 + $0x20] sm:$0xff]
          %v2048 = vld [vmem:[#allocation2 + $0x28] sm:$0xff]
          %v2049 = vld [vmem:[#allocation2 + $0x30] sm:$0xff]
          %v2050 = vld [vmem:[#allocation2 + $0x38] sm:$0xff]
          %v2051 = vld [vmem:[#allocation2 + $0x40] sm:$0xff]
          %v2052 = vld [vmem:[#allocation2 + $0x48] sm:$0xff]
          %v2053 = vld [vmem:[#allocation2 + $0x50] sm:$0xff]
          %v2054 = vld [vmem:[#allocation2 + $0x58] sm:$0xff]
          %v2055 = vld [vmem:[#allocation2 + $0x60] sm:$0xff]
          %v2056 = vld [vmem:[#allocation2 + $0x68] sm:$0xff]
          %v2057 = vld [vmem:[#allocation2 + $0x70] sm:$0xff]
          %v2058 = vld [vmem:[#allocation2 + $0x78] sm:$0xff]
          %v2059 = vld [vmem:[%s4] sm:$0x1]
          %v2061 = vlaneseq
          %v2062 = vshrl.u32 %v2061, 7
          %v2063 = vsub.s32 0, %v2062
          %v2064 = vrot.slane %v2059, %v2063
          %v2066 = vadd.f32 %v2043, %v2064
          %v2067 = vadd.f32 %v2044, %v2064
          %v2068 = vadd.f32 %v2045, %v2064
          %v2069 = vadd.f32 %v2046, %v2064
          %v2070 = vadd.f32 %v2047, %v2064
          %v2071 = vadd.f32 %v2048, %v2064
          %v2072 = vadd.f32 %v2049, %v2064
          %v2073 = vadd.f32 %v2050, %v2064
          %v2074 = vadd.f32 %v2051, %v2064
          %v2075 = vadd.f32 %v2052, %v2064
          %v2076 = vadd.f32 %v2053, %v2064
          %v2077 = vadd.f32 %v2054, %v2064
          %v2078 = vadd.f32 %v2055, %v2064
          %v2079 = vadd.f32 %v2056, %v2064
          %v2080 = vadd.f32 %v2057, %v2064
          %v2081 = vadd.f32 %v2058, %v2064
          %v2082 = vmul.f32 %v2066, 0.5
          %v2083 = vmul.f32 %v2067, 0.5
          %v2084 = vmul.f32 %v2068, 0.5
          %v2085 = vmul.f32 %v2069, 0.5
          %v2086 = vmul.f32 %v2070, 0.5
          %v2087 = vmul.f32 %v2071, 0.5
          %v2088 = vmul.f32 %v2072, 0.5
          %v2089 = vmul.f32 %v2073, 0.5
          %v2090 = vmul.f32 %v2074, 0.5
          %v2091 = vmul.f32 %v2075, 0.5
          %v2092 = vmul.f32 %v2076, 0.5
          %v2093 = vmul.f32 %v2077, 0.5
          %v2094 = vmul.f32 %v2078, 0.5
          %v2095 = vmul.f32 %v2079, 0.5
          %v2096 = vmul.f32 %v2080, 0.5
          %v2097 = vmul.f32 %v2081, 0.5
          %v2098 = vtanh.pop %v2082
          %v2099 = vtanh.pop %v2083
          %v2100 = vtanh.pop %v2084
          %v2101 = vtanh.pop %v2085
          %v2102 = vtanh.pop %v2086
          %v2103 = vtanh.pop %v2087
          %v2104 = vtanh.pop %v2088
          %v2105 = vtanh.pop %v2089
          %v2106 = vtanh.pop %v2090
          %v2107 = vtanh.pop %v2091
          %v2108 = vtanh.pop %v2092
          %v2109 = vtanh.pop %v2093
          %v2110 = vtanh.pop %v2094
          %v2111 = vtanh.pop %v2095
          %v2112 = vtanh.pop %v2096
          %v2113 = vtanh.pop %v2097
          %v2114 = vmul.f32 %v2098, 0.5
          %v2115 = vmul.f32 %v2099, 0.5
          %v2116 = vmul.f32 %v2100, 0.5
          %v2117 = vmul.f32 %v2101, 0.5
          %v2118 = vmul.f32 %v2102, 0.5
          %v2119 = vmul.f32 %v2103, 0.5
          %v2120 = vmul.f32 %v2104, 0.5
          %v2121 = vmul.f32 %v2105, 0.5
          %v2122 = vmul.f32 %v2106, 0.5
          %v2123 = vmul.f32 %v2107, 0.5
          %v2124 = vmul.f32 %v2108, 0.5
          %v2125 = vmul.f32 %v2109, 0.5
          %v2126 = vmul.f32 %v2110, 0.5
          %v2127 = vmul.f32 %v2111, 0.5
          %v2128 = vmul.f32 %v2112, 0.5
          %v2129 = vmul.f32 %v2113, 0.5
          %v2130 = vadd.f32 %v2114, 0.5
          %v2131 = vadd.f32 %v2115, 0.5
          %v2132 = vadd.f32 %v2116, 0.5
          %v2133 = vadd.f32 %v2117, 0.5
          %v2134 = vadd.f32 %v2118, 0.5
          %v2135 = vadd.f32 %v2119, 0.5
          %v2136 = vadd.f32 %v2120, 0.5
          %v2137 = vadd.f32 %v2121, 0.5
          %v2138 = vadd.f32 %v2122, 0.5
          %v2139 = vadd.f32 %v2123, 0.5
          %v2140 = vadd.f32 %v2124, 0.5
          %v2141 = vadd.f32 %v2125, 0.5
          %v2142 = vadd.f32 %v2126, 0.5
          %v2143 = vadd.f32 %v2127, 0.5
          %v2144 = vadd.f32 %v2128, 0.5
          %v2145 = vadd.f32 %v2129, 0.5
          %v2146 = vpack.c.bf16 %v2131, %v2130
          %v2147 = vpack.c.bf16 %v2133, %v2132
          %v2148 = vpack.c.bf16 %v2135, %v2134
          %v2149 = vpack.c.bf16 %v2137, %v2136
          %v2150 = vpack.c.bf16 %v2139, %v2138
          %v2151 = vpack.c.bf16 %v2141, %v2140
          %v2152 = vpack.c.bf16 %v2143, %v2142
          %v2153 = vpack.c.bf16 %v2145, %v2144
          %v2162 = vunpack.c.l.b16 %v2146
          %v2163 = vunpack.c.h.b16 %v2146
          %v2164 = vunpack.c.l.b16 %v2147
          %v2165 = vunpack.c.h.b16 %v2147
          %v2166 = vunpack.c.l.b16 %v2148
          %v2167 = vunpack.c.h.b16 %v2148
          %v2168 = vunpack.c.l.b16 %v2149
          %v2169 = vunpack.c.h.b16 %v2149
          %v2170 = vunpack.c.l.b16 %v2150
          %v2171 = vunpack.c.h.b16 %v2150
          %v2172 = vunpack.c.l.b16 %v2151
          %v2173 = vunpack.c.h.b16 %v2151
          %v2174 = vunpack.c.l.b16 %v2152
          %v2175 = vunpack.c.h.b16 %v2152
          %v2176 = vunpack.c.l.b16 %v2153
          %v2177 = vunpack.c.h.b16 %v2153
          %v2178 = vpack.c.b16 %v2162, %v2162
          %v2179 = vpack.c.b16 %v2163, %v2163
          %v2180 = vpack.c.b16 %v2164, %v2164
          %v2181 = vpack.c.b16 %v2165, %v2165
          %v2182 = vpack.c.b16 %v2166, %v2166
          %v2183 = vpack.c.b16 %v2167, %v2167
          %v2184 = vpack.c.b16 %v2168, %v2168
          %v2185 = vpack.c.b16 %v2169, %v2169
          %v2186 = vpack.c.b16 %v2170, %v2170
          %v2187 = vpack.c.b16 %v2171, %v2171
          %v2188 = vpack.c.b16 %v2172, %v2172
          %v2189 = vpack.c.b16 %v2173, %v2173
          %v2190 = vpack.c.b16 %v2174, %v2174
          %v2191 = vpack.c.b16 %v2175, %v2175
          %v2192 = vpack.c.b16 %v2176, %v2176
          %v2193 = vpack.c.b16 %v2177, %v2177
          %2210 = vst [vmem:[%s365] sm:$0xf] %v2178
          %2211 = vst [vmem:[%s365 + $0x4] sm:$0xf] %v2179
          %2212 = vst [vmem:[%s365 + $0x8] sm:$0xf] %v2180
          %2213 = vst [vmem:[%s365 + $0xc] sm:$0xf] %v2181
          %2214 = vst [vmem:[%s365 + $0x10] sm:$0xf] %v2182
          %2215 = vst [vmem:[%s365 + $0x14] sm:$0xf] %v2183
          %2216 = vst [vmem:[%s365 + $0x18] sm:$0xf] %v2184
          %2217 = vst [vmem:[%s365 + $0x1c] sm:$0xf] %v2185
          %2218 = vst [vmem:[%s365 + $0x20] sm:$0xf] %v2186
          %2219 = vst [vmem:[%s365 + $0x24] sm:$0xf] %v2187
          %2220 = vst [vmem:[%s365 + $0x28] sm:$0xf] %v2188
          %2221 = vst [vmem:[%s365 + $0x2c] sm:$0xf] %v2189
          %2222 = vst [vmem:[%s365 + $0x30] sm:$0xf] %v2190
          %2223 = vst [vmem:[%s365 + $0x34] sm:$0xf] %v2191
          %2224 = vst [vmem:[%s365 + $0x38] sm:$0xf] %v2192
          %2225 = vst [vmem:[%s365 + $0x3c] sm:$0xf] %v2193
        $region48: #{grl_forward.3} parent=39 // pred_fallthru
          _
        %s2226 = sand.u32 %s170, 1
        %s2227 = scalar_lea.sflag [#allocation4], %s2226
        %s2228 = sand.u32 %s170, 1
        %s2229 = smul.addr %s2228, 256
        %s2230 = scalar_lea.vmem [#allocation3], %s2229
        %s2231 = smul.u32 16, %s25
        %p2232 = scmp.lt.s32.totalorder %s2231, 63
        %s2233 = scalar_select %p2232, %s2231, 63
        %s2234 = smul.addr %s2233, 4
        %s2235 = scalar_lea.vmem %s6, %s2234
        // Predicated region
        $region49: #{grl_forward.3} parent=39 // pred_check
          %p2236 = pneg %p180
        $region50: #{grl_forward.3} parent=39 // pred_check_branch
          %2238 = sbr.rel (%p2236) target = $region52
        $region51: #{grl_forward.3} parent=39 // pred_region
          %s2239 = smul.u32 16, %s25
          %s2240 = smul.u32 4, %s26
          %s2242 = ssub.s32 4096, 4096
          %2243 = vsyncadd %s2227, %s2242
          %s2244 = smul.addr %s2239, 4
          %s2245 = sadd.s32 %s2240, %s2244
          %s2246 = smul.addr %s2245, 64
          %s2247 = scalar_lea.hbm %s5, %s2246
          %s2248 = sshll.u32 %s2230, 4
          %s2249 = int_to_ptr.vmem [resolvable:$true] %s2248
          %2254 = dma.vmem_to_hbm [thread:$0]  %s2249, 4096, %s2247, %s2227, 256, 256, 16
        $region52: #{grl_forward.3} parent=39 // pred_fallthru
          _
        // Predicated region
        $region53: #{grl_forward.3} parent=39 // pred_check
          %p2255 = pneg %p206
        $region54: #{grl_forward.3} parent=39 // pred_check_branch
          %2257 = sbr.rel (%p2255) target = $region56
        $region55: #{grl_forward.3} parent=39 // pred_region
          %s2258 = smul.u32 16, %s25
        $region56: #{grl_forward.3} parent=39 // pred_fallthru
          _
      $region40: #{grl_forward.3} parent=5 // pred_fallthru
        _
      %p2259 = scmp.le.s32.totalorder 2, %s16
      // Predicated region
      $region57: #{grl_forward.3} parent=5 // pred_check
        %p2260 = pneg %p2259
      $region58: #{grl_forward.3} parent=5 // pred_check_branch
        %2262 = sbr.rel (%p2260) target = $region60
      $region59: #{grl_forward.3} parent=5 // pred_region
        %s2263 = ssub.s32 %s16, 2
        // Predicated region
        $region61: #{grl_forward.3} parent=59 // pred_check
          %p2264 = pneg %p186
        $region62: #{grl_forward.3} parent=59 // pred_check_branch
          %2266 = sbr.rel (%p2264) target = $region64
        $region63: #{grl_forward.3} parent=59 // pred_region
          %s2267 = sand.u32 %s171, 1
          %s2268 = scalar_lea.sflag [#allocation4], %s2267
          %s2269 = sand.u32 %s171, 1
          %s2270 = smul.addr %s2269, 256
          %s2271 = scalar_lea.vmem [#allocation3], %s2270
          %2272 = dma.done %s2268, 4096
        $region64: #{grl_forward.3} parent=59 // pred_fallthru
          _
        // Predicated region
        $region65: #{grl_forward.3} parent=59 // pred_check
          %p2273 = pneg %p212
        $region66: #{grl_forward.3} parent=59 // pred_check_branch
          %2275 = sbr.rel (%p2273) target = $region68
        $region67: #{grl_forward.3} parent=59 // pred_region
          %s2276 = smul.u32 16, %s27
          %p2277 = scmp.lt.s32.totalorder %s2276, 63
          %s2278 = scalar_select %p2277, %s2276, 63
          %s2279 = smul.addr %s2278, 4
          %s2280 = scalar_lea.vmem %s6, %s2279
        $region68: #{grl_forward.3} parent=59 // pred_fallthru
          _
      $region60: #{grl_forward.3} parent=5 // pred_fallthru
        _
    $region6: #{grl_forward.3} parent=1 // loop_footer
      %s20 = sadd.s32 1, %s16
    $region7: #{grl_forward.3} parent=1 // loop_footer_branch
      %15 = sbr.rel target = $region3
    $region8: #{grl_forward.3} parent=1 // loop_exit
      _
    %2281 = vsyncpa [#allocation4], 1
    %s2282 = scalar_lea.sflag [#allocation4], 1
    %2283 = vsyncpa %s2282, 1

</llo_original>
